<compile_context>
chip_gen: v5e
topology: v5e:2x2
jax: 0.10.0
libtpu: 0.0.40
codegen_flags: <defaults>
</compile_context>

<pallas_src>
import jax
import jax.numpy as jnp
import numpy as np
from jax import lax
from jax.experimental import pallas as pl
from jax.experimental.pallas import tpu as pltpu

# ---- layer-0 configuration from the reference script ----
INPUT_DIM = 1
STATE_DIM = 20      # channels of xt / xt_1
CAUSE_DIM = 20      # channels of ut
STATE_SIZE = 16     # xt spatial
CAUSE_SIZE = 8      # ut spatial

_H = STATE_SIZE
_W = STATE_SIZE
_HW = _H * _W                        # 256 state pixels per batch element
_UW = CAUSE_SIZE
_UHW = CAUSE_SIZE * CAUSE_SIZE       # 64 cause pixels per batch element
_CPAD = 24                           # 20 channels zero-padded to a sublane multiple
_K = 9 * _CPAD                       # 216 im2col contraction size

# Number of grid steps the batch is split into.  1 => whole batch folded into lanes
# (single TensorCore; best for v5e/v6e).  Set to 2 on v7x to occupy both TensorCores.
NUM_BATCH_BLOCKS = 1


# ------------------------------ fused kernel --------------------------------

def _dpcn_kernel(gamma_ref, x1_ref, xt_ref, ut_ref, mask_ref, wa1_ref, wa2_ref,
                 wbs_ref, wc_ref, sel_ref, ps_ref, cs_ref, pf_ref, patch_ref):
    f32 = jnp.float32
    n = x1_ref.shape[1]                      # bb * 256 lanes

    def conv3x3(x, w_ref):
        # x: (24, n) with channel-pad rows already zero.  Build the 9-tap im2col
        # patch with full-tile aligned 24-row stores, then one K=216 MXU matmul.
        for kh in range(3):
            for kw in range(3):
                t = kh * 3 + kw
                off = (kh - 1) * _W + (kw - 1)           # flattened tap shift
                if off == 0:
                    tap = x
                else:
                    # XLU lane rotation + precomputed {0,1} edge/batch-boundary mask.
                    tap = pltpu.roll(x, shift=(-off) % n, axis=1) * mask_ref[t]
                patch_ref[t * _CPAD:(t + 1) * _CPAD, :] = tap
        return jnp.dot(w_ref[...], patch_ref[...], preferred_element_type=f32)

    x1 = x1_ref[...]                          # (24, n)
    xt = xt_ref[...]                          # (24, n)

    # ---------------- predicted_state = A(xt_1) + xt_1 ----------------
    h1 = jnp.maximum(conv3x3(x1, wa1_ref), 0.0)
    h2 = jnp.maximum(conv3x3(h1, wa2_ref), 0.0)
    ps_ref[...] = h2 + x1

    # ---- predicted_frame: 2x2 deconv phases on sublanes (interleaved in wrapper) ----
    pf_ref[...] = jnp.dot(wc_ref[...], xt, preferred_element_type=f32)        # (8, n)

    # -------- cause_state = gamma * (1 + exp(-B(ut))) / 2 * xt --------
    # One matmul for all four deconv phases, one constant 0/1 scatter matmul for the
    # stride-2 interleave, one exp (exp commutes with the one-hot scatter).
    y_all = jnp.dot(wbs_ref[...], ut_ref[...], preferred_element_type=f32)    # (96, bb*64)
    y_flat = jnp.concatenate(                                                 # (24, 4*bb*64)
        [y_all[t * _CPAD:(t + 1) * _CPAD, :] for t in range(4)], axis=1)
    bmap = jnp.dot(y_flat, sel_ref[...], preferred_element_type=f32)          # (24, bb*256)
    gamma = gamma_ref[0]                                                      # SMEM scalar
    cs_ref[...] = ((gamma * 0.5) * (1.0 + jnp.exp(-bmap))) * xt


# --------------------------- trace-time constants ---------------------------

def _make_tap_masks(n):
    """(9, 1, n) {0,1} masks killing 3x3 taps that fall outside the image or would
    leak across a batch boundary in the flattened (channels, batch*H*W) layout."""
    j = np.arange(n)
    h = (j % _HW) // _W
    w = j % _W
    m = np.empty((9, 1, n), np.float32)
    for kh in range(3):
        for kw in range(3):
            dh, dw = kh - 1, kw - 1
            ok = np.ones(n, bool)
            if dh == -1:
                ok &= h != 0
            if dh == 1:
                ok &= h != _H - 1
            if dw == -1:
                ok &= w != 0
            if dw == 1:
                ok &= w != _W - 1
            m[kh * 3 + kw, 0] = ok
    return jnp.asarray(m)


def _make_scatter(bb):
    """(4*bb*64, bb*256) 0/1 matrix realizing the stride-2 2x2 deconv interleave for
    bb batch elements folded along lanes (each destination pixel hit exactly once)."""
    sel = np.zeros((4 * bb * _UHW, bb * _HW), np.float32)
    for t in range(4):
        kh, kw = t // 2, t % 2
        for b in range(bb):
            for ph in range(_UW):
                for pw in range(_UW):
                    src = t * (bb * _UHW) + b * _UHW + ph * _UW + pw
                    dst = b * _HW + (2 * ph + kh) * _W + (2 * pw + kw)
                    sel[src, dst] = 1.0
    return jnp.asarray(sel)


# --------------------------- weight preprocessing ---------------------------

def _conv_weight_im2col(w_pt):
    # Conv2d weight (Co, Ci, 3, 3) -> (24, 216): tap-major, Ci and Co zero-padded to 24.
    co, ci = w_pt.shape[0], w_pt.shape[1]
    w = jnp.transpose(w_pt, (2, 3, 1, 0))                          # (3, 3, ci, co)
    w = jnp.pad(w, ((0, 0), (0, 0), (0, _CPAD - ci), (0, 0)))      # ci -> 24
    w = jnp.transpose(w.reshape(9 * _CPAD, co))                    # (co, 216)
    return jnp.pad(w, ((0, _CPAD - co), (0, 0)))                   # (24, 216)


def _cause_weight(w_pt):
    # ConvTranspose2d(20->20) weight (Ci, Co, 2, 2) -> (96, 24): 4 phase blocks of 24
    # rows (Co zero-padded), Ci zero-padded to 24 columns.  Phase t = kh*2 + kw.
    ci, co = w_pt.shape[0], w_pt.shape[1]
    w = jnp.transpose(w_pt, (2, 3, 1, 0)).reshape(4, co, ci)       # (4, co, ci)
    w = jnp.pad(w, ((0, 0), (0, _CPAD - co), (0, _CPAD - ci)))     # (4, 24, 24)
    return w.reshape(4 * _CPAD, _CPAD)                             # (96, 24)


def _frame_weight(w_pt):
    # ConvTranspose2d(20->1) weight (Ci, 1, 2, 2) -> (8, 24): rows = 4 phases + 4 zero.
    ci = w_pt.shape[0]
    w = jnp.transpose(w_pt, (2, 3, 1, 0)).reshape(4 * INPUT_DIM, ci)   # (4, 20)
    return jnp.pad(w, ((0, 8 - 4 * INPUT_DIM), (0, _CPAD - ci)))       # (8, 24)


def _fold_nchw(x):
    # (B, C, H, W) -> (24, B*H*W) with channel rows zero-padded to 24.
    b, c = x.shape[0], x.shape[1]
    x = jnp.transpose(x.reshape(b, c, -1), (1, 0, 2)).reshape(c, -1)
    return jnp.pad(x, ((0, _CPAD - c), (0, 0)))


# ------------------------------ DPCN forward --------------------------------

@jax.jit
def dpcn_forward(params, xt_1, xt, ut):
    """Inputs / outputs are NCHW, matching the PyTorch module."""
    B = xt.shape[0]
    nblk = NUM_BATCH_BLOCKS
    assert B % nblk == 0
    bb = B // nblk                       # batch elements folded into lanes per grid step
    nl = bb * _HW                        # state lanes per step
    nu = bb * _UHW                       # cause lanes per step

    x1f = _fold_nchw(xt_1)               # (24, B*256)
    xtf = _fold_nchw(xt)                 # (24, B*256)
    utf = _fold_nchw(ut)                 # (24, B*64)

    masks = _make_tap_masks(nl)          # (9, 1, nl)   trace-time constant
    sel = _make_scatter(bb)              # (4*nu, nl)   trace-time constant

    wa1 = _conv_weight_im2col(params["wA1"])                          # (24, 216)
    wa2 = _conv_weight_im2col(params["wA2"])                          # (24, 216)
    wbs = _cause_weight(params["wB"])                                 # (96, 24)
    wc = _frame_weight(params["wC"])                                  # (8, 24)
    gamma = jnp.reshape(params["gamma"], (1,)).astype(jnp.float32)    # SMEM scalar

    ps24, cs24, pf8 = pl.pallas_call(
        _dpcn_kernel,
        out_shape=(
            jax.ShapeDtypeStruct((_CPAD, B * _HW), jnp.float32),   # predicted_state (ch-padded)
            jax.ShapeDtypeStruct((_CPAD, B * _HW), jnp.float32),   # cause_state (ch-padded)
            jax.ShapeDtypeStruct((8, B * _HW), jnp.float32),       # frame phases (pre-interleave)
        ),
        grid=(nblk,),
        in_specs=[
            pl.BlockSpec(memory_space=pltpu.MemorySpace.SMEM),            # gamma
            pl.BlockSpec((_CPAD, nl), lambda i: (0, i)),                  # xt_1
            pl.BlockSpec((_CPAD, nl), lambda i: (0, i)),                  # xt
            pl.BlockSpec((_CPAD, nu), lambda i: (0, i)),                  # ut
            pl.BlockSpec((9, 1, nl), lambda i: (0, 0, 0)),                # tap masks (const)
            pl.BlockSpec((_CPAD, _K), lambda i: (0, 0)),                  # wA1 (im2col)
            pl.BlockSpec((_CPAD, _K), lambda i: (0, 0)),                  # wA2 (im2col)
            pl.BlockSpec((4 * _CPAD, _CPAD), lambda i: (0, 0)),           # wB (phase-stacked)
            pl.BlockSpec((8, _CPAD), lambda i: (0, 0)),                   # wC (phase rows)
            pl.BlockSpec((4 * nu, nl), lambda i: (0, 0)),                 # scatter SEL (const)
        ],
        out_specs=(
            pl.BlockSpec((_CPAD, nl), lambda i: (0, i)),
            pl.BlockSpec((_CPAD, nl), lambda i: (0, i)),
            pl.BlockSpec((8, nl), lambda i: (0, i)),
        ),
        scratch_shapes=[pltpu.VMEM((_K, nl), jnp.float32)],               # im2col patches
        compiler_params=pltpu.CompilerParams(
            dimension_semantics=("parallel",)),
    )(gamma, x1f, xtf, utf, masks, wa1, wa2, wbs, wc, sel)

    def unfold(a):   # (24, B*256) -> (B, 20, 16, 16); tiny XLA transpose + slice
        a = jnp.transpose(a.reshape(_CPAD, B, _H, _W), (1, 0, 2, 3))
        return a[:, :STATE_DIM]

    ps = unfold(ps24)
    cs = unfold(cs24)
    # pf8[t=kh*2+kw, b*256 + h*W + w] -> frame[b, 0, 2h+kh, 2w+kw]: one ~8 KB transpose.
    pf = jnp.transpose(pf8[:4].reshape(2, 2, B, _H, _W), (2, 3, 0, 4, 1))
    pf = pf.reshape(B, INPUT_DIM, 2 * _H, 2 * _W)
    return pf, ps, cs


# ------------------------------ params / ref --------------------------------

def init_params(key):
    k1, k2, k3, k4 = jax.random.split(key, 4)
    # PyTorch layouts: Conv2d weight (Co, Ci, kh, kw) ~ U(-0.01, 0.01);
    #                  ConvTranspose2d weight (Ci, Co, kh, kw) ~ U(-0.1, 0.1)
    return {
        "wA1": jax.random.uniform(k1, (STATE_DIM, STATE_DIM, 3, 3), jnp.float32, -0.01, 0.01),
        "wA2": jax.random.uniform(k2, (STATE_DIM, STATE_DIM, 3, 3), jnp.float32, -0.01, 0.01),
        "wB": jax.random.uniform(k3, (CAUSE_DIM, STATE_DIM, 2, 2), jnp.float32, -0.1, 0.1),
        "wC": jax.random.uniform(k4, (STATE_DIM, INPUT_DIM, 2, 2), jnp.float32, -0.1, 0.1),
        "gamma": jnp.asarray(1.0, jnp.float32),   # traced, like the torch nn.Parameter
    }


def _ref_forward(params, xt_1, xt, ut):
    """Pure-JAX reference (NCHW) of the PyTorch forward."""
    dn = ("NCHW", "OIHW", "NCHW")
    hi = lax.Precision.HIGHEST

    def conv3(x, w):
        return lax.conv_general_dilated(x, w, (1, 1), [(1, 1), (1, 1)],
                                        dimension_numbers=dn, precision=hi)

    def deconv2x2(x, w_pt):   # ConvTranspose2d(k=2, s=2, p=0)
        w = jnp.transpose(w_pt, (1, 0, 2, 3))[:, :, ::-1, ::-1]
        return lax.conv_general_dilated(x, w, (1, 1), [(1, 1), (1, 1)],
                                        lhs_dilation=(2, 2),
                                        dimension_numbers=dn, precision=hi)

    h1 = jnp.maximum(conv3(xt_1, params["wA1"]), 0.0)
    ps = jnp.maximum(conv3(h1, params["wA2"]), 0.0) + xt_1
    pf = deconv2x2(xt, params["wC"])
    bu = deconv2x2(ut, params["wB"])
    cs = params["gamma"] * (1.0 + jnp.exp(-bu)) / 2.0 * xt
    return pf, ps, cs


# ---------------------------------- main -------------------------------------

if __name__ == "__main__":
    B = 2
    key = jax.random.PRNGKey(0)
    kp, k1, k2, k3 = jax.random.split(key, 4)

    params = init_params(kp)
    xt_1 = jax.random.normal(k1, (B, STATE_DIM, STATE_SIZE, STATE_SIZE), jnp.float32)
    xt = jax.random.normal(k2, (B, STATE_DIM, STATE_SIZE, STATE_SIZE), jnp.float32)
    ut = jax.random.normal(k3, (B, CAUSE_DIM, CAUSE_SIZE, CAUSE_SIZE), jnp.float32)

    pf, ps, cs = dpcn_forward(params, xt_1, xt, ut)
    jax.block_until_ready((pf, ps, cs))

    assert pf.shape == (B, INPUT_DIM, 2 * STATE_SIZE, 2 * STATE_SIZE)
    assert ps.shape == (B, STATE_DIM, STATE_SIZE, STATE_SIZE)
    assert cs.shape == (B, STATE_DIM, STATE_SIZE, STATE_SIZE)

    pf_r, ps_r, cs_r = _ref_forward(params, xt_1, xt, ut)
    np.testing.assert_allclose(np.asarray(pf), np.asarray(pf_r), rtol=2e-3, atol=1e-3)
    np.testing.assert_allclose(np.asarray(ps), np.asarray(ps_r), rtol=2e-3, atol=1e-3)
    np.testing.assert_allclose(np.asarray(cs), np.asarray(cs_r), rtol=2e-3, atol=1e-3)

    print("KERNEL_OK")
</pallas_src>

<mosaic_0001>
module attributes {stable_mosaic.version = 11 : i64} {
  func.func @_dpcn_kernel(%arg0: i32, %arg1: memref<1xf32, #tpu.memory_space<smem>>, %arg2: memref<24x512xf32, #tpu.memory_space<vmem>>, %arg3: memref<24x512xf32, #tpu.memory_space<vmem>>, %arg4: memref<24x128xf32, #tpu.memory_space<vmem>>, %arg5: memref<9x1x512xf32, #tpu.memory_space<vmem>>, %arg6: memref<24x216xf32, #tpu.memory_space<vmem>>, %arg7: memref<24x216xf32, #tpu.memory_space<vmem>>, %arg8: memref<96x24xf32, #tpu.memory_space<vmem>>, %arg9: memref<8x24xf32, #tpu.memory_space<vmem>>, %arg10: memref<512x512xf32, #tpu.memory_space<vmem>>, %arg11: memref<24x512xf32, #tpu.memory_space<vmem>>, %arg12: memref<24x512xf32, #tpu.memory_space<vmem>>, %arg13: memref<8x512xf32, #tpu.memory_space<vmem>>, %arg14: memref<216x512xf32, #tpu.memory_space<vmem>>) attributes {dimension_semantics = [#tpu.dimension_semantics<parallel>], iteration_bounds = array<i64: 1>, scalar_prefetch = 0 : i64, scratch_operands = 1 : i64, tpu.core_type = #tpu.core_type<tc>, window_params = [{transform_indices = @transform_0, window_bounds = array<i64: 1>}, {transform_indices = @transform_1, window_bounds = array<i64: 24, 512>}, {transform_indices = @transform_2, window_bounds = array<i64: 24, 512>}, {transform_indices = @transform_3, window_bounds = array<i64: 24, 128>}, {pipeline_mode = #tpu.pipeline_mode<synchronous>, transform_indices = @transform_4, window_bounds = array<i64: 9, 1, 512>}, {pipeline_mode = #tpu.pipeline_mode<synchronous>, transform_indices = @transform_5, window_bounds = array<i64: 24, 216>}, {pipeline_mode = #tpu.pipeline_mode<synchronous>, transform_indices = @transform_6, window_bounds = array<i64: 24, 216>}, {pipeline_mode = #tpu.pipeline_mode<synchronous>, transform_indices = @transform_7, window_bounds = array<i64: 96, 24>}, {pipeline_mode = #tpu.pipeline_mode<synchronous>, transform_indices = @transform_8, window_bounds = array<i64: 8, 24>}, {pipeline_mode = #tpu.pipeline_mode<synchronous>, transform_indices = @transform_9, window_bounds = array<i64: 512, 512>}, {transform_indices = @transform_10, window_bounds = array<i64: 24, 512>}, {transform_indices = @transform_11, window_bounds = array<i64: 24, 512>}, {transform_indices = @transform_12, window_bounds = array<i64: 8, 512>}]} {
    %c0 = arith.constant 0 : index
    %c0_0 = arith.constant 0 : index
    %0 = vector.load %arg2[%c0, %c0_0] : memref<24x512xf32, #tpu.memory_space<vmem>>, vector<24x512xf32>
    %c0_1 = arith.constant 0 : index
    %c0_2 = arith.constant 0 : index
    %1 = vector.load %arg3[%c0_1, %c0_2] : memref<24x512xf32, #tpu.memory_space<vmem>>, vector<24x512xf32>
    %c17_i32 = arith.constant 17 : i32
    %2 = tpu.dynamic_rotate %0 by %c17_i32 dim 1 : vector<24x512xf32>, i32 -> vector<24x512xf32>
    %c0_3 = arith.constant 0 : index
    %c0_4 = arith.constant 0 : index
    %c0_5 = arith.constant 0 : index
    %3 = vector.load %arg5[%c0_3, %c0_4, %c0_5] : memref<9x1x512xf32, #tpu.memory_space<vmem>>, vector<1x1x512xf32>
    %4 = vector.shape_cast %3 : vector<1x1x512xf32> to vector<1x512xf32>
    %5 = vector.broadcast %4 : vector<1x512xf32> to vector<24x512xf32>
    %6 = arith.mulf %2, %5 : vector<24x512xf32>
    %c0_6 = arith.constant 0 : index
    %c0_7 = arith.constant 0 : index
    %7 = vector.load %arg14[%c0_6, %c0_7] : memref<216x512xf32, #tpu.memory_space<vmem>>, vector<24x512xf32>
    tpu.vector_store %arg14[%c0_6, %c0_7], %6 {strides = array<i32>} : memref<216x512xf32, #tpu.memory_space<vmem>>, vector<24x512xf32>,
    %c16_i32 = arith.constant 16 : i32
    %8 = tpu.dynamic_rotate %0 by %c16_i32 dim 1 : vector<24x512xf32>, i32 -> vector<24x512xf32>
    %c1 = arith.constant 1 : index
    %c0_8 = arith.constant 0 : index
    %c0_9 = arith.constant 0 : index
    %9 = vector.load %arg5[%c1, %c0_8, %c0_9] : memref<9x1x512xf32, #tpu.memory_space<vmem>>, vector<1x1x512xf32>
    %10 = vector.shape_cast %9 : vector<1x1x512xf32> to vector<1x512xf32>
    %11 = vector.broadcast %10 : vector<1x512xf32> to vector<24x512xf32>
    %12 = arith.mulf %8, %11 : vector<24x512xf32>
    %c24 = arith.constant 24 : index
    %c0_10 = arith.constant 0 : index
    %13 = vector.load %arg14[%c24, %c0_10] : memref<216x512xf32, #tpu.memory_space<vmem>>, vector<24x512xf32>
    tpu.vector_store %arg14[%c24, %c0_10], %12 {strides = array<i32>} : memref<216x512xf32, #tpu.memory_space<vmem>>, vector<24x512xf32>,
    %c15_i32 = arith.constant 15 : i32
    %14 = tpu.dynamic_rotate %0 by %c15_i32 dim 1 : vector<24x512xf32>, i32 -> vector<24x512xf32>
    %c2 = arith.constant 2 : index
    %c0_11 = arith.constant 0 : index
    %c0_12 = arith.constant 0 : index
    %15 = vector.load %arg5[%c2, %c0_11, %c0_12] : memref<9x1x512xf32, #tpu.memory_space<vmem>>, vector<1x1x512xf32>
    %16 = vector.shape_cast %15 : vector<1x1x512xf32> to vector<1x512xf32>
    %17 = vector.broadcast %16 : vector<1x512xf32> to vector<24x512xf32>
    %18 = arith.mulf %14, %17 : vector<24x512xf32>
    %c48 = arith.constant 48 : index
    %c0_13 = arith.constant 0 : index
    %19 = vector.load %arg14[%c48, %c0_13] : memref<216x512xf32, #tpu.memory_space<vmem>>, vector<24x512xf32>
    tpu.vector_store %arg14[%c48, %c0_13], %18 {strides = array<i32>} : memref<216x512xf32, #tpu.memory_space<vmem>>, vector<24x512xf32>,
    %c1_i32 = arith.constant 1 : i32
    %20 = tpu.dynamic_rotate %0 by %c1_i32 dim 1 : vector<24x512xf32>, i32 -> vector<24x512xf32>
    %c3 = arith.constant 3 : index
    %c0_14 = arith.constant 0 : index
    %c0_15 = arith.constant 0 : index
    %21 = vector.load %arg5[%c3, %c0_14, %c0_15] : memref<9x1x512xf32, #tpu.memory_space<vmem>>, vector<1x1x512xf32>
    %22 = vector.shape_cast %21 : vector<1x1x512xf32> to vector<1x512xf32>
    %23 = vector.broadcast %22 : vector<1x512xf32> to vector<24x512xf32>
    %24 = arith.mulf %20, %23 : vector<24x512xf32>
    %c72 = arith.constant 72 : index
    %c0_16 = arith.constant 0 : index
    %25 = vector.load %arg14[%c72, %c0_16] : memref<216x512xf32, #tpu.memory_space<vmem>>, vector<24x512xf32>
    tpu.vector_store %arg14[%c72, %c0_16], %24 {strides = array<i32>} : memref<216x512xf32, #tpu.memory_space<vmem>>, vector<24x512xf32>,
    %c96 = arith.constant 96 : index
    %c0_17 = arith.constant 0 : index
    %26 = vector.load %arg14[%c96, %c0_17] : memref<216x512xf32, #tpu.memory_space<vmem>>, vector<24x512xf32>
    tpu.vector_store %arg14[%c96, %c0_17], %0 {strides = array<i32>} : memref<216x512xf32, #tpu.memory_space<vmem>>, vector<24x512xf32>,
    %c511_i32 = arith.constant 511 : i32
    %27 = tpu.dynamic_rotate %0 by %c511_i32 dim 1 : vector<24x512xf32>, i32 -> vector<24x512xf32>
    %c5 = arith.constant 5 : index
    %c0_18 = arith.constant 0 : index
    %c0_19 = arith.constant 0 : index
    %28 = vector.load %arg5[%c5, %c0_18, %c0_19] : memref<9x1x512xf32, #tpu.memory_space<vmem>>, vector<1x1x512xf32>
    %29 = vector.shape_cast %28 : vector<1x1x512xf32> to vector<1x512xf32>
    %30 = vector.broadcast %29 : vector<1x512xf32> to vector<24x512xf32>
    %31 = arith.mulf %27, %30 : vector<24x512xf32>
    %c120 = arith.constant 120 : index
    %c0_20 = arith.constant 0 : index
    %32 = vector.load %arg14[%c120, %c0_20] : memref<216x512xf32, #tpu.memory_space<vmem>>, vector<24x512xf32>
    tpu.vector_store %arg14[%c120, %c0_20], %31 {strides = array<i32>} : memref<216x512xf32, #tpu.memory_space<vmem>>, vector<24x512xf32>,
    %c497_i32 = arith.constant 497 : i32
    %33 = tpu.dynamic_rotate %0 by %c497_i32 dim 1 : vector<24x512xf32>, i32 -> vector<24x512xf32>
    %c6 = arith.constant 6 : index
    %c0_21 = arith.constant 0 : index
    %c0_22 = arith.constant 0 : index
    %34 = vector.load %arg5[%c6, %c0_21, %c0_22] : memref<9x1x512xf32, #tpu.memory_space<vmem>>, vector<1x1x512xf32>
    %35 = vector.shape_cast %34 : vector<1x1x512xf32> to vector<1x512xf32>
    %36 = vector.broadcast %35 : vector<1x512xf32> to vector<24x512xf32>
    %37 = arith.mulf %33, %36 : vector<24x512xf32>
    %c144 = arith.constant 144 : index
    %c0_23 = arith.constant 0 : index
    %38 = vector.load %arg14[%c144, %c0_23] : memref<216x512xf32, #tpu.memory_space<vmem>>, vector<24x512xf32>
    tpu.vector_store %arg14[%c144, %c0_23], %37 {strides = array<i32>} : memref<216x512xf32, #tpu.memory_space<vmem>>, vector<24x512xf32>,
    %c496_i32 = arith.constant 496 : i32
    %39 = tpu.dynamic_rotate %0 by %c496_i32 dim 1 : vector<24x512xf32>, i32 -> vector<24x512xf32>
    %c7 = arith.constant 7 : index
    %c0_24 = arith.constant 0 : index
    %c0_25 = arith.constant 0 : index
    %40 = vector.load %arg5[%c7, %c0_24, %c0_25] : memref<9x1x512xf32, #tpu.memory_space<vmem>>, vector<1x1x512xf32>
    %41 = vector.shape_cast %40 : vector<1x1x512xf32> to vector<1x512xf32>
    %42 = vector.broadcast %41 : vector<1x512xf32> to vector<24x512xf32>
    %43 = arith.mulf %39, %42 : vector<24x512xf32>
    %c168 = arith.constant 168 : index
    %c0_26 = arith.constant 0 : index
    %44 = vector.load %arg14[%c168, %c0_26] : memref<216x512xf32, #tpu.memory_space<vmem>>, vector<24x512xf32>
    tpu.vector_store %arg14[%c168, %c0_26], %43 {strides = array<i32>} : memref<216x512xf32, #tpu.memory_space<vmem>>, vector<24x512xf32>,
    %c495_i32 = arith.constant 495 : i32
    %45 = tpu.dynamic_rotate %0 by %c495_i32 dim 1 : vector<24x512xf32>, i32 -> vector<24x512xf32>
    %c8 = arith.constant 8 : index
    %c0_27 = arith.constant 0 : index
    %c0_28 = arith.constant 0 : index
    %46 = vector.load %arg5[%c8, %c0_27, %c0_28] : memref<9x1x512xf32, #tpu.memory_space<vmem>>, vector<1x1x512xf32>
    %47 = vector.shape_cast %46 : vector<1x1x512xf32> to vector<1x512xf32>
    %48 = vector.broadcast %47 : vector<1x512xf32> to vector<24x512xf32>
    %49 = arith.mulf %45, %48 : vector<24x512xf32>
    %c192 = arith.constant 192 : index
    %c0_29 = arith.constant 0 : index
    %50 = vector.load %arg14[%c192, %c0_29] : memref<216x512xf32, #tpu.memory_space<vmem>>, vector<24x512xf32>
    tpu.vector_store %arg14[%c192, %c0_29], %49 {strides = array<i32>} : memref<216x512xf32, #tpu.memory_space<vmem>>, vector<24x512xf32>,
    %c0_30 = arith.constant 0 : index
    %c0_31 = arith.constant 0 : index
    %51 = vector.load %arg6[%c0_30, %c0_31] : memref<24x216xf32, #tpu.memory_space<vmem>>, vector<24x216xf32>
    %c0_32 = arith.constant 0 : index
    %c0_33 = arith.constant 0 : index
    %52 = vector.load %arg14[%c0_32, %c0_33] : memref<216x512xf32, #tpu.memory_space<vmem>>, vector<216x512xf32>
    %cst = arith.constant dense<0.000000e+00> : vector<24x512xf32>
    %53 = tpu.matmul %51, %52, %cst {dimension_numbers = #tpu.dot_dimension_numbers<[1], [0], [0], [1], [0, 0, 1, 1], [], []>} : vector<24x216xf32>, vector<216x512xf32>, vector<24x512xf32> -> vector<24x512xf32>
    %cst_34 = arith.constant 0.000000e+00 : f32
    %54 = vector.broadcast %cst_34 : f32 to vector<24x512xf32>
    %55 = arith.maximumf %53, %54 : vector<24x512xf32>
    %c17_i32_35 = arith.constant 17 : i32
    %56 = tpu.dynamic_rotate %55 by %c17_i32_35 dim 1 : vector<24x512xf32>, i32 -> vector<24x512xf32>
    %c0_36 = arith.constant 0 : index
    %c0_37 = arith.constant 0 : index
    %c0_38 = arith.constant 0 : index
    %57 = vector.load %arg5[%c0_36, %c0_37, %c0_38] : memref<9x1x512xf32, #tpu.memory_space<vmem>>, vector<1x1x512xf32>
    %58 = vector.shape_cast %57 : vector<1x1x512xf32> to vector<1x512xf32>
    %59 = vector.broadcast %58 : vector<1x512xf32> to vector<24x512xf32>
    %60 = arith.mulf %56, %59 : vector<24x512xf32>
    %c0_39 = arith.constant 0 : index
    %c0_40 = arith.constant 0 : index
    %61 = vector.load %arg14[%c0_39, %c0_40] : memref<216x512xf32, #tpu.memory_space<vmem>>, vector<24x512xf32>
    tpu.vector_store %arg14[%c0_39, %c0_40], %60 {strides = array<i32>} : memref<216x512xf32, #tpu.memory_space<vmem>>, vector<24x512xf32>,
    %c16_i32_41 = arith.constant 16 : i32
    %62 = tpu.dynamic_rotate %55 by %c16_i32_41 dim 1 : vector<24x512xf32>, i32 -> vector<24x512xf32>
    %c1_42 = arith.constant 1 : index
    %c0_43 = arith.constant 0 : index
    %c0_44 = arith.constant 0 : index
    %63 = vector.load %arg5[%c1_42, %c0_43, %c0_44] : memref<9x1x512xf32, #tpu.memory_space<vmem>>, vector<1x1x512xf32>
    %64 = vector.shape_cast %63 : vector<1x1x512xf32> to vector<1x512xf32>
    %65 = vector.broadcast %64 : vector<1x512xf32> to vector<24x512xf32>
    %66 = arith.mulf %62, %65 : vector<24x512xf32>
    %c24_45 = arith.constant 24 : index
    %c0_46 = arith.constant 0 : index
    %67 = vector.load %arg14[%c24_45, %c0_46] : memref<216x512xf32, #tpu.memory_space<vmem>>, vector<24x512xf32>
    tpu.vector_store %arg14[%c24_45, %c0_46], %66 {strides = array<i32>} : memref<216x512xf32, #tpu.memory_space<vmem>>, vector<24x512xf32>,
    %c15_i32_47 = arith.constant 15 : i32
    %68 = tpu.dynamic_rotate %55 by %c15_i32_47 dim 1 : vector<24x512xf32>, i32 -> vector<24x512xf32>
    %c2_48 = arith.constant 2 : index
    %c0_49 = arith.constant 0 : index
    %c0_50 = arith.constant 0 : index
    %69 = vector.load %arg5[%c2_48, %c0_49, %c0_50] : memref<9x1x512xf32, #tpu.memory_space<vmem>>, vector<1x1x512xf32>
    %70 = vector.shape_cast %69 : vector<1x1x512xf32> to vector<1x512xf32>
    %71 = vector.broadcast %70 : vector<1x512xf32> to vector<24x512xf32>
    %72 = arith.mulf %68, %71 : vector<24x512xf32>
    %c48_51 = arith.constant 48 : index
    %c0_52 = arith.constant 0 : index
    %73 = vector.load %arg14[%c48_51, %c0_52] : memref<216x512xf32, #tpu.memory_space<vmem>>, vector<24x512xf32>
    tpu.vector_store %arg14[%c48_51, %c0_52], %72 {strides = array<i32>} : memref<216x512xf32, #tpu.memory_space<vmem>>, vector<24x512xf32>,
    %c1_i32_53 = arith.constant 1 : i32
    %74 = tpu.dynamic_rotate %55 by %c1_i32_53 dim 1 : vector<24x512xf32>, i32 -> vector<24x512xf32>
    %c3_54 = arith.constant 3 : index
    %c0_55 = arith.constant 0 : index
    %c0_56 = arith.constant 0 : index
    %75 = vector.load %arg5[%c3_54, %c0_55, %c0_56] : memref<9x1x512xf32, #tpu.memory_space<vmem>>, vector<1x1x512xf32>
    %76 = vector.shape_cast %75 : vector<1x1x512xf32> to vector<1x512xf32>
    %77 = vector.broadcast %76 : vector<1x512xf32> to vector<24x512xf32>
    %78 = arith.mulf %74, %77 : vector<24x512xf32>
    %c72_57 = arith.constant 72 : index
    %c0_58 = arith.constant 0 : index
    %79 = vector.load %arg14[%c72_57, %c0_58] : memref<216x512xf32, #tpu.memory_space<vmem>>, vector<24x512xf32>
    tpu.vector_store %arg14[%c72_57, %c0_58], %78 {strides = array<i32>} : memref<216x512xf32, #tpu.memory_space<vmem>>, vector<24x512xf32>,
    %c96_59 = arith.constant 96 : index
    %c0_60 = arith.constant 0 : index
    %80 = vector.load %arg14[%c96_59, %c0_60] : memref<216x512xf32, #tpu.memory_space<vmem>>, vector<24x512xf32>
    tpu.vector_store %arg14[%c96_59, %c0_60], %55 {strides = array<i32>} : memref<216x512xf32, #tpu.memory_space<vmem>>, vector<24x512xf32>,
    %c511_i32_61 = arith.constant 511 : i32
    %81 = tpu.dynamic_rotate %55 by %c511_i32_61 dim 1 : vector<24x512xf32>, i32 -> vector<24x512xf32>
    %c5_62 = arith.constant 5 : index
    %c0_63 = arith.constant 0 : index
    %c0_64 = arith.constant 0 : index
    %82 = vector.load %arg5[%c5_62, %c0_63, %c0_64] : memref<9x1x512xf32, #tpu.memory_space<vmem>>, vector<1x1x512xf32>
    %83 = vector.shape_cast %82 : vector<1x1x512xf32> to vector<1x512xf32>
    %84 = vector.broadcast %83 : vector<1x512xf32> to vector<24x512xf32>
    %85 = arith.mulf %81, %84 : vector<24x512xf32>
    %c120_65 = arith.constant 120 : index
    %c0_66 = arith.constant 0 : index
    %86 = vector.load %arg14[%c120_65, %c0_66] : memref<216x512xf32, #tpu.memory_space<vmem>>, vector<24x512xf32>
    tpu.vector_store %arg14[%c120_65, %c0_66], %85 {strides = array<i32>} : memref<216x512xf32, #tpu.memory_space<vmem>>, vector<24x512xf32>,
    %c497_i32_67 = arith.constant 497 : i32
    %87 = tpu.dynamic_rotate %55 by %c497_i32_67 dim 1 : vector<24x512xf32>, i32 -> vector<24x512xf32>
    %c6_68 = arith.constant 6 : index
    %c0_69 = arith.constant 0 : index
    %c0_70 = arith.constant 0 : index
    %88 = vector.load %arg5[%c6_68, %c0_69, %c0_70] : memref<9x1x512xf32, #tpu.memory_space<vmem>>, vector<1x1x512xf32>
    %89 = vector.shape_cast %88 : vector<1x1x512xf32> to vector<1x512xf32>
    %90 = vector.broadcast %89 : vector<1x512xf32> to vector<24x512xf32>
    %91 = arith.mulf %87, %90 : vector<24x512xf32>
    %c144_71 = arith.constant 144 : index
    %c0_72 = arith.constant 0 : index
    %92 = vector.load %arg14[%c144_71, %c0_72] : memref<216x512xf32, #tpu.memory_space<vmem>>, vector<24x512xf32>
    tpu.vector_store %arg14[%c144_71, %c0_72], %91 {strides = array<i32>} : memref<216x512xf32, #tpu.memory_space<vmem>>, vector<24x512xf32>,
    %c496_i32_73 = arith.constant 496 : i32
    %93 = tpu.dynamic_rotate %55 by %c496_i32_73 dim 1 : vector<24x512xf32>, i32 -> vector<24x512xf32>
    %c7_74 = arith.constant 7 : index
    %c0_75 = arith.constant 0 : index
    %c0_76 = arith.constant 0 : index
    %94 = vector.load %arg5[%c7_74, %c0_75, %c0_76] : memref<9x1x512xf32, #tpu.memory_space<vmem>>, vector<1x1x512xf32>
    %95 = vector.shape_cast %94 : vector<1x1x512xf32> to vector<1x512xf32>
    %96 = vector.broadcast %95 : vector<1x512xf32> to vector<24x512xf32>
    %97 = arith.mulf %93, %96 : vector<24x512xf32>
    %c168_77 = arith.constant 168 : index
    %c0_78 = arith.constant 0 : index
    %98 = vector.load %arg14[%c168_77, %c0_78] : memref<216x512xf32, #tpu.memory_space<vmem>>, vector<24x512xf32>
    tpu.vector_store %arg14[%c168_77, %c0_78], %97 {strides = array<i32>} : memref<216x512xf32, #tpu.memory_space<vmem>>, vector<24x512xf32>,
    %c495_i32_79 = arith.constant 495 : i32
    %99 = tpu.dynamic_rotate %55 by %c495_i32_79 dim 1 : vector<24x512xf32>, i32 -> vector<24x512xf32>
    %c8_80 = arith.constant 8 : index
    %c0_81 = arith.constant 0 : index
    %c0_82 = arith.constant 0 : index
    %100 = vector.load %arg5[%c8_80, %c0_81, %c0_82] : memref<9x1x512xf32, #tpu.memory_space<vmem>>, vector<1x1x512xf32>
    %101 = vector.shape_cast %100 : vector<1x1x512xf32> to vector<1x512xf32>
    %102 = vector.broadcast %101 : vector<1x512xf32> to vector<24x512xf32>
    %103 = arith.mulf %99, %102 : vector<24x512xf32>
    %c192_83 = arith.constant 192 : index
    %c0_84 = arith.constant 0 : index
    %104 = vector.load %arg14[%c192_83, %c0_84] : memref<216x512xf32, #tpu.memory_space<vmem>>, vector<24x512xf32>
    tpu.vector_store %arg14[%c192_83, %c0_84], %103 {strides = array<i32>} : memref<216x512xf32, #tpu.memory_space<vmem>>, vector<24x512xf32>,
    %c0_85 = arith.constant 0 : index
    %c0_86 = arith.constant 0 : index
    %105 = vector.load %arg7[%c0_85, %c0_86] : memref<24x216xf32, #tpu.memory_space<vmem>>, vector<24x216xf32>
    %c0_87 = arith.constant 0 : index
    %c0_88 = arith.constant 0 : index
    %106 = vector.load %arg14[%c0_87, %c0_88] : memref<216x512xf32, #tpu.memory_space<vmem>>, vector<216x512xf32>
    %cst_89 = arith.constant dense<0.000000e+00> : vector<24x512xf32>
    %107 = tpu.matmul %105, %106, %cst_89 {dimension_numbers = #tpu.dot_dimension_numbers<[1], [0], [0], [1], [0, 0, 1, 1], [], []>} : vector<24x216xf32>, vector<216x512xf32>, vector<24x512xf32> -> vector<24x512xf32>
    %cst_90 = arith.constant 0.000000e+00 : f32
    %108 = vector.broadcast %cst_90 : f32 to vector<24x512xf32>
    %109 = arith.maximumf %107, %108 : vector<24x512xf32>
    %110 = arith.addf %109, %0 : vector<24x512xf32>
    %c0_91 = arith.constant 0 : index
    %c0_92 = arith.constant 0 : index
    %111 = vector.load %arg11[%c0_91, %c0_92] : memref<24x512xf32, #tpu.memory_space<vmem>>, vector<24x512xf32>
    tpu.vector_store %arg11[%c0_91, %c0_92], %110 {strides = array<i32>} : memref<24x512xf32, #tpu.memory_space<vmem>>, vector<24x512xf32>,
    %c0_93 = arith.constant 0 : index
    %c0_94 = arith.constant 0 : index
    %112 = vector.load %arg9[%c0_93, %c0_94] : memref<8x24xf32, #tpu.memory_space<vmem>>, vector<8x24xf32>
    %cst_95 = arith.constant dense<0.000000e+00> : vector<8x512xf32>
    %113 = tpu.matmul %112, %1, %cst_95 {dimension_numbers = #tpu.dot_dimension_numbers<[1], [0], [0], [1], [0, 0, 1, 1], [], []>} : vector<8x24xf32>, vector<24x512xf32>, vector<8x512xf32> -> vector<8x512xf32>
    %c0_96 = arith.constant 0 : index
    %c0_97 = arith.constant 0 : index
    %114 = vector.load %arg13[%c0_96, %c0_97] : memref<8x512xf32, #tpu.memory_space<vmem>>, vector<8x512xf32>
    tpu.vector_store %arg13[%c0_96, %c0_97], %113 {strides = array<i32>} : memref<8x512xf32, #tpu.memory_space<vmem>>, vector<8x512xf32>,
    %c0_98 = arith.constant 0 : index
    %c0_99 = arith.constant 0 : index
    %115 = vector.load %arg8[%c0_98, %c0_99] : memref<96x24xf32, #tpu.memory_space<vmem>>, vector<96x24xf32>
    %c0_100 = arith.constant 0 : index
    %c0_101 = arith.constant 0 : index
    %116 = vector.load %arg4[%c0_100, %c0_101] : memref<24x128xf32, #tpu.memory_space<vmem>>, vector<24x128xf32>
    %cst_102 = arith.constant dense<0.000000e+00> : vector<96x128xf32>
    %117 = tpu.matmul %115, %116, %cst_102 {dimension_numbers = #tpu.dot_dimension_numbers<[1], [0], [0], [1], [0, 0, 1, 1], [], []>} : vector<96x24xf32>, vector<24x128xf32>, vector<96x128xf32> -> vector<96x128xf32>
    %118 = vector.extract_strided_slice %117 {offsets = [0, 0], sizes = [24, 128], strides = [1, 1]} : vector<96x128xf32> to vector<24x128xf32>
    %119 = vector.extract_strided_slice %117 {offsets = [24, 0], sizes = [24, 128], strides = [1, 1]} : vector<96x128xf32> to vector<24x128xf32>
    %120 = vector.extract_strided_slice %117 {offsets = [48, 0], sizes = [24, 128], strides = [1, 1]} : vector<96x128xf32> to vector<24x128xf32>
    %121 = vector.extract_strided_slice %117 {offsets = [72, 0], sizes = [24, 128], strides = [1, 1]} : vector<96x128xf32> to vector<24x128xf32>
    %122 = tpu.concatenate %118, %119, %120, %121 in 1 : vector<24x128xf32>, vector<24x128xf32>, vector<24x128xf32>, vector<24x128xf32> -> vector<24x512xf32>
    %c0_103 = arith.constant 0 : index
    %c0_104 = arith.constant 0 : index
    %123 = vector.load %arg10[%c0_103, %c0_104] : memref<512x512xf32, #tpu.memory_space<vmem>>, vector<512x512xf32>
    %cst_105 = arith.constant dense<0.000000e+00> : vector<24x512xf32>
    %124 = tpu.matmul %122, %123, %cst_105 {dimension_numbers = #tpu.dot_dimension_numbers<[1], [0], [0], [1], [0, 0, 1, 1], [], []>} : vector<24x512xf32>, vector<512x512xf32>, vector<24x512xf32> -> vector<24x512xf32>
    %c0_106 = arith.constant 0 : index
    %125 = memref.load %arg1[%c0_106] : memref<1xf32, #tpu.memory_space<smem>>
    %cst_107 = arith.constant 5.000000e-01 : f32
    %126 = arith.mulf %125, %cst_107 : f32
    %cst_108 = arith.constant 0.000000e+00 : f32
    %127 = vector.broadcast %cst_108 : f32 to vector<24x512xf32>
    %128 = arith.subf %127, %124 : vector<24x512xf32>
    %129 = math.exp %128 : vector<24x512xf32>
    %cst_109 = arith.constant 1.000000e+00 : f32
    %130 = vector.broadcast %cst_109 : f32 to vector<24x512xf32>
    %131 = arith.addf %130, %129 : vector<24x512xf32>
    %132 = vector.broadcast %126 : f32 to vector<24x512xf32>
    %133 = arith.mulf %132, %131 : vector<24x512xf32>
    %134 = arith.mulf %133, %1 : vector<24x512xf32>
    %c0_110 = arith.constant 0 : index
    %c0_111 = arith.constant 0 : index
    %135 = vector.load %arg12[%c0_110, %c0_111] : memref<24x512xf32, #tpu.memory_space<vmem>>, vector<24x512xf32>
    tpu.vector_store %arg12[%c0_110, %c0_111], %134 {strides = array<i32>} : memref<24x512xf32, #tpu.memory_space<vmem>>, vector<24x512xf32>,
    return
  }
  func.func @transform_0(%arg0: i32) -> i32 {
    %c0_i32 = arith.constant 0 : i32
    %c0_i32_0 = arith.constant 0 : i32
    return %c0_i32 : i32
  }
  func.func @transform_1(%arg0: i32) -> (i32, i32) {
    %c0_i32 = arith.constant 0 : i32
    %c0_i32_0 = arith.constant 0 : i32
    return %c0_i32, %arg0 : i32, i32
  }
  func.func @transform_2(%arg0: i32) -> (i32, i32) {
    %c0_i32 = arith.constant 0 : i32
    %c0_i32_0 = arith.constant 0 : i32
    return %c0_i32, %arg0 : i32, i32
  }
  func.func @transform_3(%arg0: i32) -> (i32, i32) {
    %c0_i32 = arith.constant 0 : i32
    %c0_i32_0 = arith.constant 0 : i32
    return %c0_i32, %arg0 : i32, i32
  }
  func.func @transform_4(%arg0: i32) -> (i32, i32, i32) {
    %c0_i32 = arith.constant 0 : i32
    %c0_i32_0 = arith.constant 0 : i32
    %c0_i32_1 = arith.constant 0 : i32
    %c0_i32_2 = arith.constant 0 : i32
    return %c0_i32, %c0_i32_0, %c0_i32_1 : i32, i32, i32
  }
  func.func @transform_5(%arg0: i32) -> (i32, i32) {
    %c0_i32 = arith.constant 0 : i32
    %c0_i32_0 = arith.constant 0 : i32
    %c0_i32_1 = arith.constant 0 : i32
    return %c0_i32, %c0_i32_0 : i32, i32
  }
  func.func @transform_6(%arg0: i32) -> (i32, i32) {
    %c0_i32 = arith.constant 0 : i32
    %c0_i32_0 = arith.constant 0 : i32
    %c0_i32_1 = arith.constant 0 : i32
    return %c0_i32, %c0_i32_0 : i32, i32
  }
  func.func @transform_7(%arg0: i32) -> (i32, i32) {
    %c0_i32 = arith.constant 0 : i32
    %c0_i32_0 = arith.constant 0 : i32
    %c0_i32_1 = arith.constant 0 : i32
    return %c0_i32, %c0_i32_0 : i32, i32
  }
  func.func @transform_8(%arg0: i32) -> (i32, i32) {
    %c0_i32 = arith.constant 0 : i32
    %c0_i32_0 = arith.constant 0 : i32
    %c0_i32_1 = arith.constant 0 : i32
    return %c0_i32, %c0_i32_0 : i32, i32
  }
  func.func @transform_9(%arg0: i32) -> (i32, i32) {
    %c0_i32 = arith.constant 0 : i32
    %c0_i32_0 = arith.constant 0 : i32
    %c0_i32_1 = arith.constant 0 : i32
    return %c0_i32, %c0_i32_0 : i32, i32
  }
  func.func @transform_10(%arg0: i32) -> (i32, i32) {
    %c0_i32 = arith.constant 0 : i32
    %c0_i32_0 = arith.constant 0 : i32
    return %c0_i32, %arg0 : i32, i32
  }
  func.func @transform_11(%arg0: i32) -> (i32, i32) {
    %c0_i32 = arith.constant 0 : i32
    %c0_i32_0 = arith.constant 0 : i32
    return %c0_i32, %arg0 : i32, i32
  }
  func.func @transform_12(%arg0: i32) -> (i32, i32) {
    %c0_i32 = arith.constant 0 : i32
    %c0_i32_0 = arith.constant 0 : i32
    return %c0_i32, %arg0 : i32, i32
  }
}

</mosaic_0001>

<llo_original>
// kernel: dpcn_forward.1
$region0: #{dpcn_forward.1}
  #allocation0 [shape = 'u32[]', space=smem, size = 0x4, offset = 0x4, fixed_abs, tag = 'smem constant byte address 0x4 - core index']
  #allocation1 [shape = 'u32[72,128]{1,0:T(1,128)}', space=vmem, size = 0x9000, scoped, tag = 'internal scratch']
  #allocation2 [shape = 'f32[216,512]{1,0:T(8,128)}', space=vmem, size = 0x6c000, scoped, tag = 'scratch operand']
  #allocation3 [shape = 'f32[1]{0:T(128)S(6)}', space=smem, size = 0x200, scoped, tag = 'scoped memory for dpcn_forward.1']
  %s0 = inlined_call_operand.<no memory space> [shape: f32[1], index: 0, kind: input, shape index: {}]
  %s1 = inlined_call_operand.vmem [shape: f32[24,512], index: 1, kind: input, shape index: {}]
  %s2 = inlined_call_operand.vmem [shape: f32[24,512], index: 2, kind: input, shape index: {}]
  %s3 = inlined_call_operand.vmem [shape: f32[24,128], index: 3, kind: input, shape index: {}]
  %s4 = inlined_call_operand.vmem [shape: f32[9,1,512], index: 4, kind: input, shape index: {}]
  %s5 = inlined_call_operand.vmem [shape: f32[24,216], index: 5, kind: input, shape index: {}]
  %s6 = inlined_call_operand.vmem [shape: f32[24,216], index: 6, kind: input, shape index: {}]
  %s7 = inlined_call_operand.vmem [shape: f32[96,24], index: 7, kind: input, shape index: {}]
  %s8 = inlined_call_operand.vmem [shape: f32[8,24], index: 8, kind: input, shape index: {}]
  %s9 = inlined_call_operand.hbm [shape: f32[512,512], index: 9, kind: input, shape index: {}]
  %s10 = inlined_call_operand.vmem [shape: f32[24,512], index: 10, kind: output, shape index: {0}]
  %s11 = inlined_call_operand.vmem [shape: f32[24,512], index: 11, kind: output, shape index: {1}]
  %s12 = inlined_call_operand.vmem [shape: f32[8,512], index: 12, kind: output, shape index: {2}]
  %13 = xla_tuple %s10, %s11, %s12
  %s14 = sld [smem:[#allocation0]]
  $region70: #{dpcn_forward.1} parent=0
    _
  %s16 = ssub.s32 1, %s14
  %s17 = scalar_select 0, %s16, %s14
  %18 = sst [smem:[#allocation3]] %s0
  $region1: #{dpcn_forward.1} parent=0
    #allocation4 [shape = 'u8[1048576]{0}', space=vmem, size = 0x100000, scoped, tag = 'input window, operand 9, single buffered']
    #allocation5 [shape = 's32[1]{0}', space=sflag, size = 0x4, scoped, tag = 'scoped memory for dpcn_forward.1']
    %19 = vsyncpa [#allocation5], 0
    // Predicated region
    $region2: #{dpcn_forward.1} parent=1 // pred_check
      _
    $region3: #{dpcn_forward.1} parent=1 // pred_check_branch
      %21 = sbr.rel (0) target = $region5
    $region4: #{dpcn_forward.1} parent=1 // pred_region
      _
    $region5: #{dpcn_forward.1} parent=1 // pred_fallthru
      _
    // Predicated region
    $region6: #{dpcn_forward.1} parent=1 // pred_check
      _
    $region7: #{dpcn_forward.1} parent=1 // pred_check_branch
      %23 = sbr.rel (0) target = $region9
    $region8: #{dpcn_forward.1} parent=1 // pred_region
      _
    $region9: #{dpcn_forward.1} parent=1 // pred_fallthru
      _
    // Predicated region
    $region10: #{dpcn_forward.1} parent=1 // pred_check
      _
    $region11: #{dpcn_forward.1} parent=1 // pred_check_branch
      %25 = sbr.rel (0) target = $region13
    $region12: #{dpcn_forward.1} parent=1 // pred_region
      _
    $region13: #{dpcn_forward.1} parent=1 // pred_fallthru
      _
    // Predicated region
    $region14: #{dpcn_forward.1} parent=1 // pred_check
      _
    $region15: #{dpcn_forward.1} parent=1 // pred_check_branch
      %27 = sbr.rel (0) target = $region17
    $region16: #{dpcn_forward.1} parent=1 // pred_region
      _
    $region17: #{dpcn_forward.1} parent=1 // pred_fallthru
      _
    // Predicated region
    $region18: #{dpcn_forward.1} parent=1 // pred_check
      _
    $region19: #{dpcn_forward.1} parent=1 // pred_check_branch
      %29 = sbr.rel (0) target = $region21
    $region20: #{dpcn_forward.1} parent=1 // pred_region
      _
    $region21: #{dpcn_forward.1} parent=1 // pred_fallthru
      _
    // Predicated region
    $region22: #{dpcn_forward.1} parent=1 // pred_check
      _
    $region23: #{dpcn_forward.1} parent=1 // pred_check_branch
      %31 = sbr.rel (0) target = $region25
    $region24: #{dpcn_forward.1} parent=1 // pred_region
      _
    $region25: #{dpcn_forward.1} parent=1 // pred_fallthru
      _
    // Predicated region
    $region26: #{dpcn_forward.1} parent=1 // pred_check
      _
    $region27: #{dpcn_forward.1} parent=1 // pred_check_branch
      %33 = sbr.rel (0) target = $region29
    $region28: #{dpcn_forward.1} parent=1 // pred_region
      _
    $region29: #{dpcn_forward.1} parent=1 // pred_fallthru
      _
    // Predicated region
    $region30: #{dpcn_forward.1} parent=1 // pred_check
      _
    $region31: #{dpcn_forward.1} parent=1 // pred_check_branch
      %35 = sbr.rel (0) target = $region33
    $region32: #{dpcn_forward.1} parent=1 // pred_region
      _
    $region33: #{dpcn_forward.1} parent=1 // pred_fallthru
      _
    // Predicated region
    $region34: #{dpcn_forward.1} parent=1 // pred_check
      _
    $region35: #{dpcn_forward.1} parent=1 // pred_check_branch
      %37 = sbr.rel (0) target = $region37
    $region36: #{dpcn_forward.1} parent=1 // pred_region
      _
    $region37: #{dpcn_forward.1} parent=1 // pred_fallthru
      _
    // Predicated region
    $region38: #{dpcn_forward.1} parent=1 // pred_check
      _
    $region39: #{dpcn_forward.1} parent=1 // pred_check_branch
      %39 = sbr.rel (0) target = $region41
    $region40: #{dpcn_forward.1} parent=1 // pred_region
      %41 = vsyncadd [#allocation5], 0
      %s42 = sshll.u32 %s9, 4
      %s43 = int_to_ptr.hbm [resolvable:$true] %s42
      %s44 = sshll.u32 [#allocation4], 4
      %s45 = int_to_ptr.vmem [resolvable:$true] %s44
      %50 = dma.hbm_to_vmem [thread:$0]  %s43, 32768, %s45, [#allocation5], 512, 512, 32
    $region41: #{dpcn_forward.1} parent=1 // pred_fallthru
      _
    // Predicated region
    $region42: #{dpcn_forward.1} parent=1 // pred_check
      _
    $region43: #{dpcn_forward.1} parent=1 // pred_check_branch
      %52 = sbr.rel (0) target = $region45
    $region44: #{dpcn_forward.1} parent=1 // pred_region
      %54 = dma.done [#allocation5], 32768
    $region45: #{dpcn_forward.1} parent=1 // pred_fallthru
      _
    %v55 = vld [vmem:[%s1] sm:$0xff]
    %v56 = vld [vmem:[%s1 + $0x8] sm:$0xff]
    %v57 = vld [vmem:[%s1 + $0x10] sm:$0xff]
    %v58 = vld [vmem:[%s1 + $0x18] sm:$0xff]
    %v59 = vld [vmem:[%s1 + $0x20] sm:$0xff]
    %v60 = vld [vmem:[%s1 + $0x28] sm:$0xff]
    %v61 = vld [vmem:[%s1 + $0x30] sm:$0xff]
    %v62 = vld [vmem:[%s1 + $0x38] sm:$0xff]
    %v63 = vld [vmem:[%s1 + $0x40] sm:$0xff]
    %v64 = vld [vmem:[%s1 + $0x48] sm:$0xff]
    %v65 = vld [vmem:[%s1 + $0x50] sm:$0xff]
    %v66 = vld [vmem:[%s1 + $0x58] sm:$0xff]
    %v67 = vld [vmem:[%s2] sm:$0xff]
    %v68 = vld [vmem:[%s2 + $0x8] sm:$0xff]
    %v69 = vld [vmem:[%s2 + $0x10] sm:$0xff]
    %v70 = vld [vmem:[%s2 + $0x18] sm:$0xff]
    %v71 = vld [vmem:[%s2 + $0x20] sm:$0xff]
    %v72 = vld [vmem:[%s2 + $0x28] sm:$0xff]
    %v73 = vld [vmem:[%s2 + $0x30] sm:$0xff]
    %v74 = vld [vmem:[%s2 + $0x38] sm:$0xff]
    %v75 = vld [vmem:[%s2 + $0x40] sm:$0xff]
    %v76 = vld [vmem:[%s2 + $0x48] sm:$0xff]
    %v77 = vld [vmem:[%s2 + $0x50] sm:$0xff]
    %v78 = vld [vmem:[%s2 + $0x58] sm:$0xff]
    %79 = vrot.lane.b32.xlu0 %v55, 17
    %v80 = vpop.permute.xlu0 %79
    %81 = vrot.lane.b32.xlu0 %v59, 17
    %v82 = vpop.permute.xlu0 %81
    %83 = vrot.lane.b32.xlu0 %v63, 17
    %v84 = vpop.permute.xlu0 %83
    %85 = vrot.lane.b32.xlu0 %v56, 17
    %v86 = vpop.permute.xlu0 %85
    %87 = vrot.lane.b32.xlu0 %v60, 17
    %v88 = vpop.permute.xlu0 %87
    %89 = vrot.lane.b32.xlu0 %v64, 17
    %v90 = vpop.permute.xlu0 %89
    %91 = vrot.lane.b32.xlu0 %v57, 17
    %v92 = vpop.permute.xlu0 %91
    %93 = vrot.lane.b32.xlu0 %v61, 17
    %v94 = vpop.permute.xlu0 %93
    %95 = vrot.lane.b32.xlu0 %v65, 17
    %v96 = vpop.permute.xlu0 %95
    %97 = vrot.lane.b32.xlu0 %v58, 17
    %v98 = vpop.permute.xlu0 %97
    %99 = vrot.lane.b32.xlu0 %v62, 17
    %v100 = vpop.permute.xlu0 %99
    %101 = vrot.lane.b32.xlu0 %v66, 17
    %v102 = vpop.permute.xlu0 %101
    %v103 = vlaneseq
    %v104 = vand.u32 %v103, 127
    %vm105 = vcmp.lt.s32.totalorder %v104, 17
    %v106 = vsel %vm105, %v92, %v98
    %v107 = vsel %vm105, %v94, %v100
    %v108 = vsel %vm105, %v96, %v102
    %v109 = vsel %vm105, %v86, %v92
    %v110 = vsel %vm105, %v88, %v94
    %v111 = vsel %vm105, %v90, %v96
    %v112 = vsel %vm105, %v80, %v86
    %v113 = vsel %vm105, %v82, %v88
    %v114 = vsel %vm105, %v84, %v90
    %v115 = vsel %vm105, %v98, %v80
    %v116 = vsel %vm105, %v100, %v82
    %v117 = vsel %vm105, %v102, %v84
    %v118 = vld [vmem:[%s4] sm:$0xf]
    %v120 = vperm.slane %v118, 0
    %v121 = vperm.slane %v118, 1
    %v122 = vperm.slane %v118, 2
    %v123 = vperm.slane %v118, 3
    %v128 = vmul.f32 %v115, %v120
    %v129 = vmul.f32 %v112, %v121
    %v130 = vmul.f32 %v109, %v122
    %v131 = vmul.f32 %v106, %v123
    %v132 = vmul.f32 %v116, %v120
    %v133 = vmul.f32 %v113, %v121
    %v134 = vmul.f32 %v110, %v122
    %v135 = vmul.f32 %v107, %v123
    %v136 = vmul.f32 %v117, %v120
    %v137 = vmul.f32 %v114, %v121
    %v138 = vmul.f32 %v111, %v122
    %v139 = vmul.f32 %v108, %v123
    %140 = vst [vmem:[#allocation2] sm:$0xff] %v128
    %141 = vst [vmem:[#allocation2 + $0x8] sm:$0xff] %v129
    %142 = vst [vmem:[#allocation2 + $0x10] sm:$0xff] %v130
    %143 = vst [vmem:[#allocation2 + $0x18] sm:$0xff] %v131
    %144 = vst [vmem:[#allocation2 + $0x20] sm:$0xff] %v132
    %145 = vst [vmem:[#allocation2 + $0x28] sm:$0xff] %v133
    %146 = vst [vmem:[#allocation2 + $0x30] sm:$0xff] %v134
    %147 = vst [vmem:[#allocation2 + $0x38] sm:$0xff] %v135
    %148 = vst [vmem:[#allocation2 + $0x40] sm:$0xff] %v136
    %149 = vst [vmem:[#allocation2 + $0x48] sm:$0xff] %v137
    %150 = vst [vmem:[#allocation2 + $0x50] sm:$0xff] %v138
    %151 = vst [vmem:[#allocation2 + $0x58] sm:$0xff] %v139
    %152 = vrot.lane.b32.xlu0 %v55, 16
    %v153 = vpop.permute.xlu0 %152
    %154 = vrot.lane.b32.xlu0 %v59, 16
    %v155 = vpop.permute.xlu0 %154
    %156 = vrot.lane.b32.xlu0 %v63, 16
    %v157 = vpop.permute.xlu0 %156
    %158 = vrot.lane.b32.xlu0 %v56, 16
    %v159 = vpop.permute.xlu0 %158
    %160 = vrot.lane.b32.xlu0 %v60, 16
    %v161 = vpop.permute.xlu0 %160
    %162 = vrot.lane.b32.xlu0 %v64, 16
    %v163 = vpop.permute.xlu0 %162
    %164 = vrot.lane.b32.xlu0 %v57, 16
    %v165 = vpop.permute.xlu0 %164
    %166 = vrot.lane.b32.xlu0 %v61, 16
    %v167 = vpop.permute.xlu0 %166
    %168 = vrot.lane.b32.xlu0 %v65, 16
    %v169 = vpop.permute.xlu0 %168
    %170 = vrot.lane.b32.xlu0 %v58, 16
    %v171 = vpop.permute.xlu0 %170
    %172 = vrot.lane.b32.xlu0 %v62, 16
    %v173 = vpop.permute.xlu0 %172
    %174 = vrot.lane.b32.xlu0 %v66, 16
    %v175 = vpop.permute.xlu0 %174
    %vm176 = vcmp.lt.s32.totalorder %v104, 16
    %v177 = vsel %vm176, %v165, %v171
    %v178 = vsel %vm176, %v167, %v173
    %v179 = vsel %vm176, %v169, %v175
    %v180 = vsel %vm176, %v159, %v165
    %v181 = vsel %vm176, %v161, %v167
    %v182 = vsel %vm176, %v163, %v169
    %v183 = vsel %vm176, %v153, %v159
    %v184 = vsel %vm176, %v155, %v161
    %v185 = vsel %vm176, %v157, %v163
    %v186 = vsel %vm176, %v171, %v153
    %v187 = vsel %vm176, %v173, %v155
    %v188 = vsel %vm176, %v175, %v157
    %s189 = scalar_lea.vmem %s4, 4
    %v190 = vld [vmem:[%s189] sm:$0xf]
    %v192 = vperm.slane %v190, 0
    %v193 = vperm.slane %v190, 1
    %v194 = vperm.slane %v190, 2
    %v195 = vperm.slane %v190, 3
    %v200 = vmul.f32 %v186, %v192
    %v201 = vmul.f32 %v183, %v193
    %v202 = vmul.f32 %v180, %v194
    %v203 = vmul.f32 %v177, %v195
    %v204 = vmul.f32 %v187, %v192
    %v205 = vmul.f32 %v184, %v193
    %v206 = vmul.f32 %v181, %v194
    %v207 = vmul.f32 %v178, %v195
    %v208 = vmul.f32 %v188, %v192
    %v209 = vmul.f32 %v185, %v193
    %v210 = vmul.f32 %v182, %v194
    %v211 = vmul.f32 %v179, %v195
    %212 = vst [vmem:[#allocation2 + $0x60] sm:$0xff] %v200
    %213 = vst [vmem:[#allocation2 + $0x68] sm:$0xff] %v201
    %214 = vst [vmem:[#allocation2 + $0x70] sm:$0xff] %v202
    %215 = vst [vmem:[#allocation2 + $0x78] sm:$0xff] %v203
    %216 = vst [vmem:[#allocation2 + $0x80] sm:$0xff] %v204
    %217 = vst [vmem:[#allocation2 + $0x88] sm:$0xff] %v205
    %218 = vst [vmem:[#allocation2 + $0x90] sm:$0xff] %v206
    %219 = vst [vmem:[#allocation2 + $0x98] sm:$0xff] %v207
    %220 = vst [vmem:[#allocation2 + $0xa0] sm:$0xff] %v208
    %221 = vst [vmem:[#allocation2 + $0xa8] sm:$0xff] %v209
    %222 = vst [vmem:[#allocation2 + $0xb0] sm:$0xff] %v210
    %223 = vst [vmem:[#allocation2 + $0xb8] sm:$0xff] %v211
    %224 = vrot.lane.b32.xlu0 %v55, 15
    %v225 = vpop.permute.xlu0 %224
    %226 = vrot.lane.b32.xlu0 %v59, 15
    %v227 = vpop.permute.xlu0 %226
    %228 = vrot.lane.b32.xlu0 %v63, 15
    %v229 = vpop.permute.xlu0 %228
    %230 = vrot.lane.b32.xlu0 %v56, 15
    %v231 = vpop.permute.xlu0 %230
    %232 = vrot.lane.b32.xlu0 %v60, 15
    %v233 = vpop.permute.xlu0 %232
    %234 = vrot.lane.b32.xlu0 %v64, 15
    %v235 = vpop.permute.xlu0 %234
    %236 = vrot.lane.b32.xlu0 %v57, 15
    %v237 = vpop.permute.xlu0 %236
    %238 = vrot.lane.b32.xlu0 %v61, 15
    %v239 = vpop.permute.xlu0 %238
    %240 = vrot.lane.b32.xlu0 %v65, 15
    %v241 = vpop.permute.xlu0 %240
    %242 = vrot.lane.b32.xlu0 %v58, 15
    %v243 = vpop.permute.xlu0 %242
    %244 = vrot.lane.b32.xlu0 %v62, 15
    %v245 = vpop.permute.xlu0 %244
    %246 = vrot.lane.b32.xlu0 %v66, 15
    %v247 = vpop.permute.xlu0 %246
    %vm248 = vcmp.lt.s32.totalorder %v104, 15
    %v249 = vsel %vm248, %v237, %v243
    %v250 = vsel %vm248, %v239, %v245
    %v251 = vsel %vm248, %v241, %v247
    %v252 = vsel %vm248, %v231, %v237
    %v253 = vsel %vm248, %v233, %v239
    %v254 = vsel %vm248, %v235, %v241
    %v255 = vsel %vm248, %v225, %v231
    %v256 = vsel %vm248, %v227, %v233
    %v257 = vsel %vm248, %v229, %v235
    %v258 = vsel %vm248, %v243, %v225
    %v259 = vsel %vm248, %v245, %v227
    %v260 = vsel %vm248, %v247, %v229
    %s261 = scalar_lea.vmem %s4, 8
    %v262 = vld [vmem:[%s261] sm:$0xf]
    %v264 = vperm.slane %v262, 0
    %v265 = vperm.slane %v262, 1
    %v266 = vperm.slane %v262, 2
    %v267 = vperm.slane %v262, 3
    %v272 = vmul.f32 %v258, %v264
    %v273 = vmul.f32 %v255, %v265
    %v274 = vmul.f32 %v252, %v266
    %v275 = vmul.f32 %v249, %v267
    %v276 = vmul.f32 %v259, %v264
    %v277 = vmul.f32 %v256, %v265
    %v278 = vmul.f32 %v253, %v266
    %v279 = vmul.f32 %v250, %v267
    %v280 = vmul.f32 %v260, %v264
    %v281 = vmul.f32 %v257, %v265
    %v282 = vmul.f32 %v254, %v266
    %v283 = vmul.f32 %v251, %v267
    %284 = vst [vmem:[#allocation2 + $0xc0] sm:$0xff] %v272
    %285 = vst [vmem:[#allocation2 + $0xc8] sm:$0xff] %v273
    %286 = vst [vmem:[#allocation2 + $0xd0] sm:$0xff] %v274
    %287 = vst [vmem:[#allocation2 + $0xd8] sm:$0xff] %v275
    %288 = vst [vmem:[#allocation2 + $0xe0] sm:$0xff] %v276
    %289 = vst [vmem:[#allocation2 + $0xe8] sm:$0xff] %v277
    %290 = vst [vmem:[#allocation2 + $0xf0] sm:$0xff] %v278
    %291 = vst [vmem:[#allocation2 + $0xf8] sm:$0xff] %v279
    %292 = vst [vmem:[#allocation2 + $0x100] sm:$0xff] %v280
    %293 = vst [vmem:[#allocation2 + $0x108] sm:$0xff] %v281
    %294 = vst [vmem:[#allocation2 + $0x110] sm:$0xff] %v282
    %295 = vst [vmem:[#allocation2 + $0x118] sm:$0xff] %v283
    %296 = vrot.lane.b32.xlu0 %v55, 1
    %v297 = vpop.permute.xlu0 %296
    %298 = vrot.lane.b32.xlu0 %v59, 1
    %v299 = vpop.permute.xlu0 %298
    %300 = vrot.lane.b32.xlu0 %v63, 1
    %v301 = vpop.permute.xlu0 %300
    %302 = vrot.lane.b32.xlu0 %v56, 1
    %v303 = vpop.permute.xlu0 %302
    %304 = vrot.lane.b32.xlu0 %v60, 1
    %v305 = vpop.permute.xlu0 %304
    %306 = vrot.lane.b32.xlu0 %v64, 1
    %v307 = vpop.permute.xlu0 %306
    %308 = vrot.lane.b32.xlu0 %v57, 1
    %v309 = vpop.permute.xlu0 %308
    %310 = vrot.lane.b32.xlu0 %v61, 1
    %v311 = vpop.permute.xlu0 %310
    %312 = vrot.lane.b32.xlu0 %v65, 1
    %v313 = vpop.permute.xlu0 %312
    %314 = vrot.lane.b32.xlu0 %v58, 1
    %v315 = vpop.permute.xlu0 %314
    %316 = vrot.lane.b32.xlu0 %v62, 1
    %v317 = vpop.permute.xlu0 %316
    %318 = vrot.lane.b32.xlu0 %v66, 1
    %v319 = vpop.permute.xlu0 %318
    %vm320 = vcmp.lt.s32.totalorder %v104, 1
    %v321 = vsel %vm320, %v309, %v315
    %v322 = vsel %vm320, %v311, %v317
    %v323 = vsel %vm320, %v313, %v319
    %v324 = vsel %vm320, %v303, %v309
    %v325 = vsel %vm320, %v305, %v311
    %v326 = vsel %vm320, %v307, %v313
    %v327 = vsel %vm320, %v297, %v303
    %v328 = vsel %vm320, %v299, %v305
    %v329 = vsel %vm320, %v301, %v307
    %v330 = vsel %vm320, %v315, %v297
    %v331 = vsel %vm320, %v317, %v299
    %v332 = vsel %vm320, %v319, %v301
    %s333 = scalar_lea.vmem %s4, 12
    %v334 = vld [vmem:[%s333] sm:$0xf]
    %v336 = vperm.slane %v334, 0
    %v337 = vperm.slane %v334, 1
    %v338 = vperm.slane %v334, 2
    %v339 = vperm.slane %v334, 3
    %v344 = vmul.f32 %v330, %v336
    %v345 = vmul.f32 %v327, %v337
    %v346 = vmul.f32 %v324, %v338
    %v347 = vmul.f32 %v321, %v339
    %v348 = vmul.f32 %v331, %v336
    %v349 = vmul.f32 %v328, %v337
    %v350 = vmul.f32 %v325, %v338
    %v351 = vmul.f32 %v322, %v339
    %v352 = vmul.f32 %v332, %v336
    %v353 = vmul.f32 %v329, %v337
    %v354 = vmul.f32 %v326, %v338
    %v355 = vmul.f32 %v323, %v339
    %356 = vst [vmem:[#allocation2 + $0x120] sm:$0xff] %v344
    %357 = vst [vmem:[#allocation2 + $0x128] sm:$0xff] %v345
    %358 = vst [vmem:[#allocation2 + $0x130] sm:$0xff] %v346
    %359 = vst [vmem:[#allocation2 + $0x138] sm:$0xff] %v347
    %360 = vst [vmem:[#allocation2 + $0x140] sm:$0xff] %v348
    %361 = vst [vmem:[#allocation2 + $0x148] sm:$0xff] %v349
    %362 = vst [vmem:[#allocation2 + $0x150] sm:$0xff] %v350
    %363 = vst [vmem:[#allocation2 + $0x158] sm:$0xff] %v351
    %364 = vst [vmem:[#allocation2 + $0x160] sm:$0xff] %v352
    %365 = vst [vmem:[#allocation2 + $0x168] sm:$0xff] %v353
    %366 = vst [vmem:[#allocation2 + $0x170] sm:$0xff] %v354
    %367 = vst [vmem:[#allocation2 + $0x178] sm:$0xff] %v355
    %368 = vst [vmem:[#allocation2 + $0x180] sm:$0xff] %v55
    %369 = vst [vmem:[#allocation2 + $0x188] sm:$0xff] %v56
    %370 = vst [vmem:[#allocation2 + $0x190] sm:$0xff] %v57
    %371 = vst [vmem:[#allocation2 + $0x198] sm:$0xff] %v58
    %372 = vst [vmem:[#allocation2 + $0x1a0] sm:$0xff] %v59
    %373 = vst [vmem:[#allocation2 + $0x1a8] sm:$0xff] %v60
    %374 = vst [vmem:[#allocation2 + $0x1b0] sm:$0xff] %v61
    %375 = vst [vmem:[#allocation2 + $0x1b8] sm:$0xff] %v62
    %376 = vst [vmem:[#allocation2 + $0x1c0] sm:$0xff] %v63
    %377 = vst [vmem:[#allocation2 + $0x1c8] sm:$0xff] %v64
    %378 = vst [vmem:[#allocation2 + $0x1d0] sm:$0xff] %v65
    %379 = vst [vmem:[#allocation2 + $0x1d8] sm:$0xff] %v66
    %380 = vrot.lane.b32.xlu0 %v55, 127
    %v381 = vpop.permute.xlu0 %380
    %382 = vrot.lane.b32.xlu0 %v59, 127
    %v383 = vpop.permute.xlu0 %382
    %384 = vrot.lane.b32.xlu0 %v63, 127
    %v385 = vpop.permute.xlu0 %384
    %386 = vrot.lane.b32.xlu0 %v56, 127
    %v387 = vpop.permute.xlu0 %386
    %388 = vrot.lane.b32.xlu0 %v60, 127
    %v389 = vpop.permute.xlu0 %388
    %390 = vrot.lane.b32.xlu0 %v64, 127
    %v391 = vpop.permute.xlu0 %390
    %392 = vrot.lane.b32.xlu0 %v57, 127
    %v393 = vpop.permute.xlu0 %392
    %394 = vrot.lane.b32.xlu0 %v61, 127
    %v395 = vpop.permute.xlu0 %394
    %396 = vrot.lane.b32.xlu0 %v65, 127
    %v397 = vpop.permute.xlu0 %396
    %398 = vrot.lane.b32.xlu0 %v58, 127
    %v399 = vpop.permute.xlu0 %398
    %400 = vrot.lane.b32.xlu0 %v62, 127
    %v401 = vpop.permute.xlu0 %400
    %402 = vrot.lane.b32.xlu0 %v66, 127
    %v403 = vpop.permute.xlu0 %402
    %vm404 = vcmp.lt.s32.totalorder %v104, 127
    %v405 = vsel %vm404, %v393, %v399
    %v406 = vsel %vm404, %v395, %v401
    %v407 = vsel %vm404, %v397, %v403
    %v408 = vsel %vm404, %v387, %v393
    %v409 = vsel %vm404, %v389, %v395
    %v410 = vsel %vm404, %v391, %v397
    %v411 = vsel %vm404, %v381, %v387
    %v412 = vsel %vm404, %v383, %v389
    %v413 = vsel %vm404, %v385, %v391
    %v414 = vsel %vm404, %v399, %v381
    %v415 = vsel %vm404, %v401, %v383
    %v416 = vsel %vm404, %v403, %v385
    %s417 = scalar_lea.vmem %s4, 20
    %v418 = vld [vmem:[%s417] sm:$0xf]
    %v420 = vperm.slane %v418, 0
    %v421 = vperm.slane %v418, 1
    %v422 = vperm.slane %v418, 2
    %v423 = vperm.slane %v418, 3
    %v428 = vmul.f32 %v411, %v420
    %v429 = vmul.f32 %v408, %v421
    %v430 = vmul.f32 %v405, %v422
    %v431 = vmul.f32 %v414, %v423
    %v432 = vmul.f32 %v412, %v420
    %v433 = vmul.f32 %v409, %v421
    %v434 = vmul.f32 %v406, %v422
    %v435 = vmul.f32 %v415, %v423
    %v436 = vmul.f32 %v413, %v420
    %v437 = vmul.f32 %v410, %v421
    %v438 = vmul.f32 %v407, %v422
    %v439 = vmul.f32 %v416, %v423
    %440 = vst [vmem:[#allocation2 + $0x1e0] sm:$0xff] %v428
    %441 = vst [vmem:[#allocation2 + $0x1e8] sm:$0xff] %v429
    %442 = vst [vmem:[#allocation2 + $0x1f0] sm:$0xff] %v430
    %443 = vst [vmem:[#allocation2 + $0x1f8] sm:$0xff] %v431
    %444 = vst [vmem:[#allocation2 + $0x200] sm:$0xff] %v432
    %445 = vst [vmem:[#allocation2 + $0x208] sm:$0xff] %v433
    %446 = vst [vmem:[#allocation2 + $0x210] sm:$0xff] %v434
    %447 = vst [vmem:[#allocation2 + $0x218] sm:$0xff] %v435
    %448 = vst [vmem:[#allocation2 + $0x220] sm:$0xff] %v436
    %449 = vst [vmem:[#allocation2 + $0x228] sm:$0xff] %v437
    %450 = vst [vmem:[#allocation2 + $0x230] sm:$0xff] %v438
    %451 = vst [vmem:[#allocation2 + $0x238] sm:$0xff] %v439
    %452 = vrot.lane.b32.xlu0 %v55, 113
    %v453 = vpop.permute.xlu0 %452
    %454 = vrot.lane.b32.xlu0 %v59, 113
    %v455 = vpop.permute.xlu0 %454
    %456 = vrot.lane.b32.xlu0 %v63, 113
    %v457 = vpop.permute.xlu0 %456
    %458 = vrot.lane.b32.xlu0 %v56, 113
    %v459 = vpop.permute.xlu0 %458
    %460 = vrot.lane.b32.xlu0 %v60, 113
    %v461 = vpop.permute.xlu0 %460
    %462 = vrot.lane.b32.xlu0 %v64, 113
    %v463 = vpop.permute.xlu0 %462
    %464 = vrot.lane.b32.xlu0 %v57, 113
    %v465 = vpop.permute.xlu0 %464
    %466 = vrot.lane.b32.xlu0 %v61, 113
    %v467 = vpop.permute.xlu0 %466
    %468 = vrot.lane.b32.xlu0 %v65, 113
    %v469 = vpop.permute.xlu0 %468
    %470 = vrot.lane.b32.xlu0 %v58, 113
    %v471 = vpop.permute.xlu0 %470
    %472 = vrot.lane.b32.xlu0 %v62, 113
    %v473 = vpop.permute.xlu0 %472
    %474 = vrot.lane.b32.xlu0 %v66, 113
    %v475 = vpop.permute.xlu0 %474
    %vm476 = vcmp.lt.s32.totalorder %v104, 113
    %v477 = vsel %vm476, %v465, %v471
    %v478 = vsel %vm476, %v467, %v473
    %v479 = vsel %vm476, %v469, %v475
    %v480 = vsel %vm476, %v459, %v465
    %v481 = vsel %vm476, %v461, %v467
    %v482 = vsel %vm476, %v463, %v469
    %v483 = vsel %vm476, %v453, %v459
    %v484 = vsel %vm476, %v455, %v461
    %v485 = vsel %vm476, %v457, %v463
    %v486 = vsel %vm476, %v471, %v453
    %v487 = vsel %vm476, %v473, %v455
    %v488 = vsel %vm476, %v475, %v457
    %s489 = scalar_lea.vmem %s4, 24
    %v490 = vld [vmem:[%s489] sm:$0xf]
    %v492 = vperm.slane %v490, 0
    %v493 = vperm.slane %v490, 1
    %v494 = vperm.slane %v490, 2
    %v495 = vperm.slane %v490, 3
    %v500 = vmul.f32 %v483, %v492
    %v501 = vmul.f32 %v480, %v493
    %v502 = vmul.f32 %v477, %v494
    %v503 = vmul.f32 %v486, %v495
    %v504 = vmul.f32 %v484, %v492
    %v505 = vmul.f32 %v481, %v493
    %v506 = vmul.f32 %v478, %v494
    %v507 = vmul.f32 %v487, %v495
    %v508 = vmul.f32 %v485, %v492
    %v509 = vmul.f32 %v482, %v493
    %v510 = vmul.f32 %v479, %v494
    %v511 = vmul.f32 %v488, %v495
    %512 = vst [vmem:[#allocation2 + $0x240] sm:$0xff] %v500
    %513 = vst [vmem:[#allocation2 + $0x248] sm:$0xff] %v501
    %514 = vst [vmem:[#allocation2 + $0x250] sm:$0xff] %v502
    %515 = vst [vmem:[#allocation2 + $0x258] sm:$0xff] %v503
    %516 = vst [vmem:[#allocation2 + $0x260] sm:$0xff] %v504
    %517 = vst [vmem:[#allocation2 + $0x268] sm:$0xff] %v505
    %518 = vst [vmem:[#allocation2 + $0x270] sm:$0xff] %v506
    %519 = vst [vmem:[#allocation2 + $0x278] sm:$0xff] %v507
    %520 = vst [vmem:[#allocation2 + $0x280] sm:$0xff] %v508
    %521 = vst [vmem:[#allocation2 + $0x288] sm:$0xff] %v509
    %522 = vst [vmem:[#allocation2 + $0x290] sm:$0xff] %v510
    %523 = vst [vmem:[#allocation2 + $0x298] sm:$0xff] %v511
    %524 = vrot.lane.b32.xlu0 %v55, 112
    %v525 = vpop.permute.xlu0 %524
    %526 = vrot.lane.b32.xlu0 %v59, 112
    %v527 = vpop.permute.xlu0 %526
    %528 = vrot.lane.b32.xlu0 %v63, 112
    %v529 = vpop.permute.xlu0 %528
    %530 = vrot.lane.b32.xlu0 %v56, 112
    %v531 = vpop.permute.xlu0 %530
    %532 = vrot.lane.b32.xlu0 %v60, 112
    %v533 = vpop.permute.xlu0 %532
    %534 = vrot.lane.b32.xlu0 %v64, 112
    %v535 = vpop.permute.xlu0 %534
    %536 = vrot.lane.b32.xlu0 %v57, 112
    %v537 = vpop.permute.xlu0 %536
    %538 = vrot.lane.b32.xlu0 %v61, 112
    %v539 = vpop.permute.xlu0 %538
    %540 = vrot.lane.b32.xlu0 %v65, 112
    %v541 = vpop.permute.xlu0 %540
    %542 = vrot.lane.b32.xlu0 %v58, 112
    %v543 = vpop.permute.xlu0 %542
    %544 = vrot.lane.b32.xlu0 %v62, 112
    %v545 = vpop.permute.xlu0 %544
    %546 = vrot.lane.b32.xlu0 %v66, 112
    %v547 = vpop.permute.xlu0 %546
    %vm548 = vcmp.lt.s32.totalorder %v104, 112
    %v549 = vsel %vm548, %v537, %v543
    %v550 = vsel %vm548, %v539, %v545
    %v551 = vsel %vm548, %v541, %v547
    %v552 = vsel %vm548, %v531, %v537
    %v553 = vsel %vm548, %v533, %v539
    %v554 = vsel %vm548, %v535, %v541
    %v555 = vsel %vm548, %v525, %v531
    %v556 = vsel %vm548, %v527, %v533
    %v557 = vsel %vm548, %v529, %v535
    %v558 = vsel %vm548, %v543, %v525
    %v559 = vsel %vm548, %v545, %v527
    %v560 = vsel %vm548, %v547, %v529
    %s561 = scalar_lea.vmem %s4, 28
    %v562 = vld [vmem:[%s561] sm:$0xf]
    %v564 = vperm.slane %v562, 0
    %v565 = vperm.slane %v562, 1
    %v566 = vperm.slane %v562, 2
    %v567 = vperm.slane %v562, 3
    %v572 = vmul.f32 %v555, %v564
    %v573 = vmul.f32 %v552, %v565
    %v574 = vmul.f32 %v549, %v566
    %v575 = vmul.f32 %v558, %v567
    %v576 = vmul.f32 %v556, %v564
    %v577 = vmul.f32 %v553, %v565
    %v578 = vmul.f32 %v550, %v566
    %v579 = vmul.f32 %v559, %v567
    %v580 = vmul.f32 %v557, %v564
    %v581 = vmul.f32 %v554, %v565
    %v582 = vmul.f32 %v551, %v566
    %v583 = vmul.f32 %v560, %v567
    %584 = vst [vmem:[#allocation2 + $0x2a0] sm:$0xff] %v572
    %585 = vst [vmem:[#allocation2 + $0x2a8] sm:$0xff] %v573
    %586 = vst [vmem:[#allocation2 + $0x2b0] sm:$0xff] %v574
    %587 = vst [vmem:[#allocation2 + $0x2b8] sm:$0xff] %v575
    %588 = vst [vmem:[#allocation2 + $0x2c0] sm:$0xff] %v576
    %589 = vst [vmem:[#allocation2 + $0x2c8] sm:$0xff] %v577
    %590 = vst [vmem:[#allocation2 + $0x2d0] sm:$0xff] %v578
    %591 = vst [vmem:[#allocation2 + $0x2d8] sm:$0xff] %v579
    %592 = vst [vmem:[#allocation2 + $0x2e0] sm:$0xff] %v580
    %593 = vst [vmem:[#allocation2 + $0x2e8] sm:$0xff] %v581
    %594 = vst [vmem:[#allocation2 + $0x2f0] sm:$0xff] %v582
    %595 = vst [vmem:[#allocation2 + $0x2f8] sm:$0xff] %v583
    %596 = vrot.lane.b32.xlu0 %v55, 111
    %v597 = vpop.permute.xlu0 %596
    %598 = vrot.lane.b32.xlu0 %v59, 111
    %v599 = vpop.permute.xlu0 %598
    %600 = vrot.lane.b32.xlu0 %v63, 111
    %v601 = vpop.permute.xlu0 %600
    %602 = vrot.lane.b32.xlu0 %v56, 111
    %v603 = vpop.permute.xlu0 %602
    %604 = vrot.lane.b32.xlu0 %v60, 111
    %v605 = vpop.permute.xlu0 %604
    %606 = vrot.lane.b32.xlu0 %v64, 111
    %v607 = vpop.permute.xlu0 %606
    %608 = vrot.lane.b32.xlu0 %v57, 111
    %v609 = vpop.permute.xlu0 %608
    %610 = vrot.lane.b32.xlu0 %v61, 111
    %v611 = vpop.permute.xlu0 %610
    %612 = vrot.lane.b32.xlu0 %v65, 111
    %v613 = vpop.permute.xlu0 %612
    %614 = vrot.lane.b32.xlu0 %v58, 111
    %v615 = vpop.permute.xlu0 %614
    %616 = vrot.lane.b32.xlu0 %v62, 111
    %v617 = vpop.permute.xlu0 %616
    %618 = vrot.lane.b32.xlu0 %v66, 111
    %v619 = vpop.permute.xlu0 %618
    %vm620 = vcmp.lt.s32.totalorder %v104, 111
    %v621 = vsel %vm620, %v609, %v615
    %v622 = vsel %vm620, %v611, %v617
    %v623 = vsel %vm620, %v613, %v619
    %v624 = vsel %vm620, %v603, %v609
    %v625 = vsel %vm620, %v605, %v611
    %v626 = vsel %vm620, %v607, %v613
    %v627 = vsel %vm620, %v597, %v603
    %v628 = vsel %vm620, %v599, %v605
    %v629 = vsel %vm620, %v601, %v607
    %v630 = vsel %vm620, %v615, %v597
    %v631 = vsel %vm620, %v617, %v599
    %v632 = vsel %vm620, %v619, %v601
    %s633 = scalar_lea.vmem %s4, 32
    %v634 = vld [vmem:[%s633] sm:$0xf]
    %v636 = vperm.slane %v634, 0
    %v637 = vperm.slane %v634, 1
    %v638 = vperm.slane %v634, 2
    %v639 = vperm.slane %v634, 3
    %v644 = vmul.f32 %v627, %v636
    %v645 = vmul.f32 %v624, %v637
    %v646 = vmul.f32 %v621, %v638
    %v647 = vmul.f32 %v630, %v639
    %v648 = vmul.f32 %v628, %v636
    %v649 = vmul.f32 %v625, %v637
    %v650 = vmul.f32 %v622, %v638
    %v651 = vmul.f32 %v631, %v639
    %v652 = vmul.f32 %v629, %v636
    %v653 = vmul.f32 %v626, %v637
    %v654 = vmul.f32 %v623, %v638
    %v655 = vmul.f32 %v632, %v639
    %656 = vst [vmem:[#allocation2 + $0x300] sm:$0xff] %v644
    %657 = vst [vmem:[#allocation2 + $0x308] sm:$0xff] %v645
    %658 = vst [vmem:[#allocation2 + $0x310] sm:$0xff] %v646
    %659 = vst [vmem:[#allocation2 + $0x318] sm:$0xff] %v647
    %660 = vst [vmem:[#allocation2 + $0x320] sm:$0xff] %v648
    %661 = vst [vmem:[#allocation2 + $0x328] sm:$0xff] %v649
    %662 = vst [vmem:[#allocation2 + $0x330] sm:$0xff] %v650
    %663 = vst [vmem:[#allocation2 + $0x338] sm:$0xff] %v651
    %664 = vst [vmem:[#allocation2 + $0x340] sm:$0xff] %v652
    %665 = vst [vmem:[#allocation2 + $0x348] sm:$0xff] %v653
    %666 = vst [vmem:[#allocation2 + $0x350] sm:$0xff] %v654
    %667 = vst [vmem:[#allocation2 + $0x358] sm:$0xff] %v655
    %v668 = vld [vmem:[%s5] sm:$0xff]
    %v669 = vld [vmem:[%s5 + $0x8] sm:$0xff]
    %v670 = vld [vmem:[%s5 + $0x10] sm:$0xff]
    %v671 = vld [vmem:[%s5 + $0x18] sm:$0xff]
    %v672 = vld [vmem:[%s5 + $0x20] sm:$0xff]
    %v673 = vld [vmem:[%s5 + $0x28] sm:$0xff]
    %v674 = vld [vmem:[#allocation2] sm:$0xff]
    %v675 = vld [vmem:[#allocation2 + $0x8] sm:$0xff]
    %v676 = vld [vmem:[#allocation2 + $0x10] sm:$0xff]
    %v677 = vld [vmem:[#allocation2 + $0x18] sm:$0xff]
    %v678 = vld [vmem:[#allocation2 + $0x20] sm:$0xff]
    %v679 = vld [vmem:[#allocation2 + $0x28] sm:$0xff]
    %v680 = vld [vmem:[#allocation2 + $0x30] sm:$0xff]
    %v681 = vld [vmem:[#allocation2 + $0x38] sm:$0xff]
    %v682 = vld [vmem:[#allocation2 + $0x40] sm:$0xff]
    %v683 = vld [vmem:[#allocation2 + $0x48] sm:$0xff]
    %v684 = vld [vmem:[#allocation2 + $0x50] sm:$0xff]
    %v685 = vld [vmem:[#allocation2 + $0x58] sm:$0xff]
    %v686 = vld [vmem:[#allocation2 + $0x60] sm:$0xff]
    %v687 = vld [vmem:[#allocation2 + $0x68] sm:$0xff]
    %v688 = vld [vmem:[#allocation2 + $0x70] sm:$0xff]
    %v689 = vld [vmem:[#allocation2 + $0x78] sm:$0xff]
    %v690 = vld [vmem:[#allocation2 + $0x80] sm:$0xff]
    %v691 = vld [vmem:[#allocation2 + $0x88] sm:$0xff]
    %v692 = vld [vmem:[#allocation2 + $0x90] sm:$0xff]
    %v693 = vld [vmem:[#allocation2 + $0x98] sm:$0xff]
    %v694 = vld [vmem:[#allocation2 + $0xa0] sm:$0xff]
    %v695 = vld [vmem:[#allocation2 + $0xa8] sm:$0xff]
    %v696 = vld [vmem:[#allocation2 + $0xb0] sm:$0xff]
    %v697 = vld [vmem:[#allocation2 + $0xb8] sm:$0xff]
    %v698 = vld [vmem:[#allocation2 + $0xc0] sm:$0xff]
    %v699 = vld [vmem:[#allocation2 + $0xc8] sm:$0xff]
    %v700 = vld [vmem:[#allocation2 + $0xd0] sm:$0xff]
    %v701 = vld [vmem:[#allocation2 + $0xd8] sm:$0xff]
    %v702 = vld [vmem:[#allocation2 + $0xe0] sm:$0xff]
    %v703 = vld [vmem:[#allocation2 + $0xe8] sm:$0xff]
    %v704 = vld [vmem:[#allocation2 + $0xf0] sm:$0xff]
    %v705 = vld [vmem:[#allocation2 + $0xf8] sm:$0xff]
    %v706 = vld [vmem:[#allocation2 + $0x100] sm:$0xff]
    %v707 = vld [vmem:[#allocation2 + $0x108] sm:$0xff]
    %v708 = vld [vmem:[#allocation2 + $0x110] sm:$0xff]
    %v709 = vld [vmem:[#allocation2 + $0x118] sm:$0xff]
    %v710 = vld [vmem:[#allocation2 + $0x120] sm:$0xff]
    %v711 = vld [vmem:[#allocation2 + $0x128] sm:$0xff]
    %v712 = vld [vmem:[#allocation2 + $0x130] sm:$0xff]
    %v713 = vld [vmem:[#allocation2 + $0x138] sm:$0xff]
    %v714 = vld [vmem:[#allocation2 + $0x140] sm:$0xff]
    %v715 = vld [vmem:[#allocation2 + $0x148] sm:$0xff]
    %v716 = vld [vmem:[#allocation2 + $0x150] sm:$0xff]
    %v717 = vld [vmem:[#allocation2 + $0x158] sm:$0xff]
    %v718 = vld [vmem:[#allocation2 + $0x160] sm:$0xff]
    %v719 = vld [vmem:[#allocation2 + $0x168] sm:$0xff]
    %v720 = vld [vmem:[#allocation2 + $0x170] sm:$0xff]
    %v721 = vld [vmem:[#allocation2 + $0x178] sm:$0xff]
    %v722 = vld [vmem:[#allocation2 + $0x180] sm:$0xff]
    %v723 = vld [vmem:[#allocation2 + $0x188] sm:$0xff]
    %v724 = vld [vmem:[#allocation2 + $0x190] sm:$0xff]
    %v725 = vld [vmem:[#allocation2 + $0x198] sm:$0xff]
    %v726 = vld [vmem:[#allocation2 + $0x1a0] sm:$0xff]
    %v727 = vld [vmem:[#allocation2 + $0x1a8] sm:$0xff]
    %v728 = vld [vmem:[#allocation2 + $0x1b0] sm:$0xff]
    %v729 = vld [vmem:[#allocation2 + $0x1b8] sm:$0xff]
    %v730 = vld [vmem:[#allocation2 + $0x1c0] sm:$0xff]
    %v731 = vld [vmem:[#allocation2 + $0x1c8] sm:$0xff]
    %v732 = vld [vmem:[#allocation2 + $0x1d0] sm:$0xff]
    %v733 = vld [vmem:[#allocation2 + $0x1d8] sm:$0xff]
    %v734 = vld [vmem:[#allocation2 + $0x1e0] sm:$0xff]
    %v735 = vld [vmem:[#allocation2 + $0x1e8] sm:$0xff]
    %v736 = vld [vmem:[#allocation2 + $0x1f0] sm:$0xff]
    %v737 = vld [vmem:[#allocation2 + $0x1f8] sm:$0xff]
    %v738 = vld [vmem:[#allocation2 + $0x200] sm:$0xff]
    %v739 = vld [vmem:[#allocation2 + $0x208] sm:$0xff]
    %v740 = vld [vmem:[#allocation2 + $0x210] sm:$0xff]
    %v741 = vld [vmem:[#allocation2 + $0x218] sm:$0xff]
    %v742 = vld [vmem:[#allocation2 + $0x220] sm:$0xff]
    %v743 = vld [vmem:[#allocation2 + $0x228] sm:$0xff]
    %v744 = vld [vmem:[#allocation2 + $0x230] sm:$0xff]
    %v745 = vld [vmem:[#allocation2 + $0x238] sm:$0xff]
    %v746 = vld [vmem:[#allocation2 + $0x240] sm:$0xff]
    %v747 = vld [vmem:[#allocation2 + $0x248] sm:$0xff]
    %v748 = vld [vmem:[#allocation2 + $0x250] sm:$0xff]
    %v749 = vld [vmem:[#allocation2 + $0x258] sm:$0xff]
    %v750 = vld [vmem:[#allocation2 + $0x260] sm:$0xff]
    %v751 = vld [vmem:[#allocation2 + $0x268] sm:$0xff]
    %v752 = vld [vmem:[#allocation2 + $0x270] sm:$0xff]
    %v753 = vld [vmem:[#allocation2 + $0x278] sm:$0xff]
    %v754 = vld [vmem:[#allocation2 + $0x280] sm:$0xff]
    %v755 = vld [vmem:[#allocation2 + $0x288] sm:$0xff]
    %v756 = vld [vmem:[#allocation2 + $0x290] sm:$0xff]
    %v757 = vld [vmem:[#allocation2 + $0x298] sm:$0xff]
    %v758 = vld [vmem:[#allocation2 + $0x2a0] sm:$0xff]
    %v759 = vld [vmem:[#allocation2 + $0x2a8] sm:$0xff]
    %v760 = vld [vmem:[#allocation2 + $0x2b0] sm:$0xff]
    %v761 = vld [vmem:[#allocation2 + $0x2b8] sm:$0xff]
    %v762 = vld [vmem:[#allocation2 + $0x2c0] sm:$0xff]
    %v763 = vld [vmem:[#allocation2 + $0x2c8] sm:$0xff]
    %v764 = vld [vmem:[#allocation2 + $0x2d0] sm:$0xff]
    %v765 = vld [vmem:[#allocation2 + $0x2d8] sm:$0xff]
    %v766 = vld [vmem:[#allocation2 + $0x2e0] sm:$0xff]
    %v767 = vld [vmem:[#allocation2 + $0x2e8] sm:$0xff]
    %v768 = vld [vmem:[#allocation2 + $0x2f0] sm:$0xff]
    %v769 = vld [vmem:[#allocation2 + $0x2f8] sm:$0xff]
    %v770 = vld [vmem:[#allocation2 + $0x300] sm:$0xff]
    %v771 = vld [vmem:[#allocation2 + $0x308] sm:$0xff]
    %v772 = vld [vmem:[#allocation2 + $0x310] sm:$0xff]
    %v773 = vld [vmem:[#allocation2 + $0x318] sm:$0xff]
    %v774 = vld [vmem:[#allocation2 + $0x320] sm:$0xff]
    %v775 = vld [vmem:[#allocation2 + $0x328] sm:$0xff]
    %v776 = vld [vmem:[#allocation2 + $0x330] sm:$0xff]
    %v777 = vld [vmem:[#allocation2 + $0x338] sm:$0xff]
    %v778 = vld [vmem:[#allocation2 + $0x340] sm:$0xff]
    %v779 = vld [vmem:[#allocation2 + $0x348] sm:$0xff]
    %v780 = vld [vmem:[#allocation2 + $0x350] sm:$0xff]
    %v781 = vld [vmem:[#allocation2 + $0x358] sm:$0xff]
    %vm782 = vcmask 719872
    %v784 = vsel %vm782, %v669, 0
    %v787 = vsel %vm782, %v671, 0
    %v790 = vsel %vm782, %v673, 0
    %792 = vmatpush.msra.mxu0 %v734
    %793 = vmatpush.msra.mxu0 %v730
    %794 = vmatpush.msra.mxu0 %v726
    %795 = vmatpush.msra.mxu0 %v722
    %796 = vmatpush.msra.mxu0 %v718
    %797 = vmatpush.msra.mxu0 %v714
    %798 = vmatpush.msra.mxu0 %v710
    %799 = vmatpush.msra.mxu0 %v706
    %800 = vmatpush.msra.mxu0 %v702
    %801 = vmatpush.msra.mxu0 %v698
    %802 = vmatpush.msra.mxu0 %v694
    %803 = vmatpush.msra.mxu0 %v690
    %804 = vmatpush.msra.mxu0 %v686
    %805 = vmatpush.msra.mxu0 %v682
    %806 = vmatpush.msra.mxu0 %v678
    %807 = vmatpush.msra.mxu0 %v674
    %808 = vmatmul.f32.gmra.mxu0 %v668
    %v809 = vpop.f32.mrf.mxu0
    %v810 = vadd.f32 0.0, %v809
    %811 = vmatmul.f32.gmra.mxu0 %v670
    %v812 = vpop.f32.mrf.mxu0
    %v813 = vadd.f32 0.0, %v812
    %814 = vmatmul.f32.gmra.mxu0 %v672
    %v815 = vpop.f32.mrf.mxu0
    %v816 = vadd.f32 0.0, %v815
    %817 = vdwg.mxu0
    %818 = vmatpush.msra.mxu0 0.0
    %819 = vmatpush.msra.mxu0 0.0
    %820 = vmatpush.msra.mxu0 0.0
    %821 = vmatpush.msra.mxu0 0.0
    %822 = vmatpush.msra.mxu0 0.0
    %823 = vmatpush.msra.mxu0 %v778
    %824 = vmatpush.msra.mxu0 %v774
    %825 = vmatpush.msra.mxu0 %v770
    %826 = vmatpush.msra.mxu0 %v766
    %827 = vmatpush.msra.mxu0 %v762
    %828 = vmatpush.msra.mxu0 %v758
    %829 = vmatpush.msra.mxu0 %v754
    %830 = vmatpush.msra.mxu0 %v750
    %831 = vmatpush.msra.mxu0 %v746
    %832 = vmatpush.msra.mxu0 %v742
    %833 = vmatpush.msra.mxu0 %v738
    %834 = vmatmul.f32.gmra.mxu0 %v784
    %v835 = vpop.f32.mrf.mxu0
    %v836 = vadd.f32 %v810, %v835
    %837 = vmatmul.f32.gmra.mxu0 %v787
    %v838 = vpop.f32.mrf.mxu0
    %v839 = vadd.f32 %v813, %v838
    %840 = vmatmul.f32.gmra.mxu0 %v790
    %v841 = vpop.f32.mrf.mxu0
    %v842 = vadd.f32 %v816, %v841
    %843 = vdwg.mxu0
    %844 = vmatpush.msra.mxu0 %v735
    %845 = vmatpush.msra.mxu0 %v731
    %846 = vmatpush.msra.mxu0 %v727
    %847 = vmatpush.msra.mxu0 %v723
    %848 = vmatpush.msra.mxu0 %v719
    %849 = vmatpush.msra.mxu0 %v715
    %850 = vmatpush.msra.mxu0 %v711
    %851 = vmatpush.msra.mxu0 %v707
    %852 = vmatpush.msra.mxu0 %v703
    %853 = vmatpush.msra.mxu0 %v699
    %854 = vmatpush.msra.mxu0 %v695
    %855 = vmatpush.msra.mxu0 %v691
    %856 = vmatpush.msra.mxu0 %v687
    %857 = vmatpush.msra.mxu0 %v683
    %858 = vmatpush.msra.mxu0 %v679
    %859 = vmatpush.msra.mxu0 %v675
    %860 = vmatmul.f32.gmra.mxu0 %v668
    %v861 = vpop.f32.mrf.mxu0
    %v862 = vadd.f32 0.0, %v861
    %863 = vmatmul.f32.gmra.mxu0 %v670
    %v864 = vpop.f32.mrf.mxu0
    %v865 = vadd.f32 0.0, %v864
    %866 = vmatmul.f32.gmra.mxu0 %v672
    %v867 = vpop.f32.mrf.mxu0
    %v868 = vadd.f32 0.0, %v867
    %869 = vdwg.mxu0
    %870 = vmatpush.msra.mxu0 0.0
    %871 = vmatpush.msra.mxu0 0.0
    %872 = vmatpush.msra.mxu0 0.0
    %873 = vmatpush.msra.mxu0 0.0
    %874 = vmatpush.msra.mxu0 0.0
    %875 = vmatpush.msra.mxu0 %v779
    %876 = vmatpush.msra.mxu0 %v775
    %877 = vmatpush.msra.mxu0 %v771
    %878 = vmatpush.msra.mxu0 %v767
    %879 = vmatpush.msra.mxu0 %v763
    %880 = vmatpush.msra.mxu0 %v759
    %881 = vmatpush.msra.mxu0 %v755
    %882 = vmatpush.msra.mxu0 %v751
    %883 = vmatpush.msra.mxu0 %v747
    %884 = vmatpush.msra.mxu0 %v743
    %885 = vmatpush.msra.mxu0 %v739
    %886 = vmatmul.f32.gmra.mxu0 %v784
    %v887 = vpop.f32.mrf.mxu0
    %v888 = vadd.f32 %v862, %v887
    %889 = vmatmul.f32.gmra.mxu0 %v787
    %v890 = vpop.f32.mrf.mxu0
    %v891 = vadd.f32 %v865, %v890
    %892 = vmatmul.f32.gmra.mxu0 %v790
    %v893 = vpop.f32.mrf.mxu0
    %v894 = vadd.f32 %v868, %v893
    %895 = vdwg.mxu0
    %896 = vmatpush.msra.mxu0 %v736
    %897 = vmatpush.msra.mxu0 %v732
    %898 = vmatpush.msra.mxu0 %v728
    %899 = vmatpush.msra.mxu0 %v724
    %900 = vmatpush.msra.mxu0 %v720
    %901 = vmatpush.msra.mxu0 %v716
    %902 = vmatpush.msra.mxu0 %v712
    %903 = vmatpush.msra.mxu0 %v708
    %904 = vmatpush.msra.mxu0 %v704
    %905 = vmatpush.msra.mxu0 %v700
    %906 = vmatpush.msra.mxu0 %v696
    %907 = vmatpush.msra.mxu0 %v692
    %908 = vmatpush.msra.mxu0 %v688
    %909 = vmatpush.msra.mxu0 %v684
    %910 = vmatpush.msra.mxu0 %v680
    %911 = vmatpush.msra.mxu0 %v676
    %912 = vmatmul.f32.gmra.mxu0 %v668
    %v913 = vpop.f32.mrf.mxu0
    %v914 = vadd.f32 0.0, %v913
    %915 = vmatmul.f32.gmra.mxu0 %v670
    %v916 = vpop.f32.mrf.mxu0
    %v917 = vadd.f32 0.0, %v916
    %918 = vmatmul.f32.gmra.mxu0 %v672
    %v919 = vpop.f32.mrf.mxu0
    %v920 = vadd.f32 0.0, %v919
    %921 = vdwg.mxu0
    %922 = vmatpush.msra.mxu0 0.0
    %923 = vmatpush.msra.mxu0 0.0
    %924 = vmatpush.msra.mxu0 0.0
    %925 = vmatpush.msra.mxu0 0.0
    %926 = vmatpush.msra.mxu0 0.0
    %927 = vmatpush.msra.mxu0 %v780
    %928 = vmatpush.msra.mxu0 %v776
    %929 = vmatpush.msra.mxu0 %v772
    %930 = vmatpush.msra.mxu0 %v768
    %931 = vmatpush.msra.mxu0 %v764
    %932 = vmatpush.msra.mxu0 %v760
    %933 = vmatpush.msra.mxu0 %v756
    %934 = vmatpush.msra.mxu0 %v752
    %935 = vmatpush.msra.mxu0 %v748
    %936 = vmatpush.msra.mxu0 %v744
    %937 = vmatpush.msra.mxu0 %v740
    %938 = vmatmul.f32.gmra.mxu0 %v784
    %v939 = vpop.f32.mrf.mxu0
    %v940 = vadd.f32 %v914, %v939
    %941 = vmatmul.f32.gmra.mxu0 %v787
    %v942 = vpop.f32.mrf.mxu0
    %v943 = vadd.f32 %v917, %v942
    %944 = vmatmul.f32.gmra.mxu0 %v790
    %v945 = vpop.f32.mrf.mxu0
    %v946 = vadd.f32 %v920, %v945
    %947 = vdwg.mxu0
    %948 = vmatpush.msra.mxu0 %v737
    %949 = vmatpush.msra.mxu0 %v733
    %950 = vmatpush.msra.mxu0 %v729
    %951 = vmatpush.msra.mxu0 %v725
    %952 = vmatpush.msra.mxu0 %v721
    %953 = vmatpush.msra.mxu0 %v717
    %954 = vmatpush.msra.mxu0 %v713
    %955 = vmatpush.msra.mxu0 %v709
    %956 = vmatpush.msra.mxu0 %v705
    %957 = vmatpush.msra.mxu0 %v701
    %958 = vmatpush.msra.mxu0 %v697
    %959 = vmatpush.msra.mxu0 %v693
    %960 = vmatpush.msra.mxu0 %v689
    %961 = vmatpush.msra.mxu0 %v685
    %962 = vmatpush.msra.mxu0 %v681
    %963 = vmatpush.msra.mxu0 %v677
    %964 = vmatmul.f32.gmra.mxu0 %v668
    %v965 = vpop.f32.mrf.mxu0
    %v966 = vadd.f32 0.0, %v965
    %967 = vmatmul.f32.gmra.mxu0 %v670
    %v968 = vpop.f32.mrf.mxu0
    %v969 = vadd.f32 0.0, %v968
    %970 = vmatmul.f32.gmra.mxu0 %v672
    %v971 = vpop.f32.mrf.mxu0
    %v972 = vadd.f32 0.0, %v971
    %973 = vdwg.mxu0
    %974 = vmatpush.msra.mxu0 0.0
    %975 = vmatpush.msra.mxu0 0.0
    %976 = vmatpush.msra.mxu0 0.0
    %977 = vmatpush.msra.mxu0 0.0
    %978 = vmatpush.msra.mxu0 0.0
    %979 = vmatpush.msra.mxu0 %v781
    %980 = vmatpush.msra.mxu0 %v777
    %981 = vmatpush.msra.mxu0 %v773
    %982 = vmatpush.msra.mxu0 %v769
    %983 = vmatpush.msra.mxu0 %v765
    %984 = vmatpush.msra.mxu0 %v761
    %985 = vmatpush.msra.mxu0 %v757
    %986 = vmatpush.msra.mxu0 %v753
    %987 = vmatpush.msra.mxu0 %v749
    %988 = vmatpush.msra.mxu0 %v745
    %989 = vmatpush.msra.mxu0 %v741
    %990 = vmatmul.f32.gmra.mxu0 %v784
    %v991 = vpop.f32.mrf.mxu0
    %v992 = vadd.f32 %v966, %v991
    %993 = vmatmul.f32.gmra.mxu0 %v787
    %v994 = vpop.f32.mrf.mxu0
    %v995 = vadd.f32 %v969, %v994
    %996 = vmatmul.f32.gmra.mxu0 %v790
    %v997 = vpop.f32.mrf.mxu0
    %v998 = vadd.f32 %v972, %v997
    %999 = vdwg.mxu0
    %v1000 = vmax.f32 %v836, 0.0
    %v1001 = vmax.f32 %v888, 0.0
    %v1002 = vmax.f32 %v940, 0.0
    %v1003 = vmax.f32 %v992, 0.0
    %v1004 = vmax.f32 %v839, 0.0
    %v1005 = vmax.f32 %v891, 0.0
    %v1006 = vmax.f32 %v943, 0.0
    %v1007 = vmax.f32 %v995, 0.0
    %v1008 = vmax.f32 %v842, 0.0
    %v1009 = vmax.f32 %v894, 0.0
    %v1010 = vmax.f32 %v946, 0.0
    %v1011 = vmax.f32 %v998, 0.0
    %1012 = vrot.lane.b32.xlu0 %v1000, 17
    %v1013 = vpop.permute.xlu0 %1012
    %1014 = vrot.lane.b32.xlu0 %v1004, 17
    %v1015 = vpop.permute.xlu0 %1014
    %1016 = vrot.lane.b32.xlu0 %v1008, 17
    %v1017 = vpop.permute.xlu0 %1016
    %1018 = vrot.lane.b32.xlu0 %v1001, 17
    %v1019 = vpop.permute.xlu0 %1018
    %1020 = vrot.lane.b32.xlu0 %v1005, 17
    %v1021 = vpop.permute.xlu0 %1020
    %1022 = vrot.lane.b32.xlu0 %v1009, 17
    %v1023 = vpop.permute.xlu0 %1022
    %1024 = vrot.lane.b32.xlu0 %v1002, 17
    %v1025 = vpop.permute.xlu0 %1024
    %1026 = vrot.lane.b32.xlu0 %v1006, 17
    %v1027 = vpop.permute.xlu0 %1026
    %1028 = vrot.lane.b32.xlu0 %v1010, 17
    %v1029 = vpop.permute.xlu0 %1028
    %1030 = vrot.lane.b32.xlu0 %v1003, 17
    %v1031 = vpop.permute.xlu0 %1030
    %1032 = vrot.lane.b32.xlu0 %v1007, 17
    %v1033 = vpop.permute.xlu0 %1032
    %1034 = vrot.lane.b32.xlu0 %v1011, 17
    %v1035 = vpop.permute.xlu0 %1034
    %v1036 = vsel %vm105, %v1025, %v1031
    %v1037 = vsel %vm105, %v1027, %v1033
    %v1038 = vsel %vm105, %v1029, %v1035
    %v1039 = vsel %vm105, %v1019, %v1025
    %v1040 = vsel %vm105, %v1021, %v1027
    %v1041 = vsel %vm105, %v1023, %v1029
    %v1042 = vsel %vm105, %v1013, %v1019
    %v1043 = vsel %vm105, %v1015, %v1021
    %v1044 = vsel %vm105, %v1017, %v1023
    %v1045 = vsel %vm105, %v1031, %v1013
    %v1046 = vsel %vm105, %v1033, %v1015
    %v1047 = vsel %vm105, %v1035, %v1017
    %v1048 = vld [vmem:[%s4] sm:$0xf]
    %v1050 = vperm.slane %v1048, 0
    %v1051 = vperm.slane %v1048, 1
    %v1052 = vperm.slane %v1048, 2
    %v1053 = vperm.slane %v1048, 3
    %v1058 = vmul.f32 %v1045, %v1050
    %v1059 = vmul.f32 %v1042, %v1051
    %v1060 = vmul.f32 %v1039, %v1052
    %v1061 = vmul.f32 %v1036, %v1053
    %v1062 = vmul.f32 %v1046, %v1050
    %v1063 = vmul.f32 %v1043, %v1051
    %v1064 = vmul.f32 %v1040, %v1052
    %v1065 = vmul.f32 %v1037, %v1053
    %v1066 = vmul.f32 %v1047, %v1050
    %v1067 = vmul.f32 %v1044, %v1051
    %v1068 = vmul.f32 %v1041, %v1052
    %v1069 = vmul.f32 %v1038, %v1053
    %1070 = vst [vmem:[#allocation2] sm:$0xff] %v1058
    %1071 = vst [vmem:[#allocation2 + $0x8] sm:$0xff] %v1059
    %1072 = vst [vmem:[#allocation2 + $0x10] sm:$0xff] %v1060
    %1073 = vst [vmem:[#allocation2 + $0x18] sm:$0xff] %v1061
    %1074 = vst [vmem:[#allocation2 + $0x20] sm:$0xff] %v1062
    %1075 = vst [vmem:[#allocation2 + $0x28] sm:$0xff] %v1063
    %1076 = vst [vmem:[#allocation2 + $0x30] sm:$0xff] %v1064
    %1077 = vst [vmem:[#allocation2 + $0x38] sm:$0xff] %v1065
    %1078 = vst [vmem:[#allocation2 + $0x40] sm:$0xff] %v1066
    %1079 = vst [vmem:[#allocation2 + $0x48] sm:$0xff] %v1067
    %1080 = vst [vmem:[#allocation2 + $0x50] sm:$0xff] %v1068
    %1081 = vst [vmem:[#allocation2 + $0x58] sm:$0xff] %v1069
    %1082 = vrot.lane.b32.xlu0 %v1000, 16
    %v1083 = vpop.permute.xlu0 %1082
    %1084 = vrot.lane.b32.xlu0 %v1004, 16
    %v1085 = vpop.permute.xlu0 %1084
    %1086 = vrot.lane.b32.xlu0 %v1008, 16
    %v1087 = vpop.permute.xlu0 %1086
    %1088 = vrot.lane.b32.xlu0 %v1001, 16
    %v1089 = vpop.permute.xlu0 %1088
    %1090 = vrot.lane.b32.xlu0 %v1005, 16
    %v1091 = vpop.permute.xlu0 %1090
    %1092 = vrot.lane.b32.xlu0 %v1009, 16
    %v1093 = vpop.permute.xlu0 %1092
    %1094 = vrot.lane.b32.xlu0 %v1002, 16
    %v1095 = vpop.permute.xlu0 %1094
    %1096 = vrot.lane.b32.xlu0 %v1006, 16
    %v1097 = vpop.permute.xlu0 %1096
    %1098 = vrot.lane.b32.xlu0 %v1010, 16
    %v1099 = vpop.permute.xlu0 %1098
    %1100 = vrot.lane.b32.xlu0 %v1003, 16
    %v1101 = vpop.permute.xlu0 %1100
    %1102 = vrot.lane.b32.xlu0 %v1007, 16
    %v1103 = vpop.permute.xlu0 %1102
    %1104 = vrot.lane.b32.xlu0 %v1011, 16
    %v1105 = vpop.permute.xlu0 %1104
    %v1106 = vsel %vm176, %v1095, %v1101
    %v1107 = vsel %vm176, %v1097, %v1103
    %v1108 = vsel %vm176, %v1099, %v1105
    %v1109 = vsel %vm176, %v1089, %v1095
    %v1110 = vsel %vm176, %v1091, %v1097
    %v1111 = vsel %vm176, %v1093, %v1099
    %v1112 = vsel %vm176, %v1083, %v1089
    %v1113 = vsel %vm176, %v1085, %v1091
    %v1114 = vsel %vm176, %v1087, %v1093
    %v1115 = vsel %vm176, %v1101, %v1083
    %v1116 = vsel %vm176, %v1103, %v1085
    %v1117 = vsel %vm176, %v1105, %v1087
    %v1118 = vld [vmem:[%s189] sm:$0xf]
    %v1120 = vperm.slane %v1118, 0
    %v1121 = vperm.slane %v1118, 1
    %v1122 = vperm.slane %v1118, 2
    %v1123 = vperm.slane %v1118, 3
    %v1128 = vmul.f32 %v1115, %v1120
    %v1129 = vmul.f32 %v1112, %v1121
    %v1130 = vmul.f32 %v1109, %v1122
    %v1131 = vmul.f32 %v1106, %v1123
    %v1132 = vmul.f32 %v1116, %v1120
    %v1133 = vmul.f32 %v1113, %v1121
    %v1134 = vmul.f32 %v1110, %v1122
    %v1135 = vmul.f32 %v1107, %v1123
    %v1136 = vmul.f32 %v1117, %v1120
    %v1137 = vmul.f32 %v1114, %v1121
    %v1138 = vmul.f32 %v1111, %v1122
    %v1139 = vmul.f32 %v1108, %v1123
    %1140 = vst [vmem:[#allocation2 + $0x60] sm:$0xff] %v1128
    %1141 = vst [vmem:[#allocation2 + $0x68] sm:$0xff] %v1129
    %1142 = vst [vmem:[#allocation2 + $0x70] sm:$0xff] %v1130
    %1143 = vst [vmem:[#allocation2 + $0x78] sm:$0xff] %v1131
    %1144 = vst [vmem:[#allocation2 + $0x80] sm:$0xff] %v1132
    %1145 = vst [vmem:[#allocation2 + $0x88] sm:$0xff] %v1133
    %1146 = vst [vmem:[#allocation2 + $0x90] sm:$0xff] %v1134
    %1147 = vst [vmem:[#allocation2 + $0x98] sm:$0xff] %v1135
    %1148 = vst [vmem:[#allocation2 + $0xa0] sm:$0xff] %v1136
    %1149 = vst [vmem:[#allocation2 + $0xa8] sm:$0xff] %v1137
    %1150 = vst [vmem:[#allocation2 + $0xb0] sm:$0xff] %v1138
    %1151 = vst [vmem:[#allocation2 + $0xb8] sm:$0xff] %v1139
    %1152 = vrot.lane.b32.xlu0 %v1000, 15
    %v1153 = vpop.permute.xlu0 %1152
    %1154 = vrot.lane.b32.xlu0 %v1004, 15
    %v1155 = vpop.permute.xlu0 %1154
    %1156 = vrot.lane.b32.xlu0 %v1008, 15
    %v1157 = vpop.permute.xlu0 %1156
    %1158 = vrot.lane.b32.xlu0 %v1001, 15
    %v1159 = vpop.permute.xlu0 %1158
    %1160 = vrot.lane.b32.xlu0 %v1005, 15
    %v1161 = vpop.permute.xlu0 %1160
    %1162 = vrot.lane.b32.xlu0 %v1009, 15
    %v1163 = vpop.permute.xlu0 %1162
    %1164 = vrot.lane.b32.xlu0 %v1002, 15
    %v1165 = vpop.permute.xlu0 %1164
    %1166 = vrot.lane.b32.xlu0 %v1006, 15
    %v1167 = vpop.permute.xlu0 %1166
    %1168 = vrot.lane.b32.xlu0 %v1010, 15
    %v1169 = vpop.permute.xlu0 %1168
    %1170 = vrot.lane.b32.xlu0 %v1003, 15
    %v1171 = vpop.permute.xlu0 %1170
    %1172 = vrot.lane.b32.xlu0 %v1007, 15
    %v1173 = vpop.permute.xlu0 %1172
    %1174 = vrot.lane.b32.xlu0 %v1011, 15
    %v1175 = vpop.permute.xlu0 %1174
    %v1176 = vsel %vm248, %v1165, %v1171
    %v1177 = vsel %vm248, %v1167, %v1173
    %v1178 = vsel %vm248, %v1169, %v1175
    %v1179 = vsel %vm248, %v1159, %v1165
    %v1180 = vsel %vm248, %v1161, %v1167
    %v1181 = vsel %vm248, %v1163, %v1169
    %v1182 = vsel %vm248, %v1153, %v1159
    %v1183 = vsel %vm248, %v1155, %v1161
    %v1184 = vsel %vm248, %v1157, %v1163
    %v1185 = vsel %vm248, %v1171, %v1153
    %v1186 = vsel %vm248, %v1173, %v1155
    %v1187 = vsel %vm248, %v1175, %v1157
    %v1188 = vld [vmem:[%s261] sm:$0xf]
    %v1190 = vperm.slane %v1188, 0
    %v1191 = vperm.slane %v1188, 1
    %v1192 = vperm.slane %v1188, 2
    %v1193 = vperm.slane %v1188, 3
    %v1198 = vmul.f32 %v1185, %v1190
    %v1199 = vmul.f32 %v1182, %v1191
    %v1200 = vmul.f32 %v1179, %v1192
    %v1201 = vmul.f32 %v1176, %v1193
    %v1202 = vmul.f32 %v1186, %v1190
    %v1203 = vmul.f32 %v1183, %v1191
    %v1204 = vmul.f32 %v1180, %v1192
    %v1205 = vmul.f32 %v1177, %v1193
    %v1206 = vmul.f32 %v1187, %v1190
    %v1207 = vmul.f32 %v1184, %v1191
    %v1208 = vmul.f32 %v1181, %v1192
    %v1209 = vmul.f32 %v1178, %v1193
    %1210 = vst [vmem:[#allocation2 + $0xc0] sm:$0xff] %v1198
    %1211 = vst [vmem:[#allocation2 + $0xc8] sm:$0xff] %v1199
    %1212 = vst [vmem:[#allocation2 + $0xd0] sm:$0xff] %v1200
    %1213 = vst [vmem:[#allocation2 + $0xd8] sm:$0xff] %v1201
    %1214 = vst [vmem:[#allocation2 + $0xe0] sm:$0xff] %v1202
    %1215 = vst [vmem:[#allocation2 + $0xe8] sm:$0xff] %v1203
    %1216 = vst [vmem:[#allocation2 + $0xf0] sm:$0xff] %v1204
    %1217 = vst [vmem:[#allocation2 + $0xf8] sm:$0xff] %v1205
    %1218 = vst [vmem:[#allocation2 + $0x100] sm:$0xff] %v1206
    %1219 = vst [vmem:[#allocation2 + $0x108] sm:$0xff] %v1207
    %1220 = vst [vmem:[#allocation2 + $0x110] sm:$0xff] %v1208
    %1221 = vst [vmem:[#allocation2 + $0x118] sm:$0xff] %v1209
    %1222 = vrot.lane.b32.xlu0 %v1000, 1
    %v1223 = vpop.permute.xlu0 %1222
    %1224 = vrot.lane.b32.xlu0 %v1004, 1
    %v1225 = vpop.permute.xlu0 %1224
    %1226 = vrot.lane.b32.xlu0 %v1008, 1
    %v1227 = vpop.permute.xlu0 %1226
    %1228 = vrot.lane.b32.xlu0 %v1001, 1
    %v1229 = vpop.permute.xlu0 %1228
    %1230 = vrot.lane.b32.xlu0 %v1005, 1
    %v1231 = vpop.permute.xlu0 %1230
    %1232 = vrot.lane.b32.xlu0 %v1009, 1
    %v1233 = vpop.permute.xlu0 %1232
    %1234 = vrot.lane.b32.xlu0 %v1002, 1
    %v1235 = vpop.permute.xlu0 %1234
    %1236 = vrot.lane.b32.xlu0 %v1006, 1
    %v1237 = vpop.permute.xlu0 %1236
    %1238 = vrot.lane.b32.xlu0 %v1010, 1
    %v1239 = vpop.permute.xlu0 %1238
    %1240 = vrot.lane.b32.xlu0 %v1003, 1
    %v1241 = vpop.permute.xlu0 %1240
    %1242 = vrot.lane.b32.xlu0 %v1007, 1
    %v1243 = vpop.permute.xlu0 %1242
    %1244 = vrot.lane.b32.xlu0 %v1011, 1
    %v1245 = vpop.permute.xlu0 %1244
    %v1246 = vsel %vm320, %v1235, %v1241
    %v1247 = vsel %vm320, %v1237, %v1243
    %v1248 = vsel %vm320, %v1239, %v1245
    %v1249 = vsel %vm320, %v1229, %v1235
    %v1250 = vsel %vm320, %v1231, %v1237
    %v1251 = vsel %vm320, %v1233, %v1239
    %v1252 = vsel %vm320, %v1223, %v1229
    %v1253 = vsel %vm320, %v1225, %v1231
    %v1254 = vsel %vm320, %v1227, %v1233
    %v1255 = vsel %vm320, %v1241, %v1223
    %v1256 = vsel %vm320, %v1243, %v1225
    %v1257 = vsel %vm320, %v1245, %v1227
    %v1258 = vld [vmem:[%s333] sm:$0xf]
    %v1260 = vperm.slane %v1258, 0
    %v1261 = vperm.slane %v1258, 1
    %v1262 = vperm.slane %v1258, 2
    %v1263 = vperm.slane %v1258, 3
    %v1268 = vmul.f32 %v1255, %v1260
    %v1269 = vmul.f32 %v1252, %v1261
    %v1270 = vmul.f32 %v1249, %v1262
    %v1271 = vmul.f32 %v1246, %v1263
    %v1272 = vmul.f32 %v1256, %v1260
    %v1273 = vmul.f32 %v1253, %v1261
    %v1274 = vmul.f32 %v1250, %v1262
    %v1275 = vmul.f32 %v1247, %v1263
    %v1276 = vmul.f32 %v1257, %v1260
    %v1277 = vmul.f32 %v1254, %v1261
    %v1278 = vmul.f32 %v1251, %v1262
    %v1279 = vmul.f32 %v1248, %v1263
    %1280 = vst [vmem:[#allocation2 + $0x120] sm:$0xff] %v1268
    %1281 = vst [vmem:[#allocation2 + $0x128] sm:$0xff] %v1269
    %1282 = vst [vmem:[#allocation2 + $0x130] sm:$0xff] %v1270
    %1283 = vst [vmem:[#allocation2 + $0x138] sm:$0xff] %v1271
    %1284 = vst [vmem:[#allocation2 + $0x140] sm:$0xff] %v1272
    %1285 = vst [vmem:[#allocation2 + $0x148] sm:$0xff] %v1273
    %1286 = vst [vmem:[#allocation2 + $0x150] sm:$0xff] %v1274
    %1287 = vst [vmem:[#allocation2 + $0x158] sm:$0xff] %v1275
    %1288 = vst [vmem:[#allocation2 + $0x160] sm:$0xff] %v1276
    %1289 = vst [vmem:[#allocation2 + $0x168] sm:$0xff] %v1277
    %1290 = vst [vmem:[#allocation2 + $0x170] sm:$0xff] %v1278
    %1291 = vst [vmem:[#allocation2 + $0x178] sm:$0xff] %v1279
    %1292 = vst [vmem:[#allocation2 + $0x180] sm:$0xff] %v1000
    %1293 = vst [vmem:[#allocation2 + $0x188] sm:$0xff] %v1001
    %1294 = vst [vmem:[#allocation2 + $0x190] sm:$0xff] %v1002
    %1295 = vst [vmem:[#allocation2 + $0x198] sm:$0xff] %v1003
    %1296 = vst [vmem:[#allocation2 + $0x1a0] sm:$0xff] %v1004
    %1297 = vst [vmem:[#allocation2 + $0x1a8] sm:$0xff] %v1005
    %1298 = vst [vmem:[#allocation2 + $0x1b0] sm:$0xff] %v1006
    %1299 = vst [vmem:[#allocation2 + $0x1b8] sm:$0xff] %v1007
    %1300 = vst [vmem:[#allocation2 + $0x1c0] sm:$0xff] %v1008
    %1301 = vst [vmem:[#allocation2 + $0x1c8] sm:$0xff] %v1009
    %1302 = vst [vmem:[#allocation2 + $0x1d0] sm:$0xff] %v1010
    %1303 = vst [vmem:[#allocation2 + $0x1d8] sm:$0xff] %v1011
    %1304 = vrot.lane.b32.xlu0 %v1000, 127
    %v1305 = vpop.permute.xlu0 %1304
    %1306 = vrot.lane.b32.xlu0 %v1004, 127
    %v1307 = vpop.permute.xlu0 %1306
    %1308 = vrot.lane.b32.xlu0 %v1008, 127
    %v1309 = vpop.permute.xlu0 %1308
    %1310 = vrot.lane.b32.xlu0 %v1001, 127
    %v1311 = vpop.permute.xlu0 %1310
    %1312 = vrot.lane.b32.xlu0 %v1005, 127
    %v1313 = vpop.permute.xlu0 %1312
    %1314 = vrot.lane.b32.xlu0 %v1009, 127
    %v1315 = vpop.permute.xlu0 %1314
    %1316 = vrot.lane.b32.xlu0 %v1002, 127
    %v1317 = vpop.permute.xlu0 %1316
    %1318 = vrot.lane.b32.xlu0 %v1006, 127
    %v1319 = vpop.permute.xlu0 %1318
    %1320 = vrot.lane.b32.xlu0 %v1010, 127
    %v1321 = vpop.permute.xlu0 %1320
    %1322 = vrot.lane.b32.xlu0 %v1003, 127
    %v1323 = vpop.permute.xlu0 %1322
    %1324 = vrot.lane.b32.xlu0 %v1007, 127
    %v1325 = vpop.permute.xlu0 %1324
    %1326 = vrot.lane.b32.xlu0 %v1011, 127
    %v1327 = vpop.permute.xlu0 %1326
    %v1328 = vsel %vm404, %v1317, %v1323
    %v1329 = vsel %vm404, %v1319, %v1325
    %v1330 = vsel %vm404, %v1321, %v1327
    %v1331 = vsel %vm404, %v1311, %v1317
    %v1332 = vsel %vm404, %v1313, %v1319
    %v1333 = vsel %vm404, %v1315, %v1321
    %v1334 = vsel %vm404, %v1305, %v1311
    %v1335 = vsel %vm404, %v1307, %v1313
    %v1336 = vsel %vm404, %v1309, %v1315
    %v1337 = vsel %vm404, %v1323, %v1305
    %v1338 = vsel %vm404, %v1325, %v1307
    %v1339 = vsel %vm404, %v1327, %v1309
    %v1340 = vld [vmem:[%s417] sm:$0xf]
    %v1342 = vperm.slane %v1340, 0
    %v1343 = vperm.slane %v1340, 1
    %v1344 = vperm.slane %v1340, 2
    %v1345 = vperm.slane %v1340, 3
    %v1350 = vmul.f32 %v1334, %v1342
    %v1351 = vmul.f32 %v1331, %v1343
    %v1352 = vmul.f32 %v1328, %v1344
    %v1353 = vmul.f32 %v1337, %v1345
    %v1354 = vmul.f32 %v1335, %v1342
    %v1355 = vmul.f32 %v1332, %v1343
    %v1356 = vmul.f32 %v1329, %v1344
    %v1357 = vmul.f32 %v1338, %v1345
    %v1358 = vmul.f32 %v1336, %v1342
    %v1359 = vmul.f32 %v1333, %v1343
    %v1360 = vmul.f32 %v1330, %v1344
    %v1361 = vmul.f32 %v1339, %v1345
    %1362 = vst [vmem:[#allocation2 + $0x1e0] sm:$0xff] %v1350
    %1363 = vst [vmem:[#allocation2 + $0x1e8] sm:$0xff] %v1351
    %1364 = vst [vmem:[#allocation2 + $0x1f0] sm:$0xff] %v1352
    %1365 = vst [vmem:[#allocation2 + $0x1f8] sm:$0xff] %v1353
    %1366 = vst [vmem:[#allocation2 + $0x200] sm:$0xff] %v1354
    %1367 = vst [vmem:[#allocation2 + $0x208] sm:$0xff] %v1355
    %1368 = vst [vmem:[#allocation2 + $0x210] sm:$0xff] %v1356
    %1369 = vst [vmem:[#allocation2 + $0x218] sm:$0xff] %v1357
    %1370 = vst [vmem:[#allocation2 + $0x220] sm:$0xff] %v1358
    %1371 = vst [vmem:[#allocation2 + $0x228] sm:$0xff] %v1359
    %1372 = vst [vmem:[#allocation2 + $0x230] sm:$0xff] %v1360
    %1373 = vst [vmem:[#allocation2 + $0x238] sm:$0xff] %v1361
    %1374 = vrot.lane.b32.xlu0 %v1000, 113
    %v1375 = vpop.permute.xlu0 %1374
    %1376 = vrot.lane.b32.xlu0 %v1004, 113
    %v1377 = vpop.permute.xlu0 %1376
    %1378 = vrot.lane.b32.xlu0 %v1008, 113
    %v1379 = vpop.permute.xlu0 %1378
    %1380 = vrot.lane.b32.xlu0 %v1001, 113
    %v1381 = vpop.permute.xlu0 %1380
    %1382 = vrot.lane.b32.xlu0 %v1005, 113
    %v1383 = vpop.permute.xlu0 %1382
    %1384 = vrot.lane.b32.xlu0 %v1009, 113
    %v1385 = vpop.permute.xlu0 %1384
    %1386 = vrot.lane.b32.xlu0 %v1002, 113
    %v1387 = vpop.permute.xlu0 %1386
    %1388 = vrot.lane.b32.xlu0 %v1006, 113
    %v1389 = vpop.permute.xlu0 %1388
    %1390 = vrot.lane.b32.xlu0 %v1010, 113
    %v1391 = vpop.permute.xlu0 %1390
    %1392 = vrot.lane.b32.xlu0 %v1003, 113
    %v1393 = vpop.permute.xlu0 %1392
    %1394 = vrot.lane.b32.xlu0 %v1007, 113
    %v1395 = vpop.permute.xlu0 %1394
    %1396 = vrot.lane.b32.xlu0 %v1011, 113
    %v1397 = vpop.permute.xlu0 %1396
    %v1398 = vsel %vm476, %v1387, %v1393
    %v1399 = vsel %vm476, %v1389, %v1395
    %v1400 = vsel %vm476, %v1391, %v1397
    %v1401 = vsel %vm476, %v1381, %v1387
    %v1402 = vsel %vm476, %v1383, %v1389
    %v1403 = vsel %vm476, %v1385, %v1391
    %v1404 = vsel %vm476, %v1375, %v1381
    %v1405 = vsel %vm476, %v1377, %v1383
    %v1406 = vsel %vm476, %v1379, %v1385
    %v1407 = vsel %vm476, %v1393, %v1375
    %v1408 = vsel %vm476, %v1395, %v1377
    %v1409 = vsel %vm476, %v1397, %v1379
    %v1410 = vld [vmem:[%s489] sm:$0xf]
    %v1412 = vperm.slane %v1410, 0
    %v1413 = vperm.slane %v1410, 1
    %v1414 = vperm.slane %v1410, 2
    %v1415 = vperm.slane %v1410, 3
    %v1420 = vmul.f32 %v1404, %v1412
    %v1421 = vmul.f32 %v1401, %v1413
    %v1422 = vmul.f32 %v1398, %v1414
    %v1423 = vmul.f32 %v1407, %v1415
    %v1424 = vmul.f32 %v1405, %v1412
    %v1425 = vmul.f32 %v1402, %v1413
    %v1426 = vmul.f32 %v1399, %v1414
    %v1427 = vmul.f32 %v1408, %v1415
    %v1428 = vmul.f32 %v1406, %v1412
    %v1429 = vmul.f32 %v1403, %v1413
    %v1430 = vmul.f32 %v1400, %v1414
    %v1431 = vmul.f32 %v1409, %v1415
    %1432 = vst [vmem:[#allocation2 + $0x240] sm:$0xff] %v1420
    %1433 = vst [vmem:[#allocation2 + $0x248] sm:$0xff] %v1421
    %1434 = vst [vmem:[#allocation2 + $0x250] sm:$0xff] %v1422
    %1435 = vst [vmem:[#allocation2 + $0x258] sm:$0xff] %v1423
    %1436 = vst [vmem:[#allocation2 + $0x260] sm:$0xff] %v1424
    %1437 = vst [vmem:[#allocation2 + $0x268] sm:$0xff] %v1425
    %1438 = vst [vmem:[#allocation2 + $0x270] sm:$0xff] %v1426
    %1439 = vst [vmem:[#allocation2 + $0x278] sm:$0xff] %v1427
    %1440 = vst [vmem:[#allocation2 + $0x280] sm:$0xff] %v1428
    %1441 = vst [vmem:[#allocation2 + $0x288] sm:$0xff] %v1429
    %1442 = vst [vmem:[#allocation2 + $0x290] sm:$0xff] %v1430
    %1443 = vst [vmem:[#allocation2 + $0x298] sm:$0xff] %v1431
    %1444 = vrot.lane.b32.xlu0 %v1000, 112
    %v1445 = vpop.permute.xlu0 %1444
    %1446 = vrot.lane.b32.xlu0 %v1004, 112
    %v1447 = vpop.permute.xlu0 %1446
    %1448 = vrot.lane.b32.xlu0 %v1008, 112
    %v1449 = vpop.permute.xlu0 %1448
    %1450 = vrot.lane.b32.xlu0 %v1001, 112
    %v1451 = vpop.permute.xlu0 %1450
    %1452 = vrot.lane.b32.xlu0 %v1005, 112
    %v1453 = vpop.permute.xlu0 %1452
    %1454 = vrot.lane.b32.xlu0 %v1009, 112
    %v1455 = vpop.permute.xlu0 %1454
    %1456 = vrot.lane.b32.xlu0 %v1002, 112
    %v1457 = vpop.permute.xlu0 %1456
    %1458 = vrot.lane.b32.xlu0 %v1006, 112
    %v1459 = vpop.permute.xlu0 %1458
    %1460 = vrot.lane.b32.xlu0 %v1010, 112
    %v1461 = vpop.permute.xlu0 %1460
    %1462 = vrot.lane.b32.xlu0 %v1003, 112
    %v1463 = vpop.permute.xlu0 %1462
    %1464 = vrot.lane.b32.xlu0 %v1007, 112
    %v1465 = vpop.permute.xlu0 %1464
    %1466 = vrot.lane.b32.xlu0 %v1011, 112
    %v1467 = vpop.permute.xlu0 %1466
    %v1468 = vsel %vm548, %v1457, %v1463
    %v1469 = vsel %vm548, %v1459, %v1465
    %v1470 = vsel %vm548, %v1461, %v1467
    %v1471 = vsel %vm548, %v1451, %v1457
    %v1472 = vsel %vm548, %v1453, %v1459
    %v1473 = vsel %vm548, %v1455, %v1461
    %v1474 = vsel %vm548, %v1445, %v1451
    %v1475 = vsel %vm548, %v1447, %v1453
    %v1476 = vsel %vm548, %v1449, %v1455
    %v1477 = vsel %vm548, %v1463, %v1445
    %v1478 = vsel %vm548, %v1465, %v1447
    %v1479 = vsel %vm548, %v1467, %v1449
    %v1480 = vld [vmem:[%s561] sm:$0xf]
    %v1482 = vperm.slane %v1480, 0
    %v1483 = vperm.slane %v1480, 1
    %v1484 = vperm.slane %v1480, 2
    %v1485 = vperm.slane %v1480, 3
    %v1490 = vmul.f32 %v1474, %v1482
    %v1491 = vmul.f32 %v1471, %v1483
    %v1492 = vmul.f32 %v1468, %v1484
    %v1493 = vmul.f32 %v1477, %v1485
    %v1494 = vmul.f32 %v1475, %v1482
    %v1495 = vmul.f32 %v1472, %v1483
    %v1496 = vmul.f32 %v1469, %v1484
    %v1497 = vmul.f32 %v1478, %v1485
    %v1498 = vmul.f32 %v1476, %v1482
    %v1499 = vmul.f32 %v1473, %v1483
    %v1500 = vmul.f32 %v1470, %v1484
    %v1501 = vmul.f32 %v1479, %v1485
    %1502 = vst [vmem:[#allocation2 + $0x2a0] sm:$0xff] %v1490
    %1503 = vst [vmem:[#allocation2 + $0x2a8] sm:$0xff] %v1491
    %1504 = vst [vmem:[#allocation2 + $0x2b0] sm:$0xff] %v1492
    %1505 = vst [vmem:[#allocation2 + $0x2b8] sm:$0xff] %v1493
    %1506 = vst [vmem:[#allocation2 + $0x2c0] sm:$0xff] %v1494
    %1507 = vst [vmem:[#allocation2 + $0x2c8] sm:$0xff] %v1495
    %1508 = vst [vmem:[#allocation2 + $0x2d0] sm:$0xff] %v1496
    %1509 = vst [vmem:[#allocation2 + $0x2d8] sm:$0xff] %v1497
    %1510 = vst [vmem:[#allocation2 + $0x2e0] sm:$0xff] %v1498
    %1511 = vst [vmem:[#allocation2 + $0x2e8] sm:$0xff] %v1499
    %1512 = vst [vmem:[#allocation2 + $0x2f0] sm:$0xff] %v1500
    %1513 = vst [vmem:[#allocation2 + $0x2f8] sm:$0xff] %v1501
    %1514 = vrot.lane.b32.xlu0 %v1000, 111
    %v1515 = vpop.permute.xlu0 %1514
    %1516 = vrot.lane.b32.xlu0 %v1004, 111
    %v1517 = vpop.permute.xlu0 %1516
    %1518 = vrot.lane.b32.xlu0 %v1008, 111
    %v1519 = vpop.permute.xlu0 %1518
    %1520 = vrot.lane.b32.xlu0 %v1001, 111
    %v1521 = vpop.permute.xlu0 %1520
    %1522 = vrot.lane.b32.xlu0 %v1005, 111
    %v1523 = vpop.permute.xlu0 %1522
    %1524 = vrot.lane.b32.xlu0 %v1009, 111
    %v1525 = vpop.permute.xlu0 %1524
    %1526 = vrot.lane.b32.xlu0 %v1002, 111
    %v1527 = vpop.permute.xlu0 %1526
    %1528 = vrot.lane.b32.xlu0 %v1006, 111
    %v1529 = vpop.permute.xlu0 %1528
    %1530 = vrot.lane.b32.xlu0 %v1010, 111
    %v1531 = vpop.permute.xlu0 %1530
    %1532 = vrot.lane.b32.xlu0 %v1003, 111
    %v1533 = vpop.permute.xlu0 %1532
    %1534 = vrot.lane.b32.xlu0 %v1007, 111
    %v1535 = vpop.permute.xlu0 %1534
    %1536 = vrot.lane.b32.xlu0 %v1011, 111
    %v1537 = vpop.permute.xlu0 %1536
    %v1538 = vsel %vm620, %v1527, %v1533
    %v1539 = vsel %vm620, %v1529, %v1535
    %v1540 = vsel %vm620, %v1531, %v1537
    %v1541 = vsel %vm620, %v1521, %v1527
    %v1542 = vsel %vm620, %v1523, %v1529
    %v1543 = vsel %vm620, %v1525, %v1531
    %v1544 = vsel %vm620, %v1515, %v1521
    %v1545 = vsel %vm620, %v1517, %v1523
    %v1546 = vsel %vm620, %v1519, %v1525
    %v1547 = vsel %vm620, %v1533, %v1515
    %v1548 = vsel %vm620, %v1535, %v1517
    %v1549 = vsel %vm620, %v1537, %v1519
    %v1550 = vld [vmem:[%s633] sm:$0xf]
    %v1552 = vperm.slane %v1550, 0
    %v1553 = vperm.slane %v1550, 1
    %v1554 = vperm.slane %v1550, 2
    %v1555 = vperm.slane %v1550, 3
    %v1560 = vmul.f32 %v1544, %v1552
    %v1561 = vmul.f32 %v1541, %v1553
    %v1562 = vmul.f32 %v1538, %v1554
    %v1563 = vmul.f32 %v1547, %v1555
    %v1564 = vmul.f32 %v1545, %v1552
    %v1565 = vmul.f32 %v1542, %v1553
    %v1566 = vmul.f32 %v1539, %v1554
    %v1567 = vmul.f32 %v1548, %v1555
    %v1568 = vmul.f32 %v1546, %v1552
    %v1569 = vmul.f32 %v1543, %v1553
    %v1570 = vmul.f32 %v1540, %v1554
    %v1571 = vmul.f32 %v1549, %v1555
    %1572 = vst [vmem:[#allocation2 + $0x300] sm:$0xff] %v1560
    %1573 = vst [vmem:[#allocation2 + $0x308] sm:$0xff] %v1561
    %1574 = vst [vmem:[#allocation2 + $0x310] sm:$0xff] %v1562
    %1575 = vst [vmem:[#allocation2 + $0x318] sm:$0xff] %v1563
    %1576 = vst [vmem:[#allocation2 + $0x320] sm:$0xff] %v1564
    %1577 = vst [vmem:[#allocation2 + $0x328] sm:$0xff] %v1565
    %1578 = vst [vmem:[#allocation2 + $0x330] sm:$0xff] %v1566
    %1579 = vst [vmem:[#allocation2 + $0x338] sm:$0xff] %v1567
    %1580 = vst [vmem:[#allocation2 + $0x340] sm:$0xff] %v1568
    %1581 = vst [vmem:[#allocation2 + $0x348] sm:$0xff] %v1569
    %1582 = vst [vmem:[#allocation2 + $0x350] sm:$0xff] %v1570
    %1583 = vst [vmem:[#allocation2 + $0x358] sm:$0xff] %v1571
    %v1584 = vld [vmem:[%s6] sm:$0xff]
    %v1585 = vld [vmem:[%s6 + $0x8] sm:$0xff]
    %v1586 = vld [vmem:[%s6 + $0x10] sm:$0xff]
    %v1587 = vld [vmem:[%s6 + $0x18] sm:$0xff]
    %v1588 = vld [vmem:[%s6 + $0x20] sm:$0xff]
    %v1589 = vld [vmem:[%s6 + $0x28] sm:$0xff]
    %v1590 = vld [vmem:[#allocation2] sm:$0xff]
    %v1591 = vld [vmem:[#allocation2 + $0x8] sm:$0xff]
    %v1592 = vld [vmem:[#allocation2 + $0x10] sm:$0xff]
    %v1593 = vld [vmem:[#allocation2 + $0x18] sm:$0xff]
    %v1594 = vld [vmem:[#allocation2 + $0x20] sm:$0xff]
    %v1595 = vld [vmem:[#allocation2 + $0x28] sm:$0xff]
    %v1596 = vld [vmem:[#allocation2 + $0x30] sm:$0xff]
    %v1597 = vld [vmem:[#allocation2 + $0x38] sm:$0xff]
    %v1598 = vld [vmem:[#allocation2 + $0x40] sm:$0xff]
    %v1599 = vld [vmem:[#allocation2 + $0x48] sm:$0xff]
    %v1600 = vld [vmem:[#allocation2 + $0x50] sm:$0xff]
    %v1601 = vld [vmem:[#allocation2 + $0x58] sm:$0xff]
    %v1602 = vld [vmem:[#allocation2 + $0x60] sm:$0xff]
    %v1603 = vld [vmem:[#allocation2 + $0x68] sm:$0xff]
    %v1604 = vld [vmem:[#allocation2 + $0x70] sm:$0xff]
    %v1605 = vld [vmem:[#allocation2 + $0x78] sm:$0xff]
    %v1606 = vld [vmem:[#allocation2 + $0x80] sm:$0xff]
    %v1607 = vld [vmem:[#allocation2 + $0x88] sm:$0xff]
    %v1608 = vld [vmem:[#allocation2 + $0x90] sm:$0xff]
    %v1609 = vld [vmem:[#allocation2 + $0x98] sm:$0xff]
    %v1610 = vld [vmem:[#allocation2 + $0xa0] sm:$0xff]
    %v1611 = vld [vmem:[#allocation2 + $0xa8] sm:$0xff]
    %v1612 = vld [vmem:[#allocation2 + $0xb0] sm:$0xff]
    %v1613 = vld [vmem:[#allocation2 + $0xb8] sm:$0xff]
    %v1614 = vld [vmem:[#allocation2 + $0xc0] sm:$0xff]
    %v1615 = vld [vmem:[#allocation2 + $0xc8] sm:$0xff]
    %v1616 = vld [vmem:[#allocation2 + $0xd0] sm:$0xff]
    %v1617 = vld [vmem:[#allocation2 + $0xd8] sm:$0xff]
    %v1618 = vld [vmem:[#allocation2 + $0xe0] sm:$0xff]
    %v1619 = vld [vmem:[#allocation2 + $0xe8] sm:$0xff]
    %v1620 = vld [vmem:[#allocation2 + $0xf0] sm:$0xff]
    %v1621 = vld [vmem:[#allocation2 + $0xf8] sm:$0xff]
    %v1622 = vld [vmem:[#allocation2 + $0x100] sm:$0xff]
    %v1623 = vld [vmem:[#allocation2 + $0x108] sm:$0xff]
    %v1624 = vld [vmem:[#allocation2 + $0x110] sm:$0xff]
    %v1625 = vld [vmem:[#allocation2 + $0x118] sm:$0xff]
    %v1626 = vld [vmem:[#allocation2 + $0x120] sm:$0xff]
    %v1627 = vld [vmem:[#allocation2 + $0x128] sm:$0xff]
    %v1628 = vld [vmem:[#allocation2 + $0x130] sm:$0xff]
    %v1629 = vld [vmem:[#allocation2 + $0x138] sm:$0xff]
    %v1630 = vld [vmem:[#allocation2 + $0x140] sm:$0xff]
    %v1631 = vld [vmem:[#allocation2 + $0x148] sm:$0xff]
    %v1632 = vld [vmem:[#allocation2 + $0x150] sm:$0xff]
    %v1633 = vld [vmem:[#allocation2 + $0x158] sm:$0xff]
    %v1634 = vld [vmem:[#allocation2 + $0x160] sm:$0xff]
    %v1635 = vld [vmem:[#allocation2 + $0x168] sm:$0xff]
    %v1636 = vld [vmem:[#allocation2 + $0x170] sm:$0xff]
    %v1637 = vld [vmem:[#allocation2 + $0x178] sm:$0xff]
    %v1638 = vld [vmem:[#allocation2 + $0x180] sm:$0xff]
    %v1639 = vld [vmem:[#allocation2 + $0x188] sm:$0xff]
    %v1640 = vld [vmem:[#allocation2 + $0x190] sm:$0xff]
    %v1641 = vld [vmem:[#allocation2 + $0x198] sm:$0xff]
    %v1642 = vld [vmem:[#allocation2 + $0x1a0] sm:$0xff]
    %v1643 = vld [vmem:[#allocation2 + $0x1a8] sm:$0xff]
    %v1644 = vld [vmem:[#allocation2 + $0x1b0] sm:$0xff]
    %v1645 = vld [vmem:[#allocation2 + $0x1b8] sm:$0xff]
    %v1646 = vld [vmem:[#allocation2 + $0x1c0] sm:$0xff]
    %v1647 = vld [vmem:[#allocation2 + $0x1c8] sm:$0xff]
    %v1648 = vld [vmem:[#allocation2 + $0x1d0] sm:$0xff]
    %v1649 = vld [vmem:[#allocation2 + $0x1d8] sm:$0xff]
    %v1650 = vld [vmem:[#allocation2 + $0x1e0] sm:$0xff]
    %v1651 = vld [vmem:[#allocation2 + $0x1e8] sm:$0xff]
    %v1652 = vld [vmem:[#allocation2 + $0x1f0] sm:$0xff]
    %v1653 = vld [vmem:[#allocation2 + $0x1f8] sm:$0xff]
    %v1654 = vld [vmem:[#allocation2 + $0x200] sm:$0xff]
    %v1655 = vld [vmem:[#allocation2 + $0x208] sm:$0xff]
    %v1656 = vld [vmem:[#allocation2 + $0x210] sm:$0xff]
    %v1657 = vld [vmem:[#allocation2 + $0x218] sm:$0xff]
    %v1658 = vld [vmem:[#allocation2 + $0x220] sm:$0xff]
    %v1659 = vld [vmem:[#allocation2 + $0x228] sm:$0xff]
    %v1660 = vld [vmem:[#allocation2 + $0x230] sm:$0xff]
    %v1661 = vld [vmem:[#allocation2 + $0x238] sm:$0xff]
    %v1662 = vld [vmem:[#allocation2 + $0x240] sm:$0xff]
    %v1663 = vld [vmem:[#allocation2 + $0x248] sm:$0xff]
    %v1664 = vld [vmem:[#allocation2 + $0x250] sm:$0xff]
    %v1665 = vld [vmem:[#allocation2 + $0x258] sm:$0xff]
    %v1666 = vld [vmem:[#allocation2 + $0x260] sm:$0xff]
    %v1667 = vld [vmem:[#allocation2 + $0x268] sm:$0xff]
    %v1668 = vld [vmem:[#allocation2 + $0x270] sm:$0xff]
    %v1669 = vld [vmem:[#allocation2 + $0x278] sm:$0xff]
    %v1670 = vld [vmem:[#allocation2 + $0x280] sm:$0xff]
    %v1671 = vld [vmem:[#allocation2 + $0x288] sm:$0xff]
    %v1672 = vld [vmem:[#allocation2 + $0x290] sm:$0xff]
    %v1673 = vld [vmem:[#allocation2 + $0x298] sm:$0xff]
    %v1674 = vld [vmem:[#allocation2 + $0x2a0] sm:$0xff]
    %v1675 = vld [vmem:[#allocation2 + $0x2a8] sm:$0xff]
    %v1676 = vld [vmem:[#allocation2 + $0x2b0] sm:$0xff]
    %v1677 = vld [vmem:[#allocation2 + $0x2b8] sm:$0xff]
    %v1678 = vld [vmem:[#allocation2 + $0x2c0] sm:$0xff]
    %v1679 = vld [vmem:[#allocation2 + $0x2c8] sm:$0xff]
    %v1680 = vld [vmem:[#allocation2 + $0x2d0] sm:$0xff]
    %v1681 = vld [vmem:[#allocation2 + $0x2d8] sm:$0xff]
    %v1682 = vld [vmem:[#allocation2 + $0x2e0] sm:$0xff]
    %v1683 = vld [vmem:[#allocation2 + $0x2e8] sm:$0xff]
    %v1684 = vld [vmem:[#allocation2 + $0x2f0] sm:$0xff]
    %v1685 = vld [vmem:[#allocation2 + $0x2f8] sm:$0xff]
    %v1686 = vld [vmem:[#allocation2 + $0x300] sm:$0xff]
    %v1687 = vld [vmem:[#allocation2 + $0x308] sm:$0xff]
    %v1688 = vld [vmem:[#allocation2 + $0x310] sm:$0xff]
    %v1689 = vld [vmem:[#allocation2 + $0x318] sm:$0xff]
    %v1690 = vld [vmem:[#allocation2 + $0x320] sm:$0xff]
    %v1691 = vld [vmem:[#allocation2 + $0x328] sm:$0xff]
    %v1692 = vld [vmem:[#allocation2 + $0x330] sm:$0xff]
    %v1693 = vld [vmem:[#allocation2 + $0x338] sm:$0xff]
    %v1694 = vld [vmem:[#allocation2 + $0x340] sm:$0xff]
    %v1695 = vld [vmem:[#allocation2 + $0x348] sm:$0xff]
    %v1696 = vld [vmem:[#allocation2 + $0x350] sm:$0xff]
    %v1697 = vld [vmem:[#allocation2 + $0x358] sm:$0xff]
    %v1699 = vsel %vm782, %v1585, 0
    %v1702 = vsel %vm782, %v1587, 0
    %v1705 = vsel %vm782, %v1589, 0
    %1707 = vmatpush.msra.mxu0 %v1650
    %1708 = vmatpush.msra.mxu0 %v1646
    %1709 = vmatpush.msra.mxu0 %v1642
    %1710 = vmatpush.msra.mxu0 %v1638
    %1711 = vmatpush.msra.mxu0 %v1634
    %1712 = vmatpush.msra.mxu0 %v1630
    %1713 = vmatpush.msra.mxu0 %v1626
    %1714 = vmatpush.msra.mxu0 %v1622
    %1715 = vmatpush.msra.mxu0 %v1618
    %1716 = vmatpush.msra.mxu0 %v1614
    %1717 = vmatpush.msra.mxu0 %v1610
    %1718 = vmatpush.msra.mxu0 %v1606
    %1719 = vmatpush.msra.mxu0 %v1602
    %1720 = vmatpush.msra.mxu0 %v1598
    %1721 = vmatpush.msra.mxu0 %v1594
    %1722 = vmatpush.msra.mxu0 %v1590
    %1723 = vmatmul.f32.gmra.mxu0 %v1584
    %v1724 = vpop.f32.mrf.mxu0
    %v1725 = vadd.f32 0.0, %v1724
    %1726 = vmatmul.f32.gmra.mxu0 %v1586
    %v1727 = vpop.f32.mrf.mxu0
    %v1728 = vadd.f32 0.0, %v1727
    %1729 = vmatmul.f32.gmra.mxu0 %v1588
    %v1730 = vpop.f32.mrf.mxu0
    %v1731 = vadd.f32 0.0, %v1730
    %1732 = vdwg.mxu0
    %1733 = vmatpush.msra.mxu0 0.0
    %1734 = vmatpush.msra.mxu0 0.0
    %1735 = vmatpush.msra.mxu0 0.0
    %1736 = vmatpush.msra.mxu0 0.0
    %1737 = vmatpush.msra.mxu0 0.0
    %1738 = vmatpush.msra.mxu0 %v1694
    %1739 = vmatpush.msra.mxu0 %v1690
    %1740 = vmatpush.msra.mxu0 %v1686
    %1741 = vmatpush.msra.mxu0 %v1682
    %1742 = vmatpush.msra.mxu0 %v1678
    %1743 = vmatpush.msra.mxu0 %v1674
    %1744 = vmatpush.msra.mxu0 %v1670
    %1745 = vmatpush.msra.mxu0 %v1666
    %1746 = vmatpush.msra.mxu0 %v1662
    %1747 = vmatpush.msra.mxu0 %v1658
    %1748 = vmatpush.msra.mxu0 %v1654
    %1749 = vmatmul.f32.gmra.mxu0 %v1699
    %v1750 = vpop.f32.mrf.mxu0
    %v1751 = vadd.f32 %v1725, %v1750
    %1752 = vmatmul.f32.gmra.mxu0 %v1702
    %v1753 = vpop.f32.mrf.mxu0
    %v1754 = vadd.f32 %v1728, %v1753
    %1755 = vmatmul.f32.gmra.mxu0 %v1705
    %v1756 = vpop.f32.mrf.mxu0
    %v1757 = vadd.f32 %v1731, %v1756
    %1758 = vdwg.mxu0
    %1759 = vmatpush.msra.mxu0 %v1651
    %1760 = vmatpush.msra.mxu0 %v1647
    %1761 = vmatpush.msra.mxu0 %v1643
    %1762 = vmatpush.msra.mxu0 %v1639
    %1763 = vmatpush.msra.mxu0 %v1635
    %1764 = vmatpush.msra.mxu0 %v1631
    %1765 = vmatpush.msra.mxu0 %v1627
    %1766 = vmatpush.msra.mxu0 %v1623
    %1767 = vmatpush.msra.mxu0 %v1619
    %1768 = vmatpush.msra.mxu0 %v1615
    %1769 = vmatpush.msra.mxu0 %v1611
    %1770 = vmatpush.msra.mxu0 %v1607
    %1771 = vmatpush.msra.mxu0 %v1603
    %1772 = vmatpush.msra.mxu0 %v1599
    %1773 = vmatpush.msra.mxu0 %v1595
    %1774 = vmatpush.msra.mxu0 %v1591
    %1775 = vmatmul.f32.gmra.mxu0 %v1584
    %v1776 = vpop.f32.mrf.mxu0
    %v1777 = vadd.f32 0.0, %v1776
    %1778 = vmatmul.f32.gmra.mxu0 %v1586
    %v1779 = vpop.f32.mrf.mxu0
    %v1780 = vadd.f32 0.0, %v1779
    %1781 = vmatmul.f32.gmra.mxu0 %v1588
    %v1782 = vpop.f32.mrf.mxu0
    %v1783 = vadd.f32 0.0, %v1782
    %1784 = vdwg.mxu0
    %1785 = vmatpush.msra.mxu0 0.0
    %1786 = vmatpush.msra.mxu0 0.0
    %1787 = vmatpush.msra.mxu0 0.0
    %1788 = vmatpush.msra.mxu0 0.0
    %1789 = vmatpush.msra.mxu0 0.0
    %1790 = vmatpush.msra.mxu0 %v1695
    %1791 = vmatpush.msra.mxu0 %v1691
    %1792 = vmatpush.msra.mxu0 %v1687
    %1793 = vmatpush.msra.mxu0 %v1683
    %1794 = vmatpush.msra.mxu0 %v1679
    %1795 = vmatpush.msra.mxu0 %v1675
    %1796 = vmatpush.msra.mxu0 %v1671
    %1797 = vmatpush.msra.mxu0 %v1667
    %1798 = vmatpush.msra.mxu0 %v1663
    %1799 = vmatpush.msra.mxu0 %v1659
    %1800 = vmatpush.msra.mxu0 %v1655
    %1801 = vmatmul.f32.gmra.mxu0 %v1699
    %v1802 = vpop.f32.mrf.mxu0
    %v1803 = vadd.f32 %v1777, %v1802
    %1804 = vmatmul.f32.gmra.mxu0 %v1702
    %v1805 = vpop.f32.mrf.mxu0
    %v1806 = vadd.f32 %v1780, %v1805
    %1807 = vmatmul.f32.gmra.mxu0 %v1705
    %v1808 = vpop.f32.mrf.mxu0
    %v1809 = vadd.f32 %v1783, %v1808
    %1810 = vdwg.mxu0
    %1811 = vmatpush.msra.mxu0 %v1652
    %1812 = vmatpush.msra.mxu0 %v1648
    %1813 = vmatpush.msra.mxu0 %v1644
    %1814 = vmatpush.msra.mxu0 %v1640
    %1815 = vmatpush.msra.mxu0 %v1636
    %1816 = vmatpush.msra.mxu0 %v1632
    %1817 = vmatpush.msra.mxu0 %v1628
    %1818 = vmatpush.msra.mxu0 %v1624
    %1819 = vmatpush.msra.mxu0 %v1620
    %1820 = vmatpush.msra.mxu0 %v1616
    %1821 = vmatpush.msra.mxu0 %v1612
    %1822 = vmatpush.msra.mxu0 %v1608
    %1823 = vmatpush.msra.mxu0 %v1604
    %1824 = vmatpush.msra.mxu0 %v1600
    %1825 = vmatpush.msra.mxu0 %v1596
    %1826 = vmatpush.msra.mxu0 %v1592
    %1827 = vmatmul.f32.gmra.mxu0 %v1584
    %v1828 = vpop.f32.mrf.mxu0
    %v1829 = vadd.f32 0.0, %v1828
    %1830 = vmatmul.f32.gmra.mxu0 %v1586
    %v1831 = vpop.f32.mrf.mxu0
    %v1832 = vadd.f32 0.0, %v1831
    %1833 = vmatmul.f32.gmra.mxu0 %v1588
    %v1834 = vpop.f32.mrf.mxu0
    %v1835 = vadd.f32 0.0, %v1834
    %1836 = vdwg.mxu0
    %1837 = vmatpush.msra.mxu0 0.0
    %1838 = vmatpush.msra.mxu0 0.0
    %1839 = vmatpush.msra.mxu0 0.0
    %1840 = vmatpush.msra.mxu0 0.0
    %1841 = vmatpush.msra.mxu0 0.0
    %1842 = vmatpush.msra.mxu0 %v1696
    %1843 = vmatpush.msra.mxu0 %v1692
    %1844 = vmatpush.msra.mxu0 %v1688
    %1845 = vmatpush.msra.mxu0 %v1684
    %1846 = vmatpush.msra.mxu0 %v1680
    %1847 = vmatpush.msra.mxu0 %v1676
    %1848 = vmatpush.msra.mxu0 %v1672
    %1849 = vmatpush.msra.mxu0 %v1668
    %1850 = vmatpush.msra.mxu0 %v1664
    %1851 = vmatpush.msra.mxu0 %v1660
    %1852 = vmatpush.msra.mxu0 %v1656
    %1853 = vmatmul.f32.gmra.mxu0 %v1699
    %v1854 = vpop.f32.mrf.mxu0
    %v1855 = vadd.f32 %v1829, %v1854
    %1856 = vmatmul.f32.gmra.mxu0 %v1702
    %v1857 = vpop.f32.mrf.mxu0
    %v1858 = vadd.f32 %v1832, %v1857
    %1859 = vmatmul.f32.gmra.mxu0 %v1705
    %v1860 = vpop.f32.mrf.mxu0
    %v1861 = vadd.f32 %v1835, %v1860
    %1862 = vdwg.mxu0
    %1863 = vmatpush.msra.mxu0 %v1653
    %1864 = vmatpush.msra.mxu0 %v1649
    %1865 = vmatpush.msra.mxu0 %v1645
    %1866 = vmatpush.msra.mxu0 %v1641
    %1867 = vmatpush.msra.mxu0 %v1637
    %1868 = vmatpush.msra.mxu0 %v1633
    %1869 = vmatpush.msra.mxu0 %v1629
    %1870 = vmatpush.msra.mxu0 %v1625
    %1871 = vmatpush.msra.mxu0 %v1621
    %1872 = vmatpush.msra.mxu0 %v1617
    %1873 = vmatpush.msra.mxu0 %v1613
    %1874 = vmatpush.msra.mxu0 %v1609
    %1875 = vmatpush.msra.mxu0 %v1605
    %1876 = vmatpush.msra.mxu0 %v1601
    %1877 = vmatpush.msra.mxu0 %v1597
    %1878 = vmatpush.msra.mxu0 %v1593
    %1879 = vmatmul.f32.gmra.mxu0 %v1584
    %v1880 = vpop.f32.mrf.mxu0
    %v1881 = vadd.f32 0.0, %v1880
    %1882 = vmatmul.f32.gmra.mxu0 %v1586
    %v1883 = vpop.f32.mrf.mxu0
    %v1884 = vadd.f32 0.0, %v1883
    %1885 = vmatmul.f32.gmra.mxu0 %v1588
    %v1886 = vpop.f32.mrf.mxu0
    %v1887 = vadd.f32 0.0, %v1886
    %1888 = vdwg.mxu0
    %1889 = vmatpush.msra.mxu0 0.0
    %1890 = vmatpush.msra.mxu0 0.0
    %1891 = vmatpush.msra.mxu0 0.0
    %1892 = vmatpush.msra.mxu0 0.0
    %1893 = vmatpush.msra.mxu0 0.0
    %1894 = vmatpush.msra.mxu0 %v1697
    %1895 = vmatpush.msra.mxu0 %v1693
    %1896 = vmatpush.msra.mxu0 %v1689
    %1897 = vmatpush.msra.mxu0 %v1685
    %1898 = vmatpush.msra.mxu0 %v1681
    %1899 = vmatpush.msra.mxu0 %v1677
    %1900 = vmatpush.msra.mxu0 %v1673
    %1901 = vmatpush.msra.mxu0 %v1669
    %1902 = vmatpush.msra.mxu0 %v1665
    %1903 = vmatpush.msra.mxu0 %v1661
    %1904 = vmatpush.msra.mxu0 %v1657
    %1905 = vmatmul.f32.gmra.mxu0 %v1699
    %v1906 = vpop.f32.mrf.mxu0
    %v1907 = vadd.f32 %v1881, %v1906
    %1908 = vmatmul.f32.gmra.mxu0 %v1702
    %v1909 = vpop.f32.mrf.mxu0
    %v1910 = vadd.f32 %v1884, %v1909
    %1911 = vmatmul.f32.gmra.mxu0 %v1705
    %v1912 = vpop.f32.mrf.mxu0
    %v1913 = vadd.f32 %v1887, %v1912
    %1914 = vdwg.mxu0
    %v1915 = vmax.f32 %v1751, 0.0
    %v1916 = vmax.f32 %v1803, 0.0
    %v1917 = vmax.f32 %v1855, 0.0
    %v1918 = vmax.f32 %v1907, 0.0
    %v1919 = vmax.f32 %v1754, 0.0
    %v1920 = vmax.f32 %v1806, 0.0
    %v1921 = vmax.f32 %v1858, 0.0
    %v1922 = vmax.f32 %v1910, 0.0
    %v1923 = vmax.f32 %v1757, 0.0
    %v1924 = vmax.f32 %v1809, 0.0
    %v1925 = vmax.f32 %v1861, 0.0
    %v1926 = vmax.f32 %v1913, 0.0
    %v1927 = vadd.f32 %v1915, %v55
    %v1928 = vadd.f32 %v1916, %v56
    %v1929 = vadd.f32 %v1917, %v57
    %v1930 = vadd.f32 %v1918, %v58
    %v1931 = vadd.f32 %v1919, %v59
    %v1932 = vadd.f32 %v1920, %v60
    %v1933 = vadd.f32 %v1921, %v61
    %v1934 = vadd.f32 %v1922, %v62
    %v1935 = vadd.f32 %v1923, %v63
    %v1936 = vadd.f32 %v1924, %v64
    %v1937 = vadd.f32 %v1925, %v65
    %v1938 = vadd.f32 %v1926, %v66
    %1939 = vst [vmem:[%s10] sm:$0xff] %v1927
    %1940 = vst [vmem:[%s10 + $0x8] sm:$0xff] %v1928
    %1941 = vst [vmem:[%s10 + $0x10] sm:$0xff] %v1929
    %1942 = vst [vmem:[%s10 + $0x18] sm:$0xff] %v1930
    %1943 = vst [vmem:[%s10 + $0x20] sm:$0xff] %v1931
    %1944 = vst [vmem:[%s10 + $0x28] sm:$0xff] %v1932
    %1945 = vst [vmem:[%s10 + $0x30] sm:$0xff] %v1933
    %1946 = vst [vmem:[%s10 + $0x38] sm:$0xff] %v1934
    %1947 = vst [vmem:[%s10 + $0x40] sm:$0xff] %v1935
    %1948 = vst [vmem:[%s10 + $0x48] sm:$0xff] %v1936
    %1949 = vst [vmem:[%s10 + $0x50] sm:$0xff] %v1937
    %1950 = vst [vmem:[%s10 + $0x58] sm:$0xff] %v1938
    %v1951 = vld [vmem:[%s8] sm:$0xff]
    %vm1952 = vcmask 195584
    %v1954 = vsel %vm1952, %v1951, 0
    %1956 = vmatpush.msra.mxu0 0.0
    %1957 = vmatpush.msra.mxu0 0.0
    %1958 = vmatpush.msra.mxu0 0.0
    %1959 = vmatpush.msra.mxu0 0.0
    %1960 = vmatpush.msra.mxu0 0.0
    %1961 = vmatpush.msra.mxu0 0.0
    %1962 = vmatpush.msra.mxu0 0.0
    %1963 = vmatpush.msra.mxu0 0.0
    %1964 = vmatpush.msra.mxu0 0.0
    %1965 = vmatpush.msra.mxu0 0.0
    %1966 = vmatpush.msra.mxu0 0.0
    %1967 = vmatpush.msra.mxu0 0.0
    %1968 = vmatpush.msra.mxu0 0.0
    %1969 = vmatpush.msra.mxu0 %v75
    %1970 = vmatpush.msra.mxu0 %v71
    %1971 = vmatpush.msra.mxu0 %v67
    %1972 = vmatmul.f32.gmra.mxu0 %v1954
    %v1973 = vpop.f32.mrf.mxu0
    %v1974 = vadd.f32 0.0, %v1973
    %1975 = vdwg.mxu0
    %1976 = vmatpush.msra.mxu0 0.0
    %1977 = vmatpush.msra.mxu0 0.0
    %1978 = vmatpush.msra.mxu0 0.0
    %1979 = vmatpush.msra.mxu0 0.0
    %1980 = vmatpush.msra.mxu0 0.0
    %1981 = vmatpush.msra.mxu0 0.0
    %1982 = vmatpush.msra.mxu0 0.0
    %1983 = vmatpush.msra.mxu0 0.0
    %1984 = vmatpush.msra.mxu0 0.0
    %1985 = vmatpush.msra.mxu0 0.0
    %1986 = vmatpush.msra.mxu0 0.0
    %1987 = vmatpush.msra.mxu0 0.0
    %1988 = vmatpush.msra.mxu0 0.0
    %1989 = vmatpush.msra.mxu0 %v76
    %1990 = vmatpush.msra.mxu0 %v72
    %1991 = vmatpush.msra.mxu0 %v68
    %1992 = vmatmul.f32.gmra.mxu0 %v1954
    %v1993 = vpop.f32.mrf.mxu0
    %v1994 = vadd.f32 0.0, %v1993
    %1995 = vdwg.mxu0
    %1996 = vmatpush.msra.mxu0 0.0
    %1997 = vmatpush.msra.mxu0 0.0
    %1998 = vmatpush.msra.mxu0 0.0
    %1999 = vmatpush.msra.mxu0 0.0
    %2000 = vmatpush.msra.mxu0 0.0
    %2001 = vmatpush.msra.mxu0 0.0
    %2002 = vmatpush.msra.mxu0 0.0
    %2003 = vmatpush.msra.mxu0 0.0
    %2004 = vmatpush.msra.mxu0 0.0
    %2005 = vmatpush.msra.mxu0 0.0
    %2006 = vmatpush.msra.mxu0 0.0
    %2007 = vmatpush.msra.mxu0 0.0
    %2008 = vmatpush.msra.mxu0 0.0
    %2009 = vmatpush.msra.mxu0 %v77
    %2010 = vmatpush.msra.mxu0 %v73
    %2011 = vmatpush.msra.mxu0 %v69
    %2012 = vmatmul.f32.gmra.mxu0 %v1954
    %v2013 = vpop.f32.mrf.mxu0
    %v2014 = vadd.f32 0.0, %v2013
    %2015 = vdwg.mxu0
    %2016 = vmatpush.msra.mxu0 0.0
    %2017 = vmatpush.msra.mxu0 0.0
    %2018 = vmatpush.msra.mxu0 0.0
    %2019 = vmatpush.msra.mxu0 0.0
    %2020 = vmatpush.msra.mxu0 0.0
    %2021 = vmatpush.msra.mxu0 0.0
    %2022 = vmatpush.msra.mxu0 0.0
    %2023 = vmatpush.msra.mxu0 0.0
    %2024 = vmatpush.msra.mxu0 0.0
    %2025 = vmatpush.msra.mxu0 0.0
    %2026 = vmatpush.msra.mxu0 0.0
    %2027 = vmatpush.msra.mxu0 0.0
    %2028 = vmatpush.msra.mxu0 0.0
    %2029 = vmatpush.msra.mxu0 %v78
    %2030 = vmatpush.msra.mxu0 %v74
    %2031 = vmatpush.msra.mxu0 %v70
    %2032 = vmatmul.f32.gmra.mxu0 %v1954
    %v2033 = vpop.f32.mrf.mxu0
    %v2034 = vadd.f32 0.0, %v2033
    %2035 = vdwg.mxu0
    %2036 = vst [vmem:[%s12] sm:$0xff] %v1974
    %2037 = vst [vmem:[%s12 + $0x8] sm:$0xff] %v1994
    %2038 = vst [vmem:[%s12 + $0x10] sm:$0xff] %v2014
    %2039 = vst [vmem:[%s12 + $0x18] sm:$0xff] %v2034
    %v2040 = vld [vmem:[%s7] sm:$0xff]
    %v2041 = vld [vmem:[%s7 + $0x8] sm:$0xff]
    %v2042 = vld [vmem:[%s7 + $0x10] sm:$0xff]
    %v2043 = vld [vmem:[%s7 + $0x18] sm:$0xff]
    %v2044 = vld [vmem:[%s7 + $0x20] sm:$0xff]
    %v2045 = vld [vmem:[%s7 + $0x28] sm:$0xff]
    %v2046 = vld [vmem:[%s7 + $0x30] sm:$0xff]
    %v2047 = vld [vmem:[%s7 + $0x38] sm:$0xff]
    %v2048 = vld [vmem:[%s7 + $0x40] sm:$0xff]
    %v2049 = vld [vmem:[%s7 + $0x48] sm:$0xff]
    %v2050 = vld [vmem:[%s7 + $0x50] sm:$0xff]
    %v2051 = vld [vmem:[%s7 + $0x58] sm:$0xff]
    %v2052 = vld [vmem:[%s3] sm:$0xff]
    %v2053 = vld [vmem:[%s3 + $0x8] sm:$0xff]
    %v2054 = vld [vmem:[%s3 + $0x10] sm:$0xff]
    %v2056 = vsel %vm1952, %v2040, 0
    %v2059 = vsel %vm1952, %v2041, 0
    %v2062 = vsel %vm1952, %v2042, 0
    %v2065 = vsel %vm1952, %v2043, 0
    %v2068 = vsel %vm1952, %v2044, 0
    %v2071 = vsel %vm1952, %v2045, 0
    %v2074 = vsel %vm1952, %v2046, 0
    %v2077 = vsel %vm1952, %v2047, 0
    %v2080 = vsel %vm1952, %v2048, 0
    %v2083 = vsel %vm1952, %v2049, 0
    %v2086 = vsel %vm1952, %v2050, 0
    %v2089 = vsel %vm1952, %v2051, 0
    %2091 = vmatpush.msra.mxu0 0.0
    %2092 = vmatpush.msra.mxu0 0.0
    %2093 = vmatpush.msra.mxu0 0.0
    %2094 = vmatpush.msra.mxu0 0.0
    %2095 = vmatpush.msra.mxu0 0.0
    %2096 = vmatpush.msra.mxu0 0.0
    %2097 = vmatpush.msra.mxu0 0.0
    %2098 = vmatpush.msra.mxu0 0.0
    %2099 = vmatpush.msra.mxu0 0.0
    %2100 = vmatpush.msra.mxu0 0.0
    %2101 = vmatpush.msra.mxu0 0.0
    %2102 = vmatpush.msra.mxu0 0.0
    %2103 = vmatpush.msra.mxu0 0.0
    %2104 = vmatpush.msra.mxu0 %v2054
    %2105 = vmatpush.msra.mxu0 %v2053
    %2106 = vmatpush.msra.mxu0 %v2052
    %2107 = vmatmul.f32.gmra.mxu0 %v2056
    %v2108 = vpop.f32.mrf.mxu0
    %v2109 = vadd.f32 0.0, %v2108
    %2110 = vmatmul.f32.gmra.mxu0 %v2059
    %v2111 = vpop.f32.mrf.mxu0
    %v2112 = vadd.f32 0.0, %v2111
    %2113 = vmatmul.f32.gmra.mxu0 %v2062
    %v2114 = vpop.f32.mrf.mxu0
    %v2115 = vadd.f32 0.0, %v2114
    %2116 = vmatmul.f32.gmra.mxu0 %v2065
    %v2117 = vpop.f32.mrf.mxu0
    %v2118 = vadd.f32 0.0, %v2117
    %2119 = vmatmul.f32.gmra.mxu0 %v2068
    %v2120 = vpop.f32.mrf.mxu0
    %v2121 = vadd.f32 0.0, %v2120
    %2122 = vmatmul.f32.gmra.mxu0 %v2071
    %v2123 = vpop.f32.mrf.mxu0
    %v2124 = vadd.f32 0.0, %v2123
    %2125 = vmatmul.f32.gmra.mxu0 %v2074
    %v2126 = vpop.f32.mrf.mxu0
    %v2127 = vadd.f32 0.0, %v2126
    %2128 = vmatmul.f32.gmra.mxu0 %v2077
    %v2129 = vpop.f32.mrf.mxu0
    %v2130 = vadd.f32 0.0, %v2129
    %2131 = vmatmul.f32.gmra.mxu0 %v2080
    %v2132 = vpop.f32.mrf.mxu0
    %v2133 = vadd.f32 0.0, %v2132
    %2134 = vmatmul.f32.gmra.mxu0 %v2083
    %v2135 = vpop.f32.mrf.mxu0
    %v2136 = vadd.f32 0.0, %v2135
    %2137 = vmatmul.f32.gmra.mxu0 %v2086
    %v2138 = vpop.f32.mrf.mxu0
    %v2139 = vadd.f32 0.0, %v2138
    %2140 = vmatmul.f32.gmra.mxu0 %v2089
    %v2141 = vpop.f32.mrf.mxu0
    %v2142 = vadd.f32 0.0, %v2141
    %2143 = vdwg.mxu0
    %v2144 = vld [vmem:[#allocation4] sm:$0xff]
    %v2145 = vld [vmem:[#allocation4 + $0x8] sm:$0xff]
    %v2146 = vld [vmem:[#allocation4 + $0x10] sm:$0xff]
    %v2147 = vld [vmem:[#allocation4 + $0x18] sm:$0xff]
    %v2148 = vld [vmem:[#allocation4 + $0x20] sm:$0xff]
    %v2149 = vld [vmem:[#allocation4 + $0x28] sm:$0xff]
    %v2150 = vld [vmem:[#allocation4 + $0x30] sm:$0xff]
    %v2151 = vld [vmem:[#allocation4 + $0x38] sm:$0xff]
    %v2152 = vld [vmem:[#allocation4 + $0x40] sm:$0xff]
    %v2153 = vld [vmem:[#allocation4 + $0x48] sm:$0xff]
    %v2154 = vld [vmem:[#allocation4 + $0x50] sm:$0xff]
    %v2155 = vld [vmem:[#allocation4 + $0x58] sm:$0xff]
    %v2156 = vld [vmem:[#allocation4 + $0x60] sm:$0xff]
    %v2157 = vld [vmem:[#allocation4 + $0x68] sm:$0xff]
    %v2158 = vld [vmem:[#allocation4 + $0x70] sm:$0xff]
    %v2159 = vld [vmem:[#allocation4 + $0x78] sm:$0xff]
    %v2160 = vld [vmem:[#allocation4 + $0x80] sm:$0xff]
    %v2161 = vld [vmem:[#allocation4 + $0x88] sm:$0xff]
    %v2162 = vld [vmem:[#allocation4 + $0x90] sm:$0xff]
    %v2163 = vld [vmem:[#allocation4 + $0x98] sm:$0xff]
    %v2164 = vld [vmem:[#allocation4 + $0xa0] sm:$0xff]
    %v2165 = vld [vmem:[#allocation4 + $0xa8] sm:$0xff]
    %v2166 = vld [vmem:[#allocation4 + $0xb0] sm:$0xff]
    %v2167 = vld [vmem:[#allocation4 + $0xb8] sm:$0xff]
    %v2168 = vld [vmem:[#allocation4 + $0xc0] sm:$0xff]
    %v2169 = vld [vmem:[#allocation4 + $0xc8] sm:$0xff]
    %v2170 = vld [vmem:[#allocation4 + $0xd0] sm:$0xff]
    %v2171 = vld [vmem:[#allocation4 + $0xd8] sm:$0xff]
    %v2172 = vld [vmem:[#allocation4 + $0xe0] sm:$0xff]
    %v2173 = vld [vmem:[#allocation4 + $0xe8] sm:$0xff]
    %v2174 = vld [vmem:[#allocation4 + $0xf0] sm:$0xff]
    %v2175 = vld [vmem:[#allocation4 + $0xf8] sm:$0xff]
    %v2176 = vld [vmem:[#allocation4 + $0x100] sm:$0xff]
    %v2177 = vld [vmem:[#allocation4 + $0x108] sm:$0xff]
    %v2178 = vld [vmem:[#allocation4 + $0x110] sm:$0xff]
    %v2179 = vld [vmem:[#allocation4 + $0x118] sm:$0xff]
    %v2180 = vld [vmem:[#allocation4 + $0x120] sm:$0xff]
    %v2181 = vld [vmem:[#allocation4 + $0x128] sm:$0xff]
    %v2182 = vld [vmem:[#allocation4 + $0x130] sm:$0xff]
    %v2183 = vld [vmem:[#allocation4 + $0x138] sm:$0xff]
    %v2184 = vld [vmem:[#allocation4 + $0x140] sm:$0xff]
    %v2185 = vld [vmem:[#allocation4 + $0x148] sm:$0xff]
    %v2186 = vld [vmem:[#allocation4 + $0x150] sm:$0xff]
    %v2187 = vld [vmem:[#allocation4 + $0x158] sm:$0xff]
    %v2188 = vld [vmem:[#allocation4 + $0x160] sm:$0xff]
    %v2189 = vld [vmem:[#allocation4 + $0x168] sm:$0xff]
    %v2190 = vld [vmem:[#allocation4 + $0x170] sm:$0xff]
    %v2191 = vld [vmem:[#allocation4 + $0x178] sm:$0xff]
    %v2192 = vld [vmem:[#allocation4 + $0x180] sm:$0xff]
    %v2193 = vld [vmem:[#allocation4 + $0x188] sm:$0xff]
    %v2194 = vld [vmem:[#allocation4 + $0x190] sm:$0xff]
    %v2195 = vld [vmem:[#allocation4 + $0x198] sm:$0xff]
    %v2196 = vld [vmem:[#allocation4 + $0x1a0] sm:$0xff]
    %v2197 = vld [vmem:[#allocation4 + $0x1a8] sm:$0xff]
    %v2198 = vld [vmem:[#allocation4 + $0x1b0] sm:$0xff]
    %v2199 = vld [vmem:[#allocation4 + $0x1b8] sm:$0xff]
    %v2200 = vld [vmem:[#allocation4 + $0x1c0] sm:$0xff]
    %v2201 = vld [vmem:[#allocation4 + $0x1c8] sm:$0xff]
    %v2202 = vld [vmem:[#allocation4 + $0x1d0] sm:$0xff]
    %v2203 = vld [vmem:[#allocation4 + $0x1d8] sm:$0xff]
    %v2204 = vld [vmem:[#allocation4 + $0x1e0] sm:$0xff]
    %v2205 = vld [vmem:[#allocation4 + $0x1e8] sm:$0xff]
    %v2206 = vld [vmem:[#allocation4 + $0x1f0] sm:$0xff]
    %v2207 = vld [vmem:[#allocation4 + $0x1f8] sm:$0xff]
    %v2208 = vld [vmem:[#allocation4 + $0x200] sm:$0xff]
    %v2209 = vld [vmem:[#allocation4 + $0x208] sm:$0xff]
    %v2210 = vld [vmem:[#allocation4 + $0x210] sm:$0xff]
    %v2211 = vld [vmem:[#allocation4 + $0x218] sm:$0xff]
    %v2212 = vld [vmem:[#allocation4 + $0x220] sm:$0xff]
    %v2213 = vld [vmem:[#allocation4 + $0x228] sm:$0xff]
    %v2214 = vld [vmem:[#allocation4 + $0x230] sm:$0xff]
    %v2215 = vld [vmem:[#allocation4 + $0x238] sm:$0xff]
    %v2216 = vld [vmem:[#allocation4 + $0x240] sm:$0xff]
    %v2217 = vld [vmem:[#allocation4 + $0x248] sm:$0xff]
    %v2218 = vld [vmem:[#allocation4 + $0x250] sm:$0xff]
    %v2219 = vld [vmem:[#allocation4 + $0x258] sm:$0xff]
    %v2220 = vld [vmem:[#allocation4 + $0x260] sm:$0xff]
    %v2221 = vld [vmem:[#allocation4 + $0x268] sm:$0xff]
    %v2222 = vld [vmem:[#allocation4 + $0x270] sm:$0xff]
    %v2223 = vld [vmem:[#allocation4 + $0x278] sm:$0xff]
    %v2224 = vld [vmem:[#allocation4 + $0x280] sm:$0xff]
    %v2225 = vld [vmem:[#allocation4 + $0x288] sm:$0xff]
    %v2226 = vld [vmem:[#allocation4 + $0x290] sm:$0xff]
    %v2227 = vld [vmem:[#allocation4 + $0x298] sm:$0xff]
    %v2228 = vld [vmem:[#allocation4 + $0x2a0] sm:$0xff]
    %v2229 = vld [vmem:[#allocation4 + $0x2a8] sm:$0xff]
    %v2230 = vld [vmem:[#allocation4 + $0x2b0] sm:$0xff]
    %v2231 = vld [vmem:[#allocation4 + $0x2b8] sm:$0xff]
    %v2232 = vld [vmem:[#allocation4 + $0x2c0] sm:$0xff]
    %v2233 = vld [vmem:[#allocation4 + $0x2c8] sm:$0xff]
    %v2234 = vld [vmem:[#allocation4 + $0x2d0] sm:$0xff]
    %v2235 = vld [vmem:[#allocation4 + $0x2d8] sm:$0xff]
    %v2236 = vld [vmem:[#allocation4 + $0x2e0] sm:$0xff]
    %v2237 = vld [vmem:[#allocation4 + $0x2e8] sm:$0xff]
    %v2238 = vld [vmem:[#allocation4 + $0x2f0] sm:$0xff]
    %v2239 = vld [vmem:[#allocation4 + $0x2f8] sm:$0xff]
    %v2240 = vld [vmem:[#allocation4 + $0x300] sm:$0xff]
    %v2241 = vld [vmem:[#allocation4 + $0x308] sm:$0xff]
    %v2242 = vld [vmem:[#allocation4 + $0x310] sm:$0xff]
    %v2243 = vld [vmem:[#allocation4 + $0x318] sm:$0xff]
    %v2244 = vld [vmem:[#allocation4 + $0x320] sm:$0xff]
    %v2245 = vld [vmem:[#allocation4 + $0x328] sm:$0xff]
    %v2246 = vld [vmem:[#allocation4 + $0x330] sm:$0xff]
    %v2247 = vld [vmem:[#allocation4 + $0x338] sm:$0xff]
    %v2248 = vld [vmem:[#allocation4 + $0x340] sm:$0xff]
    %v2249 = vld [vmem:[#allocation4 + $0x348] sm:$0xff]
    %v2250 = vld [vmem:[#allocation4 + $0x350] sm:$0xff]
    %v2251 = vld [vmem:[#allocation4 + $0x358] sm:$0xff]
    %v2252 = vld [vmem:[#allocation4 + $0x360] sm:$0xff]
    %v2253 = vld [vmem:[#allocation4 + $0x368] sm:$0xff]
    %v2254 = vld [vmem:[#allocation4 + $0x370] sm:$0xff]
    %v2255 = vld [vmem:[#allocation4 + $0x378] sm:$0xff]
    %v2256 = vld [vmem:[#allocation4 + $0x380] sm:$0xff]
    %v2257 = vld [vmem:[#allocation4 + $0x388] sm:$0xff]
    %v2258 = vld [vmem:[#allocation4 + $0x390] sm:$0xff]
    %v2259 = vld [vmem:[#allocation4 + $0x398] sm:$0xff]
    %v2260 = vld [vmem:[#allocation4 + $0x3a0] sm:$0xff]
    %v2261 = vld [vmem:[#allocation4 + $0x3a8] sm:$0xff]
    %v2262 = vld [vmem:[#allocation4 + $0x3b0] sm:$0xff]
    %v2263 = vld [vmem:[#allocation4 + $0x3b8] sm:$0xff]
    %v2264 = vld [vmem:[#allocation4 + $0x3c0] sm:$0xff]
    %v2265 = vld [vmem:[#allocation4 + $0x3c8] sm:$0xff]
    %v2266 = vld [vmem:[#allocation4 + $0x3d0] sm:$0xff]
    %v2267 = vld [vmem:[#allocation4 + $0x3d8] sm:$0xff]
    %v2268 = vld [vmem:[#allocation4 + $0x3e0] sm:$0xff]
    %v2269 = vld [vmem:[#allocation4 + $0x3e8] sm:$0xff]
    %v2270 = vld [vmem:[#allocation4 + $0x3f0] sm:$0xff]
    %v2271 = vld [vmem:[#allocation4 + $0x3f8] sm:$0xff]
    %v2272 = vld [vmem:[#allocation4 + $0x400] sm:$0xff]
    %v2273 = vld [vmem:[#allocation4 + $0x408] sm:$0xff]
    %v2274 = vld [vmem:[#allocation4 + $0x410] sm:$0xff]
    %v2275 = vld [vmem:[#allocation4 + $0x418] sm:$0xff]
    %v2276 = vld [vmem:[#allocation4 + $0x420] sm:$0xff]
    %v2277 = vld [vmem:[#allocation4 + $0x428] sm:$0xff]
    %v2278 = vld [vmem:[#allocation4 + $0x430] sm:$0xff]
    %v2279 = vld [vmem:[#allocation4 + $0x438] sm:$0xff]
    %v2280 = vld [vmem:[#allocation4 + $0x440] sm:$0xff]
    %v2281 = vld [vmem:[#allocation4 + $0x448] sm:$0xff]
    %v2282 = vld [vmem:[#allocation4 + $0x450] sm:$0xff]
    %v2283 = vld [vmem:[#allocation4 + $0x458] sm:$0xff]
    %v2284 = vld [vmem:[#allocation4 + $0x460] sm:$0xff]
    %v2285 = vld [vmem:[#allocation4 + $0x468] sm:$0xff]
    %v2286 = vld [vmem:[#allocation4 + $0x470] sm:$0xff]
    %v2287 = vld [vmem:[#allocation4 + $0x478] sm:$0xff]
    %v2288 = vld [vmem:[#allocation4 + $0x480] sm:$0xff]
    %v2289 = vld [vmem:[#allocation4 + $0x488] sm:$0xff]
    %v2290 = vld [vmem:[#allocation4 + $0x490] sm:$0xff]
    %v2291 = vld [vmem:[#allocation4 + $0x498] sm:$0xff]
    %v2292 = vld [vmem:[#allocation4 + $0x4a0] sm:$0xff]
    %v2293 = vld [vmem:[#allocation4 + $0x4a8] sm:$0xff]
    %v2294 = vld [vmem:[#allocation4 + $0x4b0] sm:$0xff]
    %v2295 = vld [vmem:[#allocation4 + $0x4b8] sm:$0xff]
    %v2296 = vld [vmem:[#allocation4 + $0x4c0] sm:$0xff]
    %v2297 = vld [vmem:[#allocation4 + $0x4c8] sm:$0xff]
    %v2298 = vld [vmem:[#allocation4 + $0x4d0] sm:$0xff]
    %v2299 = vld [vmem:[#allocation4 + $0x4d8] sm:$0xff]
    %v2300 = vld [vmem:[#allocation4 + $0x4e0] sm:$0xff]
    %v2301 = vld [vmem:[#allocation4 + $0x4e8] sm:$0xff]
    %v2302 = vld [vmem:[#allocation4 + $0x4f0] sm:$0xff]
    %v2303 = vld [vmem:[#allocation4 + $0x4f8] sm:$0xff]
    %v2304 = vld [vmem:[#allocation4 + $0x500] sm:$0xff]
    %v2305 = vld [vmem:[#allocation4 + $0x508] sm:$0xff]
    %v2306 = vld [vmem:[#allocation4 + $0x510] sm:$0xff]
    %v2307 = vld [vmem:[#allocation4 + $0x518] sm:$0xff]
    %v2308 = vld [vmem:[#allocation4 + $0x520] sm:$0xff]
    %v2309 = vld [vmem:[#allocation4 + $0x528] sm:$0xff]
    %v2310 = vld [vmem:[#allocation4 + $0x530] sm:$0xff]
    %v2311 = vld [vmem:[#allocation4 + $0x538] sm:$0xff]
    %v2312 = vld [vmem:[#allocation4 + $0x540] sm:$0xff]
    %v2313 = vld [vmem:[#allocation4 + $0x548] sm:$0xff]
    %v2314 = vld [vmem:[#allocation4 + $0x550] sm:$0xff]
    %v2315 = vld [vmem:[#allocation4 + $0x558] sm:$0xff]
    %v2316 = vld [vmem:[#allocation4 + $0x560] sm:$0xff]
    %v2317 = vld [vmem:[#allocation4 + $0x568] sm:$0xff]
    %v2318 = vld [vmem:[#allocation4 + $0x570] sm:$0xff]
    %v2319 = vld [vmem:[#allocation4 + $0x578] sm:$0xff]
    %v2320 = vld [vmem:[#allocation4 + $0x580] sm:$0xff]
    %v2321 = vld [vmem:[#allocation4 + $0x588] sm:$0xff]
    %v2322 = vld [vmem:[#allocation4 + $0x590] sm:$0xff]
    %v2323 = vld [vmem:[#allocation4 + $0x598] sm:$0xff]
    %v2324 = vld [vmem:[#allocation4 + $0x5a0] sm:$0xff]
    %v2325 = vld [vmem:[#allocation4 + $0x5a8] sm:$0xff]
    %v2326 = vld [vmem:[#allocation4 + $0x5b0] sm:$0xff]
    %v2327 = vld [vmem:[#allocation4 + $0x5b8] sm:$0xff]
    %v2328 = vld [vmem:[#allocation4 + $0x5c0] sm:$0xff]
    %v2329 = vld [vmem:[#allocation4 + $0x5c8] sm:$0xff]
    %v2330 = vld [vmem:[#allocation4 + $0x5d0] sm:$0xff]
    %v2331 = vld [vmem:[#allocation4 + $0x5d8] sm:$0xff]
    %v2332 = vld [vmem:[#allocation4 + $0x5e0] sm:$0xff]
    %v2333 = vld [vmem:[#allocation4 + $0x5e8] sm:$0xff]
    %v2334 = vld [vmem:[#allocation4 + $0x5f0] sm:$0xff]
    %v2335 = vld [vmem:[#allocation4 + $0x5f8] sm:$0xff]
    %v2336 = vld [vmem:[#allocation4 + $0x600] sm:$0xff]
    %v2337 = vld [vmem:[#allocation4 + $0x608] sm:$0xff]
    %v2338 = vld [vmem:[#allocation4 + $0x610] sm:$0xff]
    %v2339 = vld [vmem:[#allocation4 + $0x618] sm:$0xff]
    %v2340 = vld [vmem:[#allocation4 + $0x620] sm:$0xff]
    %v2341 = vld [vmem:[#allocation4 + $0x628] sm:$0xff]
    %v2342 = vld [vmem:[#allocation4 + $0x630] sm:$0xff]
    %v2343 = vld [vmem:[#allocation4 + $0x638] sm:$0xff]
    %v2344 = vld [vmem:[#allocation4 + $0x640] sm:$0xff]
    %v2345 = vld [vmem:[#allocation4 + $0x648] sm:$0xff]
    %v2346 = vld [vmem:[#allocation4 + $0x650] sm:$0xff]
    %v2347 = vld [vmem:[#allocation4 + $0x658] sm:$0xff]
    %v2348 = vld [vmem:[#allocation4 + $0x660] sm:$0xff]
    %v2349 = vld [vmem:[#allocation4 + $0x668] sm:$0xff]
    %v2350 = vld [vmem:[#allocation4 + $0x670] sm:$0xff]
    %v2351 = vld [vmem:[#allocation4 + $0x678] sm:$0xff]
    %v2352 = vld [vmem:[#allocation4 + $0x680] sm:$0xff]
    %v2353 = vld [vmem:[#allocation4 + $0x688] sm:$0xff]
    %v2354 = vld [vmem:[#allocation4 + $0x690] sm:$0xff]
    %v2355 = vld [vmem:[#allocation4 + $0x698] sm:$0xff]
    %v2356 = vld [vmem:[#allocation4 + $0x6a0] sm:$0xff]
    %v2357 = vld [vmem:[#allocation4 + $0x6a8] sm:$0xff]
    %v2358 = vld [vmem:[#allocation4 + $0x6b0] sm:$0xff]
    %v2359 = vld [vmem:[#allocation4 + $0x6b8] sm:$0xff]
    %v2360 = vld [vmem:[#allocation4 + $0x6c0] sm:$0xff]
    %v2361 = vld [vmem:[#allocation4 + $0x6c8] sm:$0xff]
    %v2362 = vld [vmem:[#allocation4 + $0x6d0] sm:$0xff]
    %v2363 = vld [vmem:[#allocation4 + $0x6d8] sm:$0xff]
    %v2364 = vld [vmem:[#allocation4 + $0x6e0] sm:$0xff]
    %v2365 = vld [vmem:[#allocation4 + $0x6e8] sm:$0xff]
    %v2366 = vld [vmem:[#allocation4 + $0x6f0] sm:$0xff]
    %v2367 = vld [vmem:[#allocation4 + $0x6f8] sm:$0xff]
    %v2368 = vld [vmem:[#allocation4 + $0x700] sm:$0xff]
    %v2369 = vld [vmem:[#allocation4 + $0x708] sm:$0xff]
    %v2370 = vld [vmem:[#allocation4 + $0x710] sm:$0xff]
    %v2371 = vld [vmem:[#allocation4 + $0x718] sm:$0xff]
    %v2372 = vld [vmem:[#allocation4 + $0x720] sm:$0xff]
    %v2373 = vld [vmem:[#allocation4 + $0x728] sm:$0xff]
    %v2374 = vld [vmem:[#allocation4 + $0x730] sm:$0xff]
    %v2375 = vld [vmem:[#allocation4 + $0x738] sm:$0xff]
    %v2376 = vld [vmem:[#allocation4 + $0x740] sm:$0xff]
    %v2377 = vld [vmem:[#allocation4 + $0x748] sm:$0xff]
    %v2378 = vld [vmem:[#allocation4 + $0x750] sm:$0xff]
    %v2379 = vld [vmem:[#allocation4 + $0x758] sm:$0xff]
    %v2380 = vld [vmem:[#allocation4 + $0x760] sm:$0xff]
    %v2381 = vld [vmem:[#allocation4 + $0x768] sm:$0xff]
    %v2382 = vld [vmem:[#allocation4 + $0x770] sm:$0xff]
    %v2383 = vld [vmem:[#allocation4 + $0x778] sm:$0xff]
    %v2384 = vld [vmem:[#allocation4 + $0x780] sm:$0xff]
    %v2385 = vld [vmem:[#allocation4 + $0x788] sm:$0xff]
    %v2386 = vld [vmem:[#allocation4 + $0x790] sm:$0xff]
    %v2387 = vld [vmem:[#allocation4 + $0x798] sm:$0xff]
    %v2388 = vld [vmem:[#allocation4 + $0x7a0] sm:$0xff]
    %v2389 = vld [vmem:[#allocation4 + $0x7a8] sm:$0xff]
    %v2390 = vld [vmem:[#allocation4 + $0x7b0] sm:$0xff]
    %v2391 = vld [vmem:[#allocation4 + $0x7b8] sm:$0xff]
    %v2392 = vld [vmem:[#allocation4 + $0x7c0] sm:$0xff]
    %v2393 = vld [vmem:[#allocation4 + $0x7c8] sm:$0xff]
    %v2394 = vld [vmem:[#allocation4 + $0x7d0] sm:$0xff]
    %v2395 = vld [vmem:[#allocation4 + $0x7d8] sm:$0xff]
    %v2396 = vld [vmem:[#allocation4 + $0x7e0] sm:$0xff]
    %v2397 = vld [vmem:[#allocation4 + $0x7e8] sm:$0xff]
    %v2398 = vld [vmem:[#allocation4 + $0x7f0] sm:$0xff]
    %v2399 = vld [vmem:[#allocation4 + $0x7f8] sm:$0xff]
    %2400 = vmatpush.msra.mxu0 %v2204
    %2401 = vmatpush.msra.mxu0 %v2200
    %2402 = vmatpush.msra.mxu0 %v2196
    %2403 = vmatpush.msra.mxu0 %v2192
    %2404 = vmatpush.msra.mxu0 %v2188
    %2405 = vmatpush.msra.mxu0 %v2184
    %2406 = vmatpush.msra.mxu0 %v2180
    %2407 = vmatpush.msra.mxu0 %v2176
    %2408 = vmatpush.msra.mxu0 %v2172
    %2409 = vmatpush.msra.mxu0 %v2168
    %2410 = vmatpush.msra.mxu0 %v2164
    %2411 = vmatpush.msra.mxu0 %v2160
    %2412 = vmatpush.msra.mxu0 %v2156
    %2413 = vmatpush.msra.mxu0 %v2152
    %2414 = vmatpush.msra.mxu0 %v2148
    %2415 = vmatpush.msra.mxu0 %v2144
    %2416 = vmatmul.f32.gmra.mxu0 %v2109
    %v2417 = vpop.f32.mrf.mxu0
    %v2418 = vadd.f32 0.0, %v2417
    %2419 = vmatmul.f32.gmra.mxu0 %v2112
    %v2420 = vpop.f32.mrf.mxu0
    %v2421 = vadd.f32 0.0, %v2420
    %2422 = vmatmul.f32.gmra.mxu0 %v2115
    %v2423 = vpop.f32.mrf.mxu0
    %v2424 = vadd.f32 0.0, %v2423
    %2425 = vdwg.mxu0
    %2426 = vmatpush.msra.mxu0 %v2268
    %2427 = vmatpush.msra.mxu0 %v2264
    %2428 = vmatpush.msra.mxu0 %v2260
    %2429 = vmatpush.msra.mxu0 %v2256
    %2430 = vmatpush.msra.mxu0 %v2252
    %2431 = vmatpush.msra.mxu0 %v2248
    %2432 = vmatpush.msra.mxu0 %v2244
    %2433 = vmatpush.msra.mxu0 %v2240
    %2434 = vmatpush.msra.mxu0 %v2236
    %2435 = vmatpush.msra.mxu0 %v2232
    %2436 = vmatpush.msra.mxu0 %v2228
    %2437 = vmatpush.msra.mxu0 %v2224
    %2438 = vmatpush.msra.mxu0 %v2220
    %2439 = vmatpush.msra.mxu0 %v2216
    %2440 = vmatpush.msra.mxu0 %v2212
    %2441 = vmatpush.msra.mxu0 %v2208
    %2442 = vmatmul.f32.gmra.mxu0 %v2118
    %v2443 = vpop.f32.mrf.mxu0
    %v2444 = vadd.f32 %v2418, %v2443
    %2445 = vmatmul.f32.gmra.mxu0 %v2121
    %v2446 = vpop.f32.mrf.mxu0
    %v2447 = vadd.f32 %v2421, %v2446
    %2448 = vmatmul.f32.gmra.mxu0 %v2124
    %v2449 = vpop.f32.mrf.mxu0
    %v2450 = vadd.f32 %v2424, %v2449
    %2451 = vdwg.mxu0
    %2452 = vmatpush.msra.mxu0 %v2332
    %2453 = vmatpush.msra.mxu0 %v2328
    %2454 = vmatpush.msra.mxu0 %v2324
    %2455 = vmatpush.msra.mxu0 %v2320
    %2456 = vmatpush.msra.mxu0 %v2316
    %2457 = vmatpush.msra.mxu0 %v2312
    %2458 = vmatpush.msra.mxu0 %v2308
    %2459 = vmatpush.msra.mxu0 %v2304
    %2460 = vmatpush.msra.mxu0 %v2300
    %2461 = vmatpush.msra.mxu0 %v2296
    %2462 = vmatpush.msra.mxu0 %v2292
    %2463 = vmatpush.msra.mxu0 %v2288
    %2464 = vmatpush.msra.mxu0 %v2284
    %2465 = vmatpush.msra.mxu0 %v2280
    %2466 = vmatpush.msra.mxu0 %v2276
    %2467 = vmatpush.msra.mxu0 %v2272
    %2468 = vmatmul.f32.gmra.mxu0 %v2127
    %v2469 = vpop.f32.mrf.mxu0
    %v2470 = vadd.f32 %v2444, %v2469
    %2471 = vmatmul.f32.gmra.mxu0 %v2130
    %v2472 = vpop.f32.mrf.mxu0
    %v2473 = vadd.f32 %v2447, %v2472
    %2474 = vmatmul.f32.gmra.mxu0 %v2133
    %v2475 = vpop.f32.mrf.mxu0
    %v2476 = vadd.f32 %v2450, %v2475
    %2477 = vdwg.mxu0
    %2478 = vmatpush.msra.mxu0 %v2396
    %2479 = vmatpush.msra.mxu0 %v2392
    %2480 = vmatpush.msra.mxu0 %v2388
    %2481 = vmatpush.msra.mxu0 %v2384
    %2482 = vmatpush.msra.mxu0 %v2380
    %2483 = vmatpush.msra.mxu0 %v2376
    %2484 = vmatpush.msra.mxu0 %v2372
    %2485 = vmatpush.msra.mxu0 %v2368
    %2486 = vmatpush.msra.mxu0 %v2364
    %2487 = vmatpush.msra.mxu0 %v2360
    %2488 = vmatpush.msra.mxu0 %v2356
    %2489 = vmatpush.msra.mxu0 %v2352
    %2490 = vmatpush.msra.mxu0 %v2348
    %2491 = vmatpush.msra.mxu0 %v2344
    %2492 = vmatpush.msra.mxu0 %v2340
    %2493 = vmatpush.msra.mxu0 %v2336
    %2494 = vmatmul.f32.gmra.mxu0 %v2136
    %v2495 = vpop.f32.mrf.mxu0
    %v2496 = vadd.f32 %v2470, %v2495
    %2497 = vmatmul.f32.gmra.mxu0 %v2139
    %v2498 = vpop.f32.mrf.mxu0
    %v2499 = vadd.f32 %v2473, %v2498
    %2500 = vmatmul.f32.gmra.mxu0 %v2142
    %v2501 = vpop.f32.mrf.mxu0
    %v2502 = vadd.f32 %v2476, %v2501
    %2503 = vdwg.mxu0
    %2504 = vmatpush.msra.mxu0 %v2205
    %2505 = vmatpush.msra.mxu0 %v2201
    %2506 = vmatpush.msra.mxu0 %v2197
    %2507 = vmatpush.msra.mxu0 %v2193
    %2508 = vmatpush.msra.mxu0 %v2189
    %2509 = vmatpush.msra.mxu0 %v2185
    %2510 = vmatpush.msra.mxu0 %v2181
    %2511 = vmatpush.msra.mxu0 %v2177
    %2512 = vmatpush.msra.mxu0 %v2173
    %2513 = vmatpush.msra.mxu0 %v2169
    %2514 = vmatpush.msra.mxu0 %v2165
    %2515 = vmatpush.msra.mxu0 %v2161
    %2516 = vmatpush.msra.mxu0 %v2157
    %2517 = vmatpush.msra.mxu0 %v2153
    %2518 = vmatpush.msra.mxu0 %v2149
    %2519 = vmatpush.msra.mxu0 %v2145
    %2520 = vmatmul.f32.gmra.mxu0 %v2109
    %v2521 = vpop.f32.mrf.mxu0
    %v2522 = vadd.f32 0.0, %v2521
    %2523 = vmatmul.f32.gmra.mxu0 %v2112
    %v2524 = vpop.f32.mrf.mxu0
    %v2525 = vadd.f32 0.0, %v2524
    %2526 = vmatmul.f32.gmra.mxu0 %v2115
    %v2527 = vpop.f32.mrf.mxu0
    %v2528 = vadd.f32 0.0, %v2527
    %2529 = vdwg.mxu0
    %2530 = vmatpush.msra.mxu0 %v2269
    %2531 = vmatpush.msra.mxu0 %v2265
    %2532 = vmatpush.msra.mxu0 %v2261
    %2533 = vmatpush.msra.mxu0 %v2257
    %2534 = vmatpush.msra.mxu0 %v2253
    %2535 = vmatpush.msra.mxu0 %v2249
    %2536 = vmatpush.msra.mxu0 %v2245
    %2537 = vmatpush.msra.mxu0 %v2241
    %2538 = vmatpush.msra.mxu0 %v2237
    %2539 = vmatpush.msra.mxu0 %v2233
    %2540 = vmatpush.msra.mxu0 %v2229
    %2541 = vmatpush.msra.mxu0 %v2225
    %2542 = vmatpush.msra.mxu0 %v2221
    %2543 = vmatpush.msra.mxu0 %v2217
    %2544 = vmatpush.msra.mxu0 %v2213
    %2545 = vmatpush.msra.mxu0 %v2209
    %2546 = vmatmul.f32.gmra.mxu0 %v2118
    %v2547 = vpop.f32.mrf.mxu0
    %v2548 = vadd.f32 %v2522, %v2547
    %2549 = vmatmul.f32.gmra.mxu0 %v2121
    %v2550 = vpop.f32.mrf.mxu0
    %v2551 = vadd.f32 %v2525, %v2550
    %2552 = vmatmul.f32.gmra.mxu0 %v2124
    %v2553 = vpop.f32.mrf.mxu0
    %v2554 = vadd.f32 %v2528, %v2553
    %2555 = vdwg.mxu0
    %2556 = vmatpush.msra.mxu0 %v2333
    %2557 = vmatpush.msra.mxu0 %v2329
    %2558 = vmatpush.msra.mxu0 %v2325
    %2559 = vmatpush.msra.mxu0 %v2321
    %2560 = vmatpush.msra.mxu0 %v2317
    %2561 = vmatpush.msra.mxu0 %v2313
    %2562 = vmatpush.msra.mxu0 %v2309
    %2563 = vmatpush.msra.mxu0 %v2305
    %2564 = vmatpush.msra.mxu0 %v2301
    %2565 = vmatpush.msra.mxu0 %v2297
    %2566 = vmatpush.msra.mxu0 %v2293
    %2567 = vmatpush.msra.mxu0 %v2289
    %2568 = vmatpush.msra.mxu0 %v2285
    %2569 = vmatpush.msra.mxu0 %v2281
    %2570 = vmatpush.msra.mxu0 %v2277
    %2571 = vmatpush.msra.mxu0 %v2273
    %2572 = vmatmul.f32.gmra.mxu0 %v2127
    %v2573 = vpop.f32.mrf.mxu0
    %v2574 = vadd.f32 %v2548, %v2573
    %2575 = vmatmul.f32.gmra.mxu0 %v2130
    %v2576 = vpop.f32.mrf.mxu0
    %v2577 = vadd.f32 %v2551, %v2576
    %2578 = vmatmul.f32.gmra.mxu0 %v2133
    %v2579 = vpop.f32.mrf.mxu0
    %v2580 = vadd.f32 %v2554, %v2579
    %2581 = vdwg.mxu0
    %2582 = vmatpush.msra.mxu0 %v2397
    %2583 = vmatpush.msra.mxu0 %v2393
    %2584 = vmatpush.msra.mxu0 %v2389
    %2585 = vmatpush.msra.mxu0 %v2385
    %2586 = vmatpush.msra.mxu0 %v2381
    %2587 = vmatpush.msra.mxu0 %v2377
    %2588 = vmatpush.msra.mxu0 %v2373
    %2589 = vmatpush.msra.mxu0 %v2369
    %2590 = vmatpush.msra.mxu0 %v2365
    %2591 = vmatpush.msra.mxu0 %v2361
    %2592 = vmatpush.msra.mxu0 %v2357
    %2593 = vmatpush.msra.mxu0 %v2353
    %2594 = vmatpush.msra.mxu0 %v2349
    %2595 = vmatpush.msra.mxu0 %v2345
    %2596 = vmatpush.msra.mxu0 %v2341
    %2597 = vmatpush.msra.mxu0 %v2337
    %2598 = vmatmul.f32.gmra.mxu0 %v2136
    %v2599 = vpop.f32.mrf.mxu0
    %v2600 = vadd.f32 %v2574, %v2599
    %2601 = vmatmul.f32.gmra.mxu0 %v2139
    %v2602 = vpop.f32.mrf.mxu0
    %v2603 = vadd.f32 %v2577, %v2602
    %2604 = vmatmul.f32.gmra.mxu0 %v2142
    %v2605 = vpop.f32.mrf.mxu0
    %v2606 = vadd.f32 %v2580, %v2605
    %2607 = vdwg.mxu0
    %2608 = vmatpush.msra.mxu0 %v2206
    %2609 = vmatpush.msra.mxu0 %v2202
    %2610 = vmatpush.msra.mxu0 %v2198
    %2611 = vmatpush.msra.mxu0 %v2194
    %2612 = vmatpush.msra.mxu0 %v2190
    %2613 = vmatpush.msra.mxu0 %v2186
    %2614 = vmatpush.msra.mxu0 %v2182
    %2615 = vmatpush.msra.mxu0 %v2178
    %2616 = vmatpush.msra.mxu0 %v2174
    %2617 = vmatpush.msra.mxu0 %v2170
    %2618 = vmatpush.msra.mxu0 %v2166
    %2619 = vmatpush.msra.mxu0 %v2162
    %2620 = vmatpush.msra.mxu0 %v2158
    %2621 = vmatpush.msra.mxu0 %v2154
    %2622 = vmatpush.msra.mxu0 %v2150
    %2623 = vmatpush.msra.mxu0 %v2146
    %2624 = vmatmul.f32.gmra.mxu0 %v2109
    %v2625 = vpop.f32.mrf.mxu0
    %v2626 = vadd.f32 0.0, %v2625
    %2627 = vmatmul.f32.gmra.mxu0 %v2112
    %v2628 = vpop.f32.mrf.mxu0
    %v2629 = vadd.f32 0.0, %v2628
    %2630 = vmatmul.f32.gmra.mxu0 %v2115
    %v2631 = vpop.f32.mrf.mxu0
    %v2632 = vadd.f32 0.0, %v2631
    %2633 = vdwg.mxu0
    %2634 = vmatpush.msra.mxu0 %v2270
    %2635 = vmatpush.msra.mxu0 %v2266
    %2636 = vmatpush.msra.mxu0 %v2262
    %2637 = vmatpush.msra.mxu0 %v2258
    %2638 = vmatpush.msra.mxu0 %v2254
    %2639 = vmatpush.msra.mxu0 %v2250
    %2640 = vmatpush.msra.mxu0 %v2246
    %2641 = vmatpush.msra.mxu0 %v2242
    %2642 = vmatpush.msra.mxu0 %v2238
    %2643 = vmatpush.msra.mxu0 %v2234
    %2644 = vmatpush.msra.mxu0 %v2230
    %2645 = vmatpush.msra.mxu0 %v2226
    %2646 = vmatpush.msra.mxu0 %v2222
    %2647 = vmatpush.msra.mxu0 %v2218
    %2648 = vmatpush.msra.mxu0 %v2214
    %2649 = vmatpush.msra.mxu0 %v2210
    %2650 = vmatmul.f32.gmra.mxu0 %v2118
    %v2651 = vpop.f32.mrf.mxu0
    %v2652 = vadd.f32 %v2626, %v2651
    %2653 = vmatmul.f32.gmra.mxu0 %v2121
    %v2654 = vpop.f32.mrf.mxu0
    %v2655 = vadd.f32 %v2629, %v2654
    %2656 = vmatmul.f32.gmra.mxu0 %v2124
    %v2657 = vpop.f32.mrf.mxu0
    %v2658 = vadd.f32 %v2632, %v2657
    %2659 = vdwg.mxu0
    %2660 = vmatpush.msra.mxu0 %v2334
    %2661 = vmatpush.msra.mxu0 %v2330
    %2662 = vmatpush.msra.mxu0 %v2326
    %2663 = vmatpush.msra.mxu0 %v2322
    %2664 = vmatpush.msra.mxu0 %v2318
    %2665 = vmatpush.msra.mxu0 %v2314
    %2666 = vmatpush.msra.mxu0 %v2310
    %2667 = vmatpush.msra.mxu0 %v2306
    %2668 = vmatpush.msra.mxu0 %v2302
    %2669 = vmatpush.msra.mxu0 %v2298
    %2670 = vmatpush.msra.mxu0 %v2294
    %2671 = vmatpush.msra.mxu0 %v2290
    %2672 = vmatpush.msra.mxu0 %v2286
    %2673 = vmatpush.msra.mxu0 %v2282
    %2674 = vmatpush.msra.mxu0 %v2278
    %2675 = vmatpush.msra.mxu0 %v2274
    %2676 = vmatmul.f32.gmra.mxu0 %v2127
    %v2677 = vpop.f32.mrf.mxu0
    %v2678 = vadd.f32 %v2652, %v2677
    %2679 = vmatmul.f32.gmra.mxu0 %v2130
    %v2680 = vpop.f32.mrf.mxu0
    %v2681 = vadd.f32 %v2655, %v2680
    %2682 = vmatmul.f32.gmra.mxu0 %v2133
    %v2683 = vpop.f32.mrf.mxu0
    %v2684 = vadd.f32 %v2658, %v2683
    %2685 = vdwg.mxu0
    %2686 = vmatpush.msra.mxu0 %v2398
    %2687 = vmatpush.msra.mxu0 %v2394
    %2688 = vmatpush.msra.mxu0 %v2390
    %2689 = vmatpush.msra.mxu0 %v2386
    %2690 = vmatpush.msra.mxu0 %v2382
    %2691 = vmatpush.msra.mxu0 %v2378
    %2692 = vmatpush.msra.mxu0 %v2374
    %2693 = vmatpush.msra.mxu0 %v2370
    %2694 = vmatpush.msra.mxu0 %v2366
    %2695 = vmatpush.msra.mxu0 %v2362
    %2696 = vmatpush.msra.mxu0 %v2358
    %2697 = vmatpush.msra.mxu0 %v2354
    %2698 = vmatpush.msra.mxu0 %v2350
    %2699 = vmatpush.msra.mxu0 %v2346
    %2700 = vmatpush.msra.mxu0 %v2342
    %2701 = vmatpush.msra.mxu0 %v2338
    %2702 = vmatmul.f32.gmra.mxu0 %v2136
    %v2703 = vpop.f32.mrf.mxu0
    %v2704 = vadd.f32 %v2678, %v2703
    %2705 = vmatmul.f32.gmra.mxu0 %v2139
    %v2706 = vpop.f32.mrf.mxu0
    %v2707 = vadd.f32 %v2681, %v2706
    %2708 = vmatmul.f32.gmra.mxu0 %v2142
    %v2709 = vpop.f32.mrf.mxu0
    %v2710 = vadd.f32 %v2684, %v2709
    %2711 = vdwg.mxu0
    %2712 = vmatpush.msra.mxu0 %v2207
    %2713 = vmatpush.msra.mxu0 %v2203
    %2714 = vmatpush.msra.mxu0 %v2199
    %2715 = vmatpush.msra.mxu0 %v2195
    %2716 = vmatpush.msra.mxu0 %v2191
    %2717 = vmatpush.msra.mxu0 %v2187
    %2718 = vmatpush.msra.mxu0 %v2183
    %2719 = vmatpush.msra.mxu0 %v2179
    %2720 = vmatpush.msra.mxu0 %v2175
    %2721 = vmatpush.msra.mxu0 %v2171
    %2722 = vmatpush.msra.mxu0 %v2167
    %2723 = vmatpush.msra.mxu0 %v2163
    %2724 = vmatpush.msra.mxu0 %v2159
    %2725 = vmatpush.msra.mxu0 %v2155
    %2726 = vmatpush.msra.mxu0 %v2151
    %2727 = vmatpush.msra.mxu0 %v2147
    %2728 = vmatmul.f32.gmra.mxu0 %v2109
    %v2729 = vpop.f32.mrf.mxu0
    %v2730 = vadd.f32 0.0, %v2729
    %2731 = vmatmul.f32.gmra.mxu0 %v2112
    %v2732 = vpop.f32.mrf.mxu0
    %v2733 = vadd.f32 0.0, %v2732
    %2734 = vmatmul.f32.gmra.mxu0 %v2115
    %v2735 = vpop.f32.mrf.mxu0
    %v2736 = vadd.f32 0.0, %v2735
    %2737 = vdwg.mxu0
    %2738 = vmatpush.msra.mxu0 %v2271
    %2739 = vmatpush.msra.mxu0 %v2267
    %2740 = vmatpush.msra.mxu0 %v2263
    %2741 = vmatpush.msra.mxu0 %v2259
    %2742 = vmatpush.msra.mxu0 %v2255
    %2743 = vmatpush.msra.mxu0 %v2251
    %2744 = vmatpush.msra.mxu0 %v2247
    %2745 = vmatpush.msra.mxu0 %v2243
    %2746 = vmatpush.msra.mxu0 %v2239
    %2747 = vmatpush.msra.mxu0 %v2235
    %2748 = vmatpush.msra.mxu0 %v2231
    %2749 = vmatpush.msra.mxu0 %v2227
    %2750 = vmatpush.msra.mxu0 %v2223
    %2751 = vmatpush.msra.mxu0 %v2219
    %2752 = vmatpush.msra.mxu0 %v2215
    %2753 = vmatpush.msra.mxu0 %v2211
    %2754 = vmatmul.f32.gmra.mxu0 %v2118
    %v2755 = vpop.f32.mrf.mxu0
    %v2756 = vadd.f32 %v2730, %v2755
    %2757 = vmatmul.f32.gmra.mxu0 %v2121
    %v2758 = vpop.f32.mrf.mxu0
    %v2759 = vadd.f32 %v2733, %v2758
    %2760 = vmatmul.f32.gmra.mxu0 %v2124
    %v2761 = vpop.f32.mrf.mxu0
    %v2762 = vadd.f32 %v2736, %v2761
    %2763 = vdwg.mxu0
    %2764 = vmatpush.msra.mxu0 %v2335
    %2765 = vmatpush.msra.mxu0 %v2331
    %2766 = vmatpush.msra.mxu0 %v2327
    %2767 = vmatpush.msra.mxu0 %v2323
    %2768 = vmatpush.msra.mxu0 %v2319
    %2769 = vmatpush.msra.mxu0 %v2315
    %2770 = vmatpush.msra.mxu0 %v2311
    %2771 = vmatpush.msra.mxu0 %v2307
    %2772 = vmatpush.msra.mxu0 %v2303
    %2773 = vmatpush.msra.mxu0 %v2299
    %2774 = vmatpush.msra.mxu0 %v2295
    %2775 = vmatpush.msra.mxu0 %v2291
    %2776 = vmatpush.msra.mxu0 %v2287
    %2777 = vmatpush.msra.mxu0 %v2283
    %2778 = vmatpush.msra.mxu0 %v2279
    %2779 = vmatpush.msra.mxu0 %v2275
    %2780 = vmatmul.f32.gmra.mxu0 %v2127
    %v2781 = vpop.f32.mrf.mxu0
    %v2782 = vadd.f32 %v2756, %v2781
    %2783 = vmatmul.f32.gmra.mxu0 %v2130
    %v2784 = vpop.f32.mrf.mxu0
    %v2785 = vadd.f32 %v2759, %v2784
    %2786 = vmatmul.f32.gmra.mxu0 %v2133
    %v2787 = vpop.f32.mrf.mxu0
    %v2788 = vadd.f32 %v2762, %v2787
    %2789 = vdwg.mxu0
    %2790 = vmatpush.msra.mxu0 %v2399
    %2791 = vmatpush.msra.mxu0 %v2395
    %2792 = vmatpush.msra.mxu0 %v2391
    %2793 = vmatpush.msra.mxu0 %v2387
    %2794 = vmatpush.msra.mxu0 %v2383
    %2795 = vmatpush.msra.mxu0 %v2379
    %2796 = vmatpush.msra.mxu0 %v2375
    %2797 = vmatpush.msra.mxu0 %v2371
    %2798 = vmatpush.msra.mxu0 %v2367
    %2799 = vmatpush.msra.mxu0 %v2363
    %2800 = vmatpush.msra.mxu0 %v2359
    %2801 = vmatpush.msra.mxu0 %v2355
    %2802 = vmatpush.msra.mxu0 %v2351
    %2803 = vmatpush.msra.mxu0 %v2347
    %2804 = vmatpush.msra.mxu0 %v2343
    %2805 = vmatpush.msra.mxu0 %v2339
    %2806 = vmatmul.f32.gmra.mxu0 %v2136
    %v2807 = vpop.f32.mrf.mxu0
    %v2808 = vadd.f32 %v2782, %v2807
    %2809 = vmatmul.f32.gmra.mxu0 %v2139
    %v2810 = vpop.f32.mrf.mxu0
    %v2811 = vadd.f32 %v2785, %v2810
    %2812 = vmatmul.f32.gmra.mxu0 %v2142
    %v2813 = vpop.f32.mrf.mxu0
    %v2814 = vadd.f32 %v2788, %v2813
    %2815 = vdwg.mxu0
    %s2816 = sld [smem:[#allocation3]]
    %s2817 = smul.f32 %s2816, 0.5
    %v2818 = vsub.f32 0.0, %v2496
    %v2819 = vsub.f32 0.0, %v2600
    %v2820 = vsub.f32 0.0, %v2704
    %v2821 = vsub.f32 0.0, %v2808
    %v2822 = vsub.f32 0.0, %v2499
    %v2823 = vsub.f32 0.0, %v2603
    %v2824 = vsub.f32 0.0, %v2707
    %v2825 = vsub.f32 0.0, %v2811
    %v2826 = vsub.f32 0.0, %v2502
    %v2827 = vsub.f32 0.0, %v2606
    %v2828 = vsub.f32 0.0, %v2710
    %v2829 = vsub.f32 0.0, %v2814
    %v2830 = vmul.f32 %v2818, 1.442695
    %v2831 = vpow.pop %v2830
    %v2832 = vmul.f32 %v2819, 1.442695
    %v2833 = vpow.pop %v2832
    %v2834 = vmul.f32 %v2820, 1.442695
    %v2835 = vpow.pop %v2834
    %v2836 = vmul.f32 %v2821, 1.442695
    %v2837 = vpow.pop %v2836
    %v2838 = vmul.f32 %v2822, 1.442695
    %v2839 = vpow.pop %v2838
    %v2840 = vmul.f32 %v2823, 1.442695
    %v2841 = vpow.pop %v2840
    %v2842 = vmul.f32 %v2824, 1.442695
    %v2843 = vpow.pop %v2842
    %v2844 = vmul.f32 %v2825, 1.442695
    %v2845 = vpow.pop %v2844
    %v2846 = vmul.f32 %v2826, 1.442695
    %v2847 = vpow.pop %v2846
    %v2848 = vmul.f32 %v2827, 1.442695
    %v2849 = vpow.pop %v2848
    %v2850 = vmul.f32 %v2828, 1.442695
    %v2851 = vpow.pop %v2850
    %v2852 = vmul.f32 %v2829, 1.442695
    %v2853 = vpow.pop %v2852
    %v2854 = vadd.f32 %v2831, 1.0
    %v2855 = vadd.f32 %v2833, 1.0
    %v2856 = vadd.f32 %v2835, 1.0
    %v2857 = vadd.f32 %v2837, 1.0
    %v2858 = vadd.f32 %v2839, 1.0
    %v2859 = vadd.f32 %v2841, 1.0
    %v2860 = vadd.f32 %v2843, 1.0
    %v2861 = vadd.f32 %v2845, 1.0
    %v2862 = vadd.f32 %v2847, 1.0
    %v2863 = vadd.f32 %v2849, 1.0
    %v2864 = vadd.f32 %v2851, 1.0
    %v2865 = vadd.f32 %v2853, 1.0
    %v2866 = vstv %s2817
    %v2867 = vmul.f32 %v2866, %v2854
    %v2868 = vmul.f32 %v2866, %v2855
    %v2869 = vmul.f32 %v2866, %v2856
    %v2870 = vmul.f32 %v2866, %v2857
    %v2871 = vmul.f32 %v2866, %v2858
    %v2872 = vmul.f32 %v2866, %v2859
    %v2873 = vmul.f32 %v2866, %v2860
    %v2874 = vmul.f32 %v2866, %v2861
    %v2875 = vmul.f32 %v2866, %v2862
    %v2876 = vmul.f32 %v2866, %v2863
    %v2877 = vmul.f32 %v2866, %v2864
    %v2878 = vmul.f32 %v2866, %v2865
    %v2879 = vmul.f32 %v2867, %v67
    %v2880 = vmul.f32 %v2868, %v68
    %v2881 = vmul.f32 %v2869, %v69
    %v2882 = vmul.f32 %v2870, %v70
    %v2883 = vmul.f32 %v2871, %v71
    %v2884 = vmul.f32 %v2872, %v72
    %v2885 = vmul.f32 %v2873, %v73
    %v2886 = vmul.f32 %v2874, %v74
    %v2887 = vmul.f32 %v2875, %v75
    %v2888 = vmul.f32 %v2876, %v76
    %v2889 = vmul.f32 %v2877, %v77
    %v2890 = vmul.f32 %v2878, %v78
    %2891 = vst [vmem:[%s11] sm:$0xff] %v2879
    %2892 = vst [vmem:[%s11 + $0x8] sm:$0xff] %v2880
    %2893 = vst [vmem:[%s11 + $0x10] sm:$0xff] %v2881
    %2894 = vst [vmem:[%s11 + $0x18] sm:$0xff] %v2882
    %2895 = vst [vmem:[%s11 + $0x20] sm:$0xff] %v2883
    %2896 = vst [vmem:[%s11 + $0x28] sm:$0xff] %v2884
    %2897 = vst [vmem:[%s11 + $0x30] sm:$0xff] %v2885
    %2898 = vst [vmem:[%s11 + $0x38] sm:$0xff] %v2886
    %2899 = vst [vmem:[%s11 + $0x40] sm:$0xff] %v2887
    %2900 = vst [vmem:[%s11 + $0x48] sm:$0xff] %v2888
    %2901 = vst [vmem:[%s11 + $0x50] sm:$0xff] %v2889
    %2902 = vst [vmem:[%s11 + $0x58] sm:$0xff] %v2890
    // Predicated region
    $region46: #{dpcn_forward.1} parent=1 // pred_check
      _
    $region47: #{dpcn_forward.1} parent=1 // pred_check_branch
      %2904 = sbr.rel (0) target = $region49
    $region48: #{dpcn_forward.1} parent=1 // pred_region
      _
    $region49: #{dpcn_forward.1} parent=1 // pred_fallthru
      _
    // Predicated region
    $region50: #{dpcn_forward.1} parent=1 // pred_check
      _
    $region51: #{dpcn_forward.1} parent=1 // pred_check_branch
      %2906 = sbr.rel (0) target = $region53
    $region52: #{dpcn_forward.1} parent=1 // pred_region
      _
    $region53: #{dpcn_forward.1} parent=1 // pred_fallthru
      _
    // Predicated region
    $region54: #{dpcn_forward.1} parent=1 // pred_check
      _
    $region55: #{dpcn_forward.1} parent=1 // pred_check_branch
      %2908 = sbr.rel (0) target = $region57
    $region56: #{dpcn_forward.1} parent=1 // pred_region
      _
    $region57: #{dpcn_forward.1} parent=1 // pred_fallthru
      _
    // Predicated region
    $region58: #{dpcn_forward.1} parent=1 // pred_check
      _
    $region59: #{dpcn_forward.1} parent=1 // pred_check_branch
      %2910 = sbr.rel (0) target = $region61
    $region60: #{dpcn_forward.1} parent=1 // pred_region
      _
    $region61: #{dpcn_forward.1} parent=1 // pred_fallthru
      _
    // Predicated region
    $region62: #{dpcn_forward.1} parent=1 // pred_check
      _
    $region63: #{dpcn_forward.1} parent=1 // pred_check_branch
      %2912 = sbr.rel (0) target = $region65
    $region64: #{dpcn_forward.1} parent=1 // pred_region
      _
    $region65: #{dpcn_forward.1} parent=1 // pred_fallthru
      _
    // Predicated region
    $region66: #{dpcn_forward.1} parent=1 // pred_check
      _
    $region67: #{dpcn_forward.1} parent=1 // pred_check_branch
      %2914 = sbr.rel (0) target = $region69
    $region68: #{dpcn_forward.1} parent=1 // pred_region
      _
    $region69: #{dpcn_forward.1} parent=1 // pred_fallthru
      _
    %2915 = vsyncpa [#allocation5], 1

</llo_original>
